<compile_context>
chip_gen: v5e
topology: v5e:2x2
jax: 0.10.0
libtpu: 0.0.40
codegen_flags: <defaults>
</compile_context>

<pallas_src>
import functools

import jax
import jax.numpy as jnp
from jax import lax
from jax.experimental import pallas as pl
from jax.experimental.pallas import tpu as pltpu

EPS = 1e-5


def _layer_norm(x, gamma, beta):
    """LayerNorm over the last axis, matching torch.nn.LayerNorm defaults."""
    x32 = x.astype(jnp.float32)
    mean = jnp.mean(x32, axis=-1, keepdims=True)
    var = jnp.mean(jnp.square(x32 - mean), axis=-1, keepdims=True)
    xhat = (x32 - mean) * lax.rsqrt(var + EPS)
    return xhat * gamma + beta


def core_kernel(priv_ref, pub_ref, scal_ref,          # (bb, Din) each, any float dtype
                m_gamma_ref, m_beta_ref,              # (3, Din)      f32
                m_w_ref,                              # (3*Din, H)    bf16 (row-concat of per-stream W)
                m_b_ref,                              # (1, H)        f32  (sum of per-stream biases)
                r_gamma_ref, r_beta_ref,              # (2L, H)       f32
                r_w_ref,                              # (2L, H, H)    bf16
                r_b_ref,                              # (2L, H)       f32
                out_ref,                              # (bb, H)       f32
                state_ref,                            # (bb, H)       f32 VMEM scratch
                *, num_layers):
    # ---- VectorMerge (no gating), fused into a single MXU matmul ----
    parts = []
    for s, x_ref in enumerate((priv_ref, pub_ref, scal_ref)):
        g = m_gamma_ref[s:s + 1, :]
        b = m_beta_ref[s:s + 1, :]
        h = _layer_norm(x_ref[...], g, b)
        parts.append(jnp.maximum(h, 0.0).astype(jnp.bfloat16))
    h_cat = jnp.concatenate(parts, axis=-1)           # (bb, 3*Din) bf16, free lane placement

    state_ref[...] = (jnp.dot(h_cat, m_w_ref[...],
                              preferred_element_type=jnp.float32)
                      + m_b_ref[...])

    # ---- VectorResblock stack: 2x (LN + relu + Linear) + residual add ----
    def resblock_body(idx0_h):
        idx0, h = idx0_h
        for k in range(2):
            idx = idx0 + k
            g = r_gamma_ref[pl.ds(idx, 1), :]
            b = r_beta_ref[pl.ds(idx, 1), :]
            h = _layer_norm(h, g, b)
            h = jnp.maximum(h, 0.0).astype(jnp.bfloat16)
            h = jnp.dot(h, r_w_ref[idx], preferred_element_type=jnp.float32)
            h = h + r_b_ref[pl.ds(idx, 1), :]
        return h

    if num_layers <= 4:
        # Shallow stacks: static unroll (LLO scheduler sees everything).
        for l in range(num_layers):
            h = resblock_body((2 * l, state_ref[...]))
            state_ref[...] = state_ref[...] + h
    else:
        # Deep stacks: fori_loop over the leading weight axis to bound live
        # ranges / code size; state stays in the VMEM scratch.
        def loop_body(l, carry):
            h = resblock_body((2 * l, state_ref[...]))
            state_ref[...] = state_ref[...] + h
            return carry
        lax.fori_loop(0, num_layers, loop_body, 0)

    out_ref[...] = state_ref[...].astype(out_ref.dtype)


def prepare_params(params):
    """One-time parameter preparation (fuse merge weights, cast MXU weights to
    bf16).  Do this once per parameter set, NOT per forward call."""
    _, din, hidden = params["m_w"].shape
    return {
        "m_gamma": params["m_gamma"].astype(jnp.float32),
        "m_beta": params["m_beta"].astype(jnp.float32),
        # Row-concat of per-stream weights; ordering matches the in-kernel
        # lane concat order (stream 0, 1, 2).
        "m_w_cat": params["m_w"].reshape(3 * din, hidden).astype(jnp.bfloat16),
        "m_b_sum": jnp.sum(params["m_b"], axis=0, keepdims=True).astype(jnp.float32),
        "r_gamma": params["r_gamma"].astype(jnp.float32),
        "r_beta": params["r_beta"].astype(jnp.float32),
        "r_w": params["r_w"].astype(jnp.bfloat16),
        "r_b": params["r_b"].astype(jnp.float32),
    }


def _round_up(x, m):
    return ((x + m - 1) // m) * m


def _choose_block_b(batch):
    """Batch tile: ~2 even tiles for small/medium batches (keeps both v7x TCs
    busy via the 'parallel' grid axis), large (<=1024) tiles for big batches
    so single-TC v5e/v6e amortize the ~0.35us per-grid-step overhead."""
    b8 = _round_up(batch, 8)
    if b8 <= 256:
        half = b8 // 2
        if half >= 8 and half % 8 == 0:
            return half                 # 2 even steps
        return b8                       # single full-batch step
    half = b8 // 2
    return min(1024, max(128, (half // 128) * 128))


def _vmem_budget_bytes(block_b, din, hidden, num_layers, in_bytes):
    """Tight scoped-VMEM budget: resident weights + double-buffered I/O tiles
    + scratch, with headroom.  Leaves the rest of VMEM to surrounding XLA."""
    weight_bytes = (3 * din * hidden * 2 + hidden * 4            # m_w bf16 + m_b f32
                    + 2 * 3 * din * 4                            # merge gamma/beta
                    + 2 * num_layers * hidden * hidden * 2       # r_w bf16
                    + 3 * 2 * num_layers * hidden * 4)           # r gamma/beta/b
    act_bytes = 3 * block_b * din * in_bytes + block_b * hidden * 4
    scratch_bytes = block_b * hidden * 4
    raw = 2 * weight_bytes + 2 * act_bytes + scratch_bytes       # x2 double-buffering
    return max(16 * 1024 * 1024, int(raw * 1.5))


def core_forward(priv, pub, scal, prepped, *, num_layers, block_b=None):
    B, Din = priv.shape
    H = prepped["m_w_cat"].shape[-1]

    if block_b is None:
        block_b = _choose_block_b(B)
    n_blocks = pl.cdiv(B, block_b)
    B_pad = n_blocks * block_b

    # Only pad when the batch is not tile-aligned (padded rows are LN-safe and
    # are sliced off the output below).
    if B_pad != B:
        pad = ((0, B_pad - B), (0, 0))
        priv = jnp.pad(priv, pad)
        pub = jnp.pad(pub, pad)
        scal = jnp.pad(scal, pad)

    def stream_spec():
        return pl.BlockSpec((block_b, Din), lambda i: (i, 0))

    def full_spec(arr):
        return pl.BlockSpec(arr.shape, lambda i, _n=arr.ndim: (0,) * _n)

    kernel = functools.partial(core_kernel, num_layers=num_layers)

    out = pl.pallas_call(
        kernel,
        out_shape=jax.ShapeDtypeStruct((B_pad, H), jnp.float32),
        grid=(n_blocks,),
        in_specs=[
            stream_spec(), stream_spec(), stream_spec(),
            full_spec(prepped["m_gamma"]), full_spec(prepped["m_beta"]),
            full_spec(prepped["m_w_cat"]), full_spec(prepped["m_b_sum"]),
            full_spec(prepped["r_gamma"]), full_spec(prepped["r_beta"]),
            full_spec(prepped["r_w"]), full_spec(prepped["r_b"]),
        ],
        out_specs=pl.BlockSpec((block_b, H), lambda i: (i, 0)),
        scratch_shapes=[pltpu.VMEM((block_b, H), jnp.float32)],
        compiler_params=pltpu.CompilerParams(
            dimension_semantics=("parallel",),
            vmem_limit_bytes=_vmem_budget_bytes(
                block_b, Din, H, num_layers, priv.dtype.itemsize)),
    )(priv, pub, scal,
      prepped["m_gamma"], prepped["m_beta"], prepped["m_w_cat"], prepped["m_b_sum"],
      prepped["r_gamma"], prepped["r_beta"], prepped["r_w"], prepped["r_b"])

    return out[:B]


def core_reference(priv, pub, scal, params, *, num_layers,
                   mxu_dtype=jnp.bfloat16):
    """Pure-JAX reference.  mxu_dtype=bf16 mirrors the kernel numerics;
    mxu_dtype=f32 gives the full-precision 'PyTorch fp32' truth."""
    streams = (priv, pub, scal)
    state = None
    for s, x in enumerate(streams):
        h = _layer_norm(x, params["m_gamma"][s], params["m_beta"][s])
        h = jnp.maximum(h, 0.0).astype(mxu_dtype)
        w = params["m_w"][s].astype(mxu_dtype)
        y = jnp.dot(h, w, preferred_element_type=jnp.float32) + params["m_b"][s]
        state = y if state is None else state + y
    for l in range(num_layers):
        shortcut = state
        h = state
        for k in range(2):
            idx = l * 2 + k
            h = _layer_norm(h, params["r_gamma"][idx], params["r_beta"][idx])
            h = jnp.maximum(h, 0.0).astype(mxu_dtype)
            w = params["r_w"][idx].astype(mxu_dtype)
            h = jnp.dot(h, w, preferred_element_type=jnp.float32) + params["r_b"][idx]
        state = shortcut + h
    return state


def init_params(key, side_encoder_dim, hidden_dim, num_layers):
    k_mw, k_rw = jax.random.split(key, 2)
    return {
        # VectorMerge: per-stream LayerNorm (gamma=1, beta=0) + Linear
        "m_gamma": jnp.ones((3, side_encoder_dim), jnp.float32),
        "m_beta": jnp.zeros((3, side_encoder_dim), jnp.float32),
        "m_w": 0.02 * jax.random.normal(
            k_mw, (3, side_encoder_dim, hidden_dim), jnp.float32),
        "m_b": jnp.zeros((3, hidden_dim), jnp.float32),
        # Resblocks: 2 (LayerNorm + Linear) per block, stacked on leading axis
        "r_gamma": jnp.ones((2 * num_layers, hidden_dim), jnp.float32),
        "r_beta": jnp.zeros((2 * num_layers, hidden_dim), jnp.float32),
        "r_w": 0.02 * jax.random.normal(
            k_rw, (2 * num_layers, hidden_dim, hidden_dim), jnp.float32),
        "r_b": jnp.zeros((2 * num_layers, hidden_dim), jnp.float32),
    }


if __name__ == "__main__":
    # Lane-dense small config: feature dims are multiples of 128; batch of 256
    # auto-tiles into two 128-row "parallel" grid steps (feeds both v7x TCs).
    batch = 256
    side_encoder_dim = 128
    hidden_dim = 128
    num_layers = 2

    key = jax.random.PRNGKey(0)
    k_priv, k_pub, k_scal, k_params = jax.random.split(key, 4)

    private_embedding = jax.random.normal(k_priv, (batch, side_encoder_dim), jnp.float32)
    public_side = jax.random.normal(k_pub, (batch, side_encoder_dim), jnp.float32)
    scalar_embedding = jax.random.normal(k_scal, (batch, side_encoder_dim), jnp.float32)

    params = init_params(k_params, side_encoder_dim, hidden_dim, num_layers)

    # One-time weight prep (fuse + bf16 cast), then a jitted forward.
    prepped = jax.tree_util.tree_map(jax.block_until_ready, prepare_params(params))
    fwd = jax.jit(functools.partial(core_forward, num_layers=num_layers))

    out = fwd(private_embedding, public_side, scalar_embedding, prepped)
    out = jax.block_until_ready(out)
    assert out.shape == (batch, hidden_dim)

    # 1) Numerics-matched reference (bf16 at the MXU, f32 accumulation).
    ref_bf16 = core_reference(private_embedding, public_side, scalar_embedding,
                              params, num_layers=num_layers,
                              mxu_dtype=jnp.bfloat16)
    assert jnp.allclose(out, ref_bf16, atol=1e-3, rtol=1e-3), \
        "mismatch vs bf16-matched reference"

    # 2) Full-f32 truth (original module semantics), loose tol for bf16 MXU.
    ref_f32 = core_reference(private_embedding, public_side, scalar_embedding,
                             params, num_layers=num_layers,
                             mxu_dtype=jnp.float32)
    assert jnp.allclose(out, ref_f32, atol=5e-2, rtol=5e-2), \
        "mismatch vs f32 reference"

    print("KERNEL_OK")
</pallas_src>

<mosaic_0001>
module attributes {stable_mosaic.version = 11 : i64} {
  func.func @core_kernel(%arg0: i32, %arg1: memref<128x128xf32, #tpu.memory_space<vmem>>, %arg2: memref<128x128xf32, #tpu.memory_space<vmem>>, %arg3: memref<128x128xf32, #tpu.memory_space<vmem>>, %arg4: memref<3x128xf32, #tpu.memory_space<vmem>>, %arg5: memref<3x128xf32, #tpu.memory_space<vmem>>, %arg6: memref<384x128xbf16, #tpu.memory_space<vmem>>, %arg7: memref<1x128xf32, #tpu.memory_space<vmem>>, %arg8: memref<4x128xf32, #tpu.memory_space<vmem>>, %arg9: memref<4x128xf32, #tpu.memory_space<vmem>>, %arg10: memref<4x128x128xbf16, #tpu.memory_space<vmem>>, %arg11: memref<4x128xf32, #tpu.memory_space<vmem>>, %arg12: memref<128x128xf32, #tpu.memory_space<vmem>>, %arg13: memref<128x128xf32, #tpu.memory_space<vmem>>) attributes {dimension_semantics = [#tpu.dimension_semantics<parallel>], iteration_bounds = array<i64: 2>, scalar_prefetch = 0 : i64, scratch_operands = 1 : i64, tpu.core_type = #tpu.core_type<tc>, window_params = [{transform_indices = @transform_0, window_bounds = array<i64: 128, 128>}, {transform_indices = @transform_1, window_bounds = array<i64: 128, 128>}, {transform_indices = @transform_2, window_bounds = array<i64: 128, 128>}, {pipeline_mode = #tpu.pipeline_mode<synchronous>, transform_indices = @transform_3, window_bounds = array<i64: 3, 128>}, {pipeline_mode = #tpu.pipeline_mode<synchronous>, transform_indices = @transform_4, window_bounds = array<i64: 3, 128>}, {pipeline_mode = #tpu.pipeline_mode<synchronous>, transform_indices = @transform_5, window_bounds = array<i64: 384, 128>}, {pipeline_mode = #tpu.pipeline_mode<synchronous>, transform_indices = @transform_6, window_bounds = array<i64: 1, 128>}, {pipeline_mode = #tpu.pipeline_mode<synchronous>, transform_indices = @transform_7, window_bounds = array<i64: 4, 128>}, {pipeline_mode = #tpu.pipeline_mode<synchronous>, transform_indices = @transform_8, window_bounds = array<i64: 4, 128>}, {pipeline_mode = #tpu.pipeline_mode<synchronous>, transform_indices = @transform_9, window_bounds = array<i64: 4, 128, 128>}, {pipeline_mode = #tpu.pipeline_mode<synchronous>, transform_indices = @transform_10, window_bounds = array<i64: 4, 128>}, {transform_indices = @transform_11, window_bounds = array<i64: 128, 128>}]} {
    %c0 = arith.constant 0 : index
    %c0_0 = arith.constant 0 : index
    %0 = vector.load %arg4[%c0, %c0_0] : memref<3x128xf32, #tpu.memory_space<vmem>>, vector<1x128xf32>
    %c0_1 = arith.constant 0 : index
    %c0_2 = arith.constant 0 : index
    %1 = vector.load %arg5[%c0_1, %c0_2] : memref<3x128xf32, #tpu.memory_space<vmem>>, vector<1x128xf32>
    %c0_3 = arith.constant 0 : index
    %c0_4 = arith.constant 0 : index
    %2 = vector.load %arg1[%c0_3, %c0_4] : memref<128x128xf32, #tpu.memory_space<vmem>>, vector<128x128xf32>
    %cst = arith.constant dense<0.000000e+00> : vector<128xf32>
    %3 = vector.multi_reduction <add>, %2, %cst [1] : vector<128x128xf32> to vector<128xf32>
    %4 = vector.shape_cast %3 : vector<128xf32> to vector<128x1xf32>
    %cst_5 = arith.constant 1.280000e+02 : f32
    %5 = vector.broadcast %cst_5 : f32 to vector<128x1xf32>
    %6 = arith.divf %4, %5 : vector<128x1xf32>
    %7 = vector.broadcast %6 : vector<128x1xf32> to vector<128x128xf32>
    %8 = arith.subf %2, %7 : vector<128x128xf32>
    %9 = arith.mulf %8, %8 : vector<128x128xf32>
    %cst_6 = arith.constant dense<0.000000e+00> : vector<128xf32>
    %10 = vector.multi_reduction <add>, %9, %cst_6 [1] : vector<128x128xf32> to vector<128xf32>
    %11 = vector.shape_cast %10 : vector<128xf32> to vector<128x1xf32>
    %cst_7 = arith.constant 1.280000e+02 : f32
    %12 = vector.broadcast %cst_7 : f32 to vector<128x1xf32>
    %13 = arith.divf %11, %12 : vector<128x1xf32>
    %14 = vector.broadcast %6 : vector<128x1xf32> to vector<128x128xf32>
    %15 = arith.subf %2, %14 : vector<128x128xf32>
    %cst_8 = arith.constant 9.99999974E-6 : f32
    %16 = vector.broadcast %cst_8 : f32 to vector<128x1xf32>
    %17 = arith.addf %13, %16 : vector<128x1xf32>
    %18 = math.rsqrt %17 : vector<128x1xf32>
    %19 = vector.broadcast %18 : vector<128x1xf32> to vector<128x128xf32>
    %20 = arith.mulf %15, %19 : vector<128x128xf32>
    %21 = vector.broadcast %0 : vector<1x128xf32> to vector<128x128xf32>
    %22 = arith.mulf %20, %21 : vector<128x128xf32>
    %23 = vector.broadcast %1 : vector<1x128xf32> to vector<128x128xf32>
    %24 = arith.addf %22, %23 : vector<128x128xf32>
    %cst_9 = arith.constant 0.000000e+00 : f32
    %25 = vector.broadcast %cst_9 : f32 to vector<128x128xf32>
    %26 = arith.maximumf %24, %25 : vector<128x128xf32>
    %27 = arith.truncf %26 : vector<128x128xf32> to vector<128x128xbf16>
    %c1 = arith.constant 1 : index
    %c0_10 = arith.constant 0 : index
    %28 = vector.load %arg4[%c1, %c0_10] : memref<3x128xf32, #tpu.memory_space<vmem>>, vector<1x128xf32>
    %c1_11 = arith.constant 1 : index
    %c0_12 = arith.constant 0 : index
    %29 = vector.load %arg5[%c1_11, %c0_12] : memref<3x128xf32, #tpu.memory_space<vmem>>, vector<1x128xf32>
    %c0_13 = arith.constant 0 : index
    %c0_14 = arith.constant 0 : index
    %30 = vector.load %arg2[%c0_13, %c0_14] : memref<128x128xf32, #tpu.memory_space<vmem>>, vector<128x128xf32>
    %cst_15 = arith.constant dense<0.000000e+00> : vector<128xf32>
    %31 = vector.multi_reduction <add>, %30, %cst_15 [1] : vector<128x128xf32> to vector<128xf32>
    %32 = vector.shape_cast %31 : vector<128xf32> to vector<128x1xf32>
    %cst_16 = arith.constant 1.280000e+02 : f32
    %33 = vector.broadcast %cst_16 : f32 to vector<128x1xf32>
    %34 = arith.divf %32, %33 : vector<128x1xf32>
    %35 = vector.broadcast %34 : vector<128x1xf32> to vector<128x128xf32>
    %36 = arith.subf %30, %35 : vector<128x128xf32>
    %37 = arith.mulf %36, %36 : vector<128x128xf32>
    %cst_17 = arith.constant dense<0.000000e+00> : vector<128xf32>
    %38 = vector.multi_reduction <add>, %37, %cst_17 [1] : vector<128x128xf32> to vector<128xf32>
    %39 = vector.shape_cast %38 : vector<128xf32> to vector<128x1xf32>
    %cst_18 = arith.constant 1.280000e+02 : f32
    %40 = vector.broadcast %cst_18 : f32 to vector<128x1xf32>
    %41 = arith.divf %39, %40 : vector<128x1xf32>
    %42 = vector.broadcast %34 : vector<128x1xf32> to vector<128x128xf32>
    %43 = arith.subf %30, %42 : vector<128x128xf32>
    %cst_19 = arith.constant 9.99999974E-6 : f32
    %44 = vector.broadcast %cst_19 : f32 to vector<128x1xf32>
    %45 = arith.addf %41, %44 : vector<128x1xf32>
    %46 = math.rsqrt %45 : vector<128x1xf32>
    %47 = vector.broadcast %46 : vector<128x1xf32> to vector<128x128xf32>
    %48 = arith.mulf %43, %47 : vector<128x128xf32>
    %49 = vector.broadcast %28 : vector<1x128xf32> to vector<128x128xf32>
    %50 = arith.mulf %48, %49 : vector<128x128xf32>
    %51 = vector.broadcast %29 : vector<1x128xf32> to vector<128x128xf32>
    %52 = arith.addf %50, %51 : vector<128x128xf32>
    %cst_20 = arith.constant 0.000000e+00 : f32
    %53 = vector.broadcast %cst_20 : f32 to vector<128x128xf32>
    %54 = arith.maximumf %52, %53 : vector<128x128xf32>
    %55 = arith.truncf %54 : vector<128x128xf32> to vector<128x128xbf16>
    %c2 = arith.constant 2 : index
    %c0_21 = arith.constant 0 : index
    %56 = vector.load %arg4[%c2, %c0_21] : memref<3x128xf32, #tpu.memory_space<vmem>>, vector<1x128xf32>
    %c2_22 = arith.constant 2 : index
    %c0_23 = arith.constant 0 : index
    %57 = vector.load %arg5[%c2_22, %c0_23] : memref<3x128xf32, #tpu.memory_space<vmem>>, vector<1x128xf32>
    %c0_24 = arith.constant 0 : index
    %c0_25 = arith.constant 0 : index
    %58 = vector.load %arg3[%c0_24, %c0_25] : memref<128x128xf32, #tpu.memory_space<vmem>>, vector<128x128xf32>
    %cst_26 = arith.constant dense<0.000000e+00> : vector<128xf32>
    %59 = vector.multi_reduction <add>, %58, %cst_26 [1] : vector<128x128xf32> to vector<128xf32>
    %60 = vector.shape_cast %59 : vector<128xf32> to vector<128x1xf32>
    %cst_27 = arith.constant 1.280000e+02 : f32
    %61 = vector.broadcast %cst_27 : f32 to vector<128x1xf32>
    %62 = arith.divf %60, %61 : vector<128x1xf32>
    %63 = vector.broadcast %62 : vector<128x1xf32> to vector<128x128xf32>
    %64 = arith.subf %58, %63 : vector<128x128xf32>
    %65 = arith.mulf %64, %64 : vector<128x128xf32>
    %cst_28 = arith.constant dense<0.000000e+00> : vector<128xf32>
    %66 = vector.multi_reduction <add>, %65, %cst_28 [1] : vector<128x128xf32> to vector<128xf32>
    %67 = vector.shape_cast %66 : vector<128xf32> to vector<128x1xf32>
    %cst_29 = arith.constant 1.280000e+02 : f32
    %68 = vector.broadcast %cst_29 : f32 to vector<128x1xf32>
    %69 = arith.divf %67, %68 : vector<128x1xf32>
    %70 = vector.broadcast %62 : vector<128x1xf32> to vector<128x128xf32>
    %71 = arith.subf %58, %70 : vector<128x128xf32>
    %cst_30 = arith.constant 9.99999974E-6 : f32
    %72 = vector.broadcast %cst_30 : f32 to vector<128x1xf32>
    %73 = arith.addf %69, %72 : vector<128x1xf32>
    %74 = math.rsqrt %73 : vector<128x1xf32>
    %75 = vector.broadcast %74 : vector<128x1xf32> to vector<128x128xf32>
    %76 = arith.mulf %71, %75 : vector<128x128xf32>
    %77 = vector.broadcast %56 : vector<1x128xf32> to vector<128x128xf32>
    %78 = arith.mulf %76, %77 : vector<128x128xf32>
    %79 = vector.broadcast %57 : vector<1x128xf32> to vector<128x128xf32>
    %80 = arith.addf %78, %79 : vector<128x128xf32>
    %cst_31 = arith.constant 0.000000e+00 : f32
    %81 = vector.broadcast %cst_31 : f32 to vector<128x128xf32>
    %82 = arith.maximumf %80, %81 : vector<128x128xf32>
    %83 = arith.truncf %82 : vector<128x128xf32> to vector<128x128xbf16>
    %84 = tpu.concatenate %27, %55, %83 in 1 : vector<128x128xbf16>, vector<128x128xbf16>, vector<128x128xbf16> -> vector<128x384xbf16>
    %c0_32 = arith.constant 0 : index
    %c0_33 = arith.constant 0 : index
    %85 = vector.load %arg6[%c0_32, %c0_33] : memref<384x128xbf16, #tpu.memory_space<vmem>>, vector<384x128xbf16>
    %cst_34 = arith.constant dense<0.000000e+00> : vector<128x128xf32>
    %86 = tpu.matmul %84, %85, %cst_34 {dimension_numbers = #tpu.dot_dimension_numbers<[1], [0], [0], [1], [0, 0, 1, 1], [], []>} : vector<128x384xbf16>, vector<384x128xbf16>, vector<128x128xf32> -> vector<128x128xf32>
    %c0_35 = arith.constant 0 : index
    %c0_36 = arith.constant 0 : index
    %87 = vector.load %arg7[%c0_35, %c0_36] : memref<1x128xf32, #tpu.memory_space<vmem>>, vector<1x128xf32>
    %88 = vector.broadcast %87 : vector<1x128xf32> to vector<128x128xf32>
    %89 = arith.addf %86, %88 : vector<128x128xf32>
    %c0_37 = arith.constant 0 : index
    %c0_38 = arith.constant 0 : index
    %90 = vector.load %arg13[%c0_37, %c0_38] : memref<128x128xf32, #tpu.memory_space<vmem>>, vector<128x128xf32>
    tpu.vector_store %arg13[%c0_37, %c0_38], %89 {strides = array<i32>} : memref<128x128xf32, #tpu.memory_space<vmem>>, vector<128x128xf32>,
    %c0_39 = arith.constant 0 : index
    %c0_40 = arith.constant 0 : index
    %91 = vector.load %arg13[%c0_39, %c0_40] : memref<128x128xf32, #tpu.memory_space<vmem>>, vector<128x128xf32>
    %c0_41 = arith.constant 0 : index
    %c0_42 = arith.constant 0 : index
    %92 = vector.load %arg8[%c0_41, %c0_42] : memref<4x128xf32, #tpu.memory_space<vmem>>, vector<1x128xf32>
    %c0_43 = arith.constant 0 : index
    %c0_44 = arith.constant 0 : index
    %93 = vector.load %arg9[%c0_43, %c0_44] : memref<4x128xf32, #tpu.memory_space<vmem>>, vector<1x128xf32>
    %cst_45 = arith.constant dense<0.000000e+00> : vector<128xf32>
    %94 = vector.multi_reduction <add>, %91, %cst_45 [1] : vector<128x128xf32> to vector<128xf32>
    %95 = vector.shape_cast %94 : vector<128xf32> to vector<128x1xf32>
    %cst_46 = arith.constant 1.280000e+02 : f32
    %96 = vector.broadcast %cst_46 : f32 to vector<128x1xf32>
    %97 = arith.divf %95, %96 : vector<128x1xf32>
    %98 = vector.broadcast %97 : vector<128x1xf32> to vector<128x128xf32>
    %99 = arith.subf %91, %98 : vector<128x128xf32>
    %100 = arith.mulf %99, %99 : vector<128x128xf32>
    %cst_47 = arith.constant dense<0.000000e+00> : vector<128xf32>
    %101 = vector.multi_reduction <add>, %100, %cst_47 [1] : vector<128x128xf32> to vector<128xf32>
    %102 = vector.shape_cast %101 : vector<128xf32> to vector<128x1xf32>
    %cst_48 = arith.constant 1.280000e+02 : f32
    %103 = vector.broadcast %cst_48 : f32 to vector<128x1xf32>
    %104 = arith.divf %102, %103 : vector<128x1xf32>
    %105 = vector.broadcast %97 : vector<128x1xf32> to vector<128x128xf32>
    %106 = arith.subf %91, %105 : vector<128x128xf32>
    %cst_49 = arith.constant 9.99999974E-6 : f32
    %107 = vector.broadcast %cst_49 : f32 to vector<128x1xf32>
    %108 = arith.addf %104, %107 : vector<128x1xf32>
    %109 = math.rsqrt %108 : vector<128x1xf32>
    %110 = vector.broadcast %109 : vector<128x1xf32> to vector<128x128xf32>
    %111 = arith.mulf %106, %110 : vector<128x128xf32>
    %112 = vector.broadcast %92 : vector<1x128xf32> to vector<128x128xf32>
    %113 = arith.mulf %111, %112 : vector<128x128xf32>
    %114 = vector.broadcast %93 : vector<1x128xf32> to vector<128x128xf32>
    %115 = arith.addf %113, %114 : vector<128x128xf32>
    %cst_50 = arith.constant 0.000000e+00 : f32
    %116 = vector.broadcast %cst_50 : f32 to vector<128x128xf32>
    %117 = arith.maximumf %115, %116 : vector<128x128xf32>
    %118 = arith.truncf %117 : vector<128x128xf32> to vector<128x128xbf16>
    %c0_51 = arith.constant 0 : index
    %c0_52 = arith.constant 0 : index
    %c0_53 = arith.constant 0 : index
    %119 = vector.load %arg10[%c0_51, %c0_52, %c0_53] : memref<4x128x128xbf16, #tpu.memory_space<vmem>>, vector<1x128x128xbf16>
    %120 = vector.shape_cast %119 : vector<1x128x128xbf16> to vector<128x128xbf16>
    %cst_54 = arith.constant dense<0.000000e+00> : vector<128x128xf32>
    %121 = tpu.matmul %118, %120, %cst_54 {dimension_numbers = #tpu.dot_dimension_numbers<[1], [0], [0], [1], [0, 0, 1, 1], [], []>} : vector<128x128xbf16>, vector<128x128xbf16>, vector<128x128xf32> -> vector<128x128xf32>
    %c0_55 = arith.constant 0 : index
    %c0_56 = arith.constant 0 : index
    %122 = vector.load %arg11[%c0_55, %c0_56] : memref<4x128xf32, #tpu.memory_space<vmem>>, vector<1x128xf32>
    %123 = vector.broadcast %122 : vector<1x128xf32> to vector<128x128xf32>
    %124 = arith.addf %121, %123 : vector<128x128xf32>
    %c1_57 = arith.constant 1 : index
    %c0_58 = arith.constant 0 : index
    %125 = vector.load %arg8[%c1_57, %c0_58] : memref<4x128xf32, #tpu.memory_space<vmem>>, vector<1x128xf32>
    %c1_59 = arith.constant 1 : index
    %c0_60 = arith.constant 0 : index
    %126 = vector.load %arg9[%c1_59, %c0_60] : memref<4x128xf32, #tpu.memory_space<vmem>>, vector<1x128xf32>
    %cst_61 = arith.constant dense<0.000000e+00> : vector<128xf32>
    %127 = vector.multi_reduction <add>, %124, %cst_61 [1] : vector<128x128xf32> to vector<128xf32>
    %128 = vector.shape_cast %127 : vector<128xf32> to vector<128x1xf32>
    %cst_62 = arith.constant 1.280000e+02 : f32
    %129 = vector.broadcast %cst_62 : f32 to vector<128x1xf32>
    %130 = arith.divf %128, %129 : vector<128x1xf32>
    %131 = vector.broadcast %130 : vector<128x1xf32> to vector<128x128xf32>
    %132 = arith.subf %124, %131 : vector<128x128xf32>
    %133 = arith.mulf %132, %132 : vector<128x128xf32>
    %cst_63 = arith.constant dense<0.000000e+00> : vector<128xf32>
    %134 = vector.multi_reduction <add>, %133, %cst_63 [1] : vector<128x128xf32> to vector<128xf32>
    %135 = vector.shape_cast %134 : vector<128xf32> to vector<128x1xf32>
    %cst_64 = arith.constant 1.280000e+02 : f32
    %136 = vector.broadcast %cst_64 : f32 to vector<128x1xf32>
    %137 = arith.divf %135, %136 : vector<128x1xf32>
    %138 = vector.broadcast %130 : vector<128x1xf32> to vector<128x128xf32>
    %139 = arith.subf %124, %138 : vector<128x128xf32>
    %cst_65 = arith.constant 9.99999974E-6 : f32
    %140 = vector.broadcast %cst_65 : f32 to vector<128x1xf32>
    %141 = arith.addf %137, %140 : vector<128x1xf32>
    %142 = math.rsqrt %141 : vector<128x1xf32>
    %143 = vector.broadcast %142 : vector<128x1xf32> to vector<128x128xf32>
    %144 = arith.mulf %139, %143 : vector<128x128xf32>
    %145 = vector.broadcast %125 : vector<1x128xf32> to vector<128x128xf32>
    %146 = arith.mulf %144, %145 : vector<128x128xf32>
    %147 = vector.broadcast %126 : vector<1x128xf32> to vector<128x128xf32>
    %148 = arith.addf %146, %147 : vector<128x128xf32>
    %cst_66 = arith.constant 0.000000e+00 : f32
    %149 = vector.broadcast %cst_66 : f32 to vector<128x128xf32>
    %150 = arith.maximumf %148, %149 : vector<128x128xf32>
    %151 = arith.truncf %150 : vector<128x128xf32> to vector<128x128xbf16>
    %c1_67 = arith.constant 1 : index
    %c0_68 = arith.constant 0 : index
    %c0_69 = arith.constant 0 : index
    %152 = vector.load %arg10[%c1_67, %c0_68, %c0_69] : memref<4x128x128xbf16, #tpu.memory_space<vmem>>, vector<1x128x128xbf16>
    %153 = vector.shape_cast %152 : vector<1x128x128xbf16> to vector<128x128xbf16>
    %cst_70 = arith.constant dense<0.000000e+00> : vector<128x128xf32>
    %154 = tpu.matmul %151, %153, %cst_70 {dimension_numbers = #tpu.dot_dimension_numbers<[1], [0], [0], [1], [0, 0, 1, 1], [], []>} : vector<128x128xbf16>, vector<128x128xbf16>, vector<128x128xf32> -> vector<128x128xf32>
    %c1_71 = arith.constant 1 : index
    %c0_72 = arith.constant 0 : index
    %155 = vector.load %arg11[%c1_71, %c0_72] : memref<4x128xf32, #tpu.memory_space<vmem>>, vector<1x128xf32>
    %156 = vector.broadcast %155 : vector<1x128xf32> to vector<128x128xf32>
    %157 = arith.addf %154, %156 : vector<128x128xf32>
    %c0_73 = arith.constant 0 : index
    %c0_74 = arith.constant 0 : index
    %158 = vector.load %arg13[%c0_73, %c0_74] : memref<128x128xf32, #tpu.memory_space<vmem>>, vector<128x128xf32>
    %159 = arith.addf %158, %157 : vector<128x128xf32>
    %c0_75 = arith.constant 0 : index
    %c0_76 = arith.constant 0 : index
    %160 = vector.load %arg13[%c0_75, %c0_76] : memref<128x128xf32, #tpu.memory_space<vmem>>, vector<128x128xf32>
    tpu.vector_store %arg13[%c0_75, %c0_76], %159 {strides = array<i32>} : memref<128x128xf32, #tpu.memory_space<vmem>>, vector<128x128xf32>,
    %c0_77 = arith.constant 0 : index
    %c0_78 = arith.constant 0 : index
    %161 = vector.load %arg13[%c0_77, %c0_78] : memref<128x128xf32, #tpu.memory_space<vmem>>, vector<128x128xf32>
    %c2_79 = arith.constant 2 : index
    %c0_80 = arith.constant 0 : index
    %162 = vector.load %arg8[%c2_79, %c0_80] : memref<4x128xf32, #tpu.memory_space<vmem>>, vector<1x128xf32>
    %c2_81 = arith.constant 2 : index
    %c0_82 = arith.constant 0 : index
    %163 = vector.load %arg9[%c2_81, %c0_82] : memref<4x128xf32, #tpu.memory_space<vmem>>, vector<1x128xf32>
    %cst_83 = arith.constant dense<0.000000e+00> : vector<128xf32>
    %164 = vector.multi_reduction <add>, %161, %cst_83 [1] : vector<128x128xf32> to vector<128xf32>
    %165 = vector.shape_cast %164 : vector<128xf32> to vector<128x1xf32>
    %cst_84 = arith.constant 1.280000e+02 : f32
    %166 = vector.broadcast %cst_84 : f32 to vector<128x1xf32>
    %167 = arith.divf %165, %166 : vector<128x1xf32>
    %168 = vector.broadcast %167 : vector<128x1xf32> to vector<128x128xf32>
    %169 = arith.subf %161, %168 : vector<128x128xf32>
    %170 = arith.mulf %169, %169 : vector<128x128xf32>
    %cst_85 = arith.constant dense<0.000000e+00> : vector<128xf32>
    %171 = vector.multi_reduction <add>, %170, %cst_85 [1] : vector<128x128xf32> to vector<128xf32>
    %172 = vector.shape_cast %171 : vector<128xf32> to vector<128x1xf32>
    %cst_86 = arith.constant 1.280000e+02 : f32
    %173 = vector.broadcast %cst_86 : f32 to vector<128x1xf32>
    %174 = arith.divf %172, %173 : vector<128x1xf32>
    %175 = vector.broadcast %167 : vector<128x1xf32> to vector<128x128xf32>
    %176 = arith.subf %161, %175 : vector<128x128xf32>
    %cst_87 = arith.constant 9.99999974E-6 : f32
    %177 = vector.broadcast %cst_87 : f32 to vector<128x1xf32>
    %178 = arith.addf %174, %177 : vector<128x1xf32>
    %179 = math.rsqrt %178 : vector<128x1xf32>
    %180 = vector.broadcast %179 : vector<128x1xf32> to vector<128x128xf32>
    %181 = arith.mulf %176, %180 : vector<128x128xf32>
    %182 = vector.broadcast %162 : vector<1x128xf32> to vector<128x128xf32>
    %183 = arith.mulf %181, %182 : vector<128x128xf32>
    %184 = vector.broadcast %163 : vector<1x128xf32> to vector<128x128xf32>
    %185 = arith.addf %183, %184 : vector<128x128xf32>
    %cst_88 = arith.constant 0.000000e+00 : f32
    %186 = vector.broadcast %cst_88 : f32 to vector<128x128xf32>
    %187 = arith.maximumf %185, %186 : vector<128x128xf32>
    %188 = arith.truncf %187 : vector<128x128xf32> to vector<128x128xbf16>
    %c2_89 = arith.constant 2 : index
    %c0_90 = arith.constant 0 : index
    %c0_91 = arith.constant 0 : index
    %189 = vector.load %arg10[%c2_89, %c0_90, %c0_91] : memref<4x128x128xbf16, #tpu.memory_space<vmem>>, vector<1x128x128xbf16>
    %190 = vector.shape_cast %189 : vector<1x128x128xbf16> to vector<128x128xbf16>
    %cst_92 = arith.constant dense<0.000000e+00> : vector<128x128xf32>
    %191 = tpu.matmul %188, %190, %cst_92 {dimension_numbers = #tpu.dot_dimension_numbers<[1], [0], [0], [1], [0, 0, 1, 1], [], []>} : vector<128x128xbf16>, vector<128x128xbf16>, vector<128x128xf32> -> vector<128x128xf32>
    %c2_93 = arith.constant 2 : index
    %c0_94 = arith.constant 0 : index
    %192 = vector.load %arg11[%c2_93, %c0_94] : memref<4x128xf32, #tpu.memory_space<vmem>>, vector<1x128xf32>
    %193 = vector.broadcast %192 : vector<1x128xf32> to vector<128x128xf32>
    %194 = arith.addf %191, %193 : vector<128x128xf32>
    %c3 = arith.constant 3 : index
    %c0_95 = arith.constant 0 : index
    %195 = vector.load %arg8[%c3, %c0_95] : memref<4x128xf32, #tpu.memory_space<vmem>>, vector<1x128xf32>
    %c3_96 = arith.constant 3 : index
    %c0_97 = arith.constant 0 : index
    %196 = vector.load %arg9[%c3_96, %c0_97] : memref<4x128xf32, #tpu.memory_space<vmem>>, vector<1x128xf32>
    %cst_98 = arith.constant dense<0.000000e+00> : vector<128xf32>
    %197 = vector.multi_reduction <add>, %194, %cst_98 [1] : vector<128x128xf32> to vector<128xf32>
    %198 = vector.shape_cast %197 : vector<128xf32> to vector<128x1xf32>
    %cst_99 = arith.constant 1.280000e+02 : f32
    %199 = vector.broadcast %cst_99 : f32 to vector<128x1xf32>
    %200 = arith.divf %198, %199 : vector<128x1xf32>
    %201 = vector.broadcast %200 : vector<128x1xf32> to vector<128x128xf32>
    %202 = arith.subf %194, %201 : vector<128x128xf32>
    %203 = arith.mulf %202, %202 : vector<128x128xf32>
    %cst_100 = arith.constant dense<0.000000e+00> : vector<128xf32>
    %204 = vector.multi_reduction <add>, %203, %cst_100 [1] : vector<128x128xf32> to vector<128xf32>
    %205 = vector.shape_cast %204 : vector<128xf32> to vector<128x1xf32>
    %cst_101 = arith.constant 1.280000e+02 : f32
    %206 = vector.broadcast %cst_101 : f32 to vector<128x1xf32>
    %207 = arith.divf %205, %206 : vector<128x1xf32>
    %208 = vector.broadcast %200 : vector<128x1xf32> to vector<128x128xf32>
    %209 = arith.subf %194, %208 : vector<128x128xf32>
    %cst_102 = arith.constant 9.99999974E-6 : f32
    %210 = vector.broadcast %cst_102 : f32 to vector<128x1xf32>
    %211 = arith.addf %207, %210 : vector<128x1xf32>
    %212 = math.rsqrt %211 : vector<128x1xf32>
    %213 = vector.broadcast %212 : vector<128x1xf32> to vector<128x128xf32>
    %214 = arith.mulf %209, %213 : vector<128x128xf32>
    %215 = vector.broadcast %195 : vector<1x128xf32> to vector<128x128xf32>
    %216 = arith.mulf %214, %215 : vector<128x128xf32>
    %217 = vector.broadcast %196 : vector<1x128xf32> to vector<128x128xf32>
    %218 = arith.addf %216, %217 : vector<128x128xf32>
    %cst_103 = arith.constant 0.000000e+00 : f32
    %219 = vector.broadcast %cst_103 : f32 to vector<128x128xf32>
    %220 = arith.maximumf %218, %219 : vector<128x128xf32>
    %221 = arith.truncf %220 : vector<128x128xf32> to vector<128x128xbf16>
    %c3_104 = arith.constant 3 : index
    %c0_105 = arith.constant 0 : index
    %c0_106 = arith.constant 0 : index
    %222 = vector.load %arg10[%c3_104, %c0_105, %c0_106] : memref<4x128x128xbf16, #tpu.memory_space<vmem>>, vector<1x128x128xbf16>
    %223 = vector.shape_cast %222 : vector<1x128x128xbf16> to vector<128x128xbf16>
    %cst_107 = arith.constant dense<0.000000e+00> : vector<128x128xf32>
    %224 = tpu.matmul %221, %223, %cst_107 {dimension_numbers = #tpu.dot_dimension_numbers<[1], [0], [0], [1], [0, 0, 1, 1], [], []>} : vector<128x128xbf16>, vector<128x128xbf16>, vector<128x128xf32> -> vector<128x128xf32>
    %c3_108 = arith.constant 3 : index
    %c0_109 = arith.constant 0 : index
    %225 = vector.load %arg11[%c3_108, %c0_109] : memref<4x128xf32, #tpu.memory_space<vmem>>, vector<1x128xf32>
    %226 = vector.broadcast %225 : vector<1x128xf32> to vector<128x128xf32>
    %227 = arith.addf %224, %226 : vector<128x128xf32>
    %c0_110 = arith.constant 0 : index
    %c0_111 = arith.constant 0 : index
    %228 = vector.load %arg13[%c0_110, %c0_111] : memref<128x128xf32, #tpu.memory_space<vmem>>, vector<128x128xf32>
    %229 = arith.addf %228, %227 : vector<128x128xf32>
    %c0_112 = arith.constant 0 : index
    %c0_113 = arith.constant 0 : index
    %230 = vector.load %arg13[%c0_112, %c0_113] : memref<128x128xf32, #tpu.memory_space<vmem>>, vector<128x128xf32>
    tpu.vector_store %arg13[%c0_112, %c0_113], %229 {strides = array<i32>} : memref<128x128xf32, #tpu.memory_space<vmem>>, vector<128x128xf32>,
    %c0_114 = arith.constant 0 : index
    %c0_115 = arith.constant 0 : index
    %231 = vector.load %arg13[%c0_114, %c0_115] : memref<128x128xf32, #tpu.memory_space<vmem>>, vector<128x128xf32>
    %c0_116 = arith.constant 0 : index
    %c0_117 = arith.constant 0 : index
    %232 = vector.load %arg12[%c0_116, %c0_117] : memref<128x128xf32, #tpu.memory_space<vmem>>, vector<128x128xf32>
    tpu.vector_store %arg12[%c0_116, %c0_117], %231 {strides = array<i32>} : memref<128x128xf32, #tpu.memory_space<vmem>>, vector<128x128xf32>,
    return
  }
  func.func @transform_0(%arg0: i32) -> (i32, i32) {
    %c0_i32 = arith.constant 0 : i32
    %c0_i32_0 = arith.constant 0 : i32
    return %arg0, %c0_i32 : i32, i32
  }
  func.func @transform_1(%arg0: i32) -> (i32, i32) {
    %c0_i32 = arith.constant 0 : i32
    %c0_i32_0 = arith.constant 0 : i32
    return %arg0, %c0_i32 : i32, i32
  }
  func.func @transform_2(%arg0: i32) -> (i32, i32) {
    %c0_i32 = arith.constant 0 : i32
    %c0_i32_0 = arith.constant 0 : i32
    return %arg0, %c0_i32 : i32, i32
  }
  func.func @transform_3(%arg0: i32) -> (i32, i32) {
    %c0_i32 = arith.constant 0 : i32
    %c0_i32_0 = arith.constant 0 : i32
    %c0_i32_1 = arith.constant 0 : i32
    return %c0_i32, %c0_i32_0 : i32, i32
  }
  func.func @transform_4(%arg0: i32) -> (i32, i32) {
    %c0_i32 = arith.constant 0 : i32
    %c0_i32_0 = arith.constant 0 : i32
    %c0_i32_1 = arith.constant 0 : i32
    return %c0_i32, %c0_i32_0 : i32, i32
  }
  func.func @transform_5(%arg0: i32) -> (i32, i32) {
    %c0_i32 = arith.constant 0 : i32
    %c0_i32_0 = arith.constant 0 : i32
    %c0_i32_1 = arith.constant 0 : i32
    return %c0_i32, %c0_i32_0 : i32, i32
  }
  func.func @transform_6(%arg0: i32) -> (i32, i32) {
    %c0_i32 = arith.constant 0 : i32
    %c0_i32_0 = arith.constant 0 : i32
    %c0_i32_1 = arith.constant 0 : i32
    return %c0_i32, %c0_i32_0 : i32, i32
  }
  func.func @transform_7(%arg0: i32) -> (i32, i32) {
    %c0_i32 = arith.constant 0 : i32
    %c0_i32_0 = arith.constant 0 : i32
    %c0_i32_1 = arith.constant 0 : i32
    return %c0_i32, %c0_i32_0 : i32, i32
  }
  func.func @transform_8(%arg0: i32) -> (i32, i32) {
    %c0_i32 = arith.constant 0 : i32
    %c0_i32_0 = arith.constant 0 : i32
    %c0_i32_1 = arith.constant 0 : i32
    return %c0_i32, %c0_i32_0 : i32, i32
  }
  func.func @transform_9(%arg0: i32) -> (i32, i32, i32) {
    %c0_i32 = arith.constant 0 : i32
    %c0_i32_0 = arith.constant 0 : i32
    %c0_i32_1 = arith.constant 0 : i32
    %c0_i32_2 = arith.constant 0 : i32
    return %c0_i32, %c0_i32_0, %c0_i32_1 : i32, i32, i32
  }
  func.func @transform_10(%arg0: i32) -> (i32, i32) {
    %c0_i32 = arith.constant 0 : i32
    %c0_i32_0 = arith.constant 0 : i32
    %c0_i32_1 = arith.constant 0 : i32
    return %c0_i32, %c0_i32_0 : i32, i32
  }
  func.func @transform_11(%arg0: i32) -> (i32, i32) {
    %c0_i32 = arith.constant 0 : i32
    %c0_i32_0 = arith.constant 0 : i32
    return %arg0, %c0_i32 : i32, i32
  }
}

</mosaic_0001>

<llo_original>
// kernel: core_forward.1
$region0: #{core_forward.1}
  #allocation0 [shape = 'u32[]', space=smem, size = 0x4, offset = 0x4, fixed_abs, tag = 'smem constant byte address 0x4 - core index']
  #allocation1 [shape = 'u32[72,128]{1,0:T(1,128)}', space=vmem, size = 0x9000, scoped, tag = 'internal scratch']
  #allocation2 [shape = 'f32[128,128]{1,0:T(8,128)}', space=vmem, size = 0x10000, scoped, tag = 'scratch operand']
  %s0 = inlined_call_operand.hbm [shape: f32[256,128], index: 0, kind: input, shape index: {}]
  %s1 = inlined_call_operand.hbm [shape: f32[256,128], index: 1, kind: input, shape index: {}]
  %s2 = inlined_call_operand.hbm [shape: f32[256,128], index: 2, kind: input, shape index: {}]
  %s3 = inlined_call_operand.vmem [shape: f32[3,128], index: 3, kind: input, shape index: {}]
  %s4 = inlined_call_operand.hbm [shape: f32[3,128], index: 4, kind: input, shape index: {}]
  %s5 = inlined_call_operand.hbm [shape: bf16[384,128], index: 5, kind: input, shape index: {}]
  %s6 = inlined_call_operand.hbm [shape: f32[1,128], index: 6, kind: input, shape index: {}]
  %s7 = inlined_call_operand.vmem [shape: f32[4,128], index: 7, kind: input, shape index: {}]
  %s8 = inlined_call_operand.hbm [shape: f32[4,128], index: 8, kind: input, shape index: {}]
  %s9 = inlined_call_operand.hbm [shape: bf16[4,128,128], index: 9, kind: input, shape index: {}]
  %s10 = inlined_call_operand.hbm [shape: f32[4,128], index: 10, kind: input, shape index: {}]
  %s11 = inlined_call_operand.hbm [shape: f32[256,128], index: 11, kind: output, shape index: {}]
  %s12 = sld [smem:[#allocation0]]
  $region113: #{core_forward.1} parent=0
    _
  %s14 = ssub.s32 1, %s12
  %s15 = scalar_select 0, %s14, %s12
  $region1: #{core_forward.1} parent=0
    #allocation3 [shape = 'u8[131072]{0}', space=vmem, size = 0x20000, scoped, tag = 'input window, operand 0']
    #allocation4 [shape = 's32[2]{0}', space=sflag, size = 0x8, scoped, tag = 'scoped memory for core_forward.1']
    #allocation5 [shape = 's32[2]{0}', space=sflag, size = 0x8, scoped, tag = 'scoped memory for core_forward.1']
    #allocation6 [shape = 'u8[131072]{0}', space=vmem, size = 0x20000, scoped, tag = 'input window, operand 1']
    #allocation7 [shape = 's32[2]{0}', space=sflag, size = 0x8, scoped, tag = 'scoped memory for core_forward.1']
    #allocation8 [shape = 'u8[131072]{0}', space=vmem, size = 0x20000, scoped, tag = 'input window, operand 2']
    #allocation9 [shape = 'u8[2048]{0}', space=vmem, size = 0x800, scoped, tag = 'input window, operand 4, single buffered']
    #allocation10 [shape = 's32[1]{0}', space=sflag, size = 0x4, scoped, tag = 'scoped memory for core_forward.1']
    #allocation11 [shape = 'u8[98304]{0}', space=vmem, size = 0x18000, scoped, tag = 'input window, operand 5, single buffered']
    #allocation12 [shape = 'u8[512]{0}', space=vmem, size = 0x400, scoped, tag = 'input window, operand 6, single buffered']
    #allocation13 [shape = 's32[1]{0}', space=sflag, size = 0x4, scoped, tag = 'scoped memory for core_forward.1']
    #allocation14 [shape = 'u8[2048]{0}', space=vmem, size = 0x800, scoped, tag = 'input window, operand 8, single buffered']
    #allocation15 [shape = 'u8[131072]{0}', space=vmem, size = 0x20000, scoped, tag = 'input window, operand 9, single buffered']
    #allocation16 [shape = 's32[1]{0}', space=sflag, size = 0x4, scoped, tag = 'scoped memory for core_forward.1']
    #allocation17 [shape = 'u8[2048]{0}', space=vmem, size = 0x800, scoped, tag = 'input window, operand 10, single buffered']
    #allocation18 [shape = 'u8[131072]{0}', space=vmem, size = 0x20000, scoped, tag = 'output window, operand 0']
    %16 = vsyncpa [#allocation4], 0
    %s17 = scalar_lea.sflag [#allocation4], 1
    %18 = vsyncpa %s17, 0
    %19 = vsyncpa [#allocation7], 0
    %s20 = scalar_lea.sflag [#allocation7], 1
    %21 = vsyncpa %s20, 0
    %22 = vsyncpa [#allocation10], 0
    %23 = vsyncpa [#allocation13], 0
    %24 = vsyncpa [#allocation16], 0
    %25 = vsyncpa [#allocation5], 0
    %s26 = scalar_lea.sflag [#allocation5], 1
    %27 = vsyncpa %s26, 0
    loop: start=0, step=1, limit=4
    $region2: #{core_forward.1} parent=1 // loop_pre_header
      _
    $region3: #{core_forward.1} parent=1 // loop_header
      %s29 = sphi 0, %s33
      %p30 = scmp.ge.s32.totalorder %s29, 4
      %s39 = sphi 0, %s41
      %s42 = sphi 0, %s39
      %s43 = sphi 0, %s42
      %s59 = sphi 0, %s43
      %s65 = sphi 0, %s67
      %s68 = sphi 0, %s65
      %s69 = sphi 0, %s68
      %s85 = sphi 0, %s69
      %s91 = sphi 0, %s93
      %s94 = sphi 0, %s91
      %s95 = sphi 0, %s94
      %s111 = sphi 0, %s95
      %s115 = sphi 0, %s115
      %s117 = sphi 0, %s115
      %s118 = sphi 0, %s117
      %s132 = sphi 0, %s118
      %s136 = sphi 0, %s136
      %s138 = sphi 0, %s136
      %s139 = sphi 0, %s138
      %s153 = sphi 0, %s139
      %s157 = sphi 0, %s157
      %s159 = sphi 0, %s157
      %s160 = sphi 0, %s159
      %s174 = sphi 0, %s160
      %s178 = sphi 0, %s178
      %s180 = sphi 0, %s178
      %s181 = sphi 0, %s180
      %s195 = sphi 0, %s181
      %s199 = sphi 0, %s199
      %s201 = sphi 0, %s199
      %s202 = sphi 0, %s201
      %s216 = sphi 0, %s202
      %s220 = sphi 0, %s220
      %s222 = sphi 0, %s220
      %s223 = sphi 0, %s222
      %s237 = sphi 0, %s223
      %s241 = sphi 0, %s241
      %s243 = sphi 0, %s241
      %s244 = sphi 0, %s243
      %s258 = sphi 0, %s244
      %s262 = sphi 0, %s262
      %s264 = sphi 0, %s262
      %s265 = sphi 0, %s264
      %s279 = sphi 0, %s265
      %s285 = sphi 0, %s287
      %s288 = sphi 0, %s285
      %s289 = sphi 0, %s288
      %s305 = sphi 0, %s289
    $region4: #{core_forward.1} parent=1 // loop_header_branch
      %32 = sbr.rel (%p30) target = $region8
    $region5: #{core_forward.1} parent=1 // loop_body
      %s34 = ssub.s32 %s29, 1
      %s35 = ssub.s32 %s29, 2
      %s36 = sadd.s32 %s29, 1
      %s37 = ssub.s32 %s29, %s36
      %p38 = scmp.eq.s32.totalorder %s37, 0
      %s40 = sadd.s32 %s39, 1
      %s41 = scalar_select %p38, %s39, %s40
      %p44 = pneg %p38
      %p45 = scmp.eq.s32.totalorder %s29, 1
      %p46 = por %p44, %p45
      %p47 = scmp.ne.s32.totalorder %s39, %s42
      %p48 = scmp.eq.s32.totalorder %s29, 0
      %p49 = por %p47, %p48
      %p50 = scmp.ne.s32.totalorder %s39, %s42
      %p51 = scmp.eq.s32.totalorder %s34, 1
      %p52 = por %p50, %p51
      %p53 = scmp.ne.s32.totalorder %s42, %s43
      %p54 = scmp.eq.s32.totalorder %s34, 0
      %p55 = por %p53, %p54
      %p56 = scmp.ne.s32.totalorder %s42, %s43
      %p57 = scmp.eq.s32.totalorder %s35, 1
      %p58 = por %p56, %p57
      %p60 = scmp.ne.s32.totalorder %s43, %s59
      %p61 = scmp.eq.s32.totalorder %s35, 0
      %p62 = por %p60, %p61
      %s63 = ssub.s32 %s29, %s36
      %p64 = scmp.eq.s32.totalorder %s63, 0
      %s66 = sadd.s32 %s65, 1
      %s67 = scalar_select %p64, %s65, %s66
      %p70 = pneg %p64
      %p71 = scmp.eq.s32.totalorder %s29, 1
      %p72 = por %p70, %p71
      %p73 = scmp.ne.s32.totalorder %s65, %s68
      %p74 = scmp.eq.s32.totalorder %s29, 0
      %p75 = por %p73, %p74
      %p76 = scmp.ne.s32.totalorder %s65, %s68
      %p77 = scmp.eq.s32.totalorder %s34, 1
      %p78 = por %p76, %p77
      %p79 = scmp.ne.s32.totalorder %s68, %s69
      %p80 = scmp.eq.s32.totalorder %s34, 0
      %p81 = por %p79, %p80
      %p82 = scmp.ne.s32.totalorder %s68, %s69
      %p83 = scmp.eq.s32.totalorder %s35, 1
      %p84 = por %p82, %p83
      %p86 = scmp.ne.s32.totalorder %s69, %s85
      %p87 = scmp.eq.s32.totalorder %s35, 0
      %p88 = por %p86, %p87
      %s89 = ssub.s32 %s29, %s36
      %p90 = scmp.eq.s32.totalorder %s89, 0
      %s92 = sadd.s32 %s91, 1
      %s93 = scalar_select %p90, %s91, %s92
      %p96 = pneg %p90
      %p97 = scmp.eq.s32.totalorder %s29, 1
      %p98 = por %p96, %p97
      %p99 = scmp.ne.s32.totalorder %s91, %s94
      %p100 = scmp.eq.s32.totalorder %s29, 0
      %p101 = por %p99, %p100
      %p102 = scmp.ne.s32.totalorder %s91, %s94
      %p103 = scmp.eq.s32.totalorder %s34, 1
      %p104 = por %p102, %p103
      %p105 = scmp.ne.s32.totalorder %s94, %s95
      %p106 = scmp.eq.s32.totalorder %s34, 0
      %p107 = por %p105, %p106
      %p108 = scmp.ne.s32.totalorder %s94, %s95
      %p109 = scmp.eq.s32.totalorder %s35, 1
      %p110 = por %p108, %p109
      %p112 = scmp.ne.s32.totalorder %s95, %s111
      %p113 = scmp.eq.s32.totalorder %s35, 0
      %p114 = por %p112, %p113
      %s116 = sadd.s32 %s115, 1
      %p119 = scmp.eq.s32.totalorder %s29, 1
      %p120 = scmp.ne.s32.totalorder %s115, %s117
      %p121 = scmp.eq.s32.totalorder %s29, 0
      %p122 = por %p120, %p121
      %p123 = scmp.ne.s32.totalorder %s115, %s117
      %p124 = scmp.eq.s32.totalorder %s34, 1
      %p125 = por %p123, %p124
      %p126 = scmp.ne.s32.totalorder %s117, %s118
      %p127 = scmp.eq.s32.totalorder %s34, 0
      %p128 = por %p126, %p127
      %p129 = scmp.ne.s32.totalorder %s117, %s118
      %p130 = scmp.eq.s32.totalorder %s35, 1
      %p131 = por %p129, %p130
      %p133 = scmp.ne.s32.totalorder %s118, %s132
      %p134 = scmp.eq.s32.totalorder %s35, 0
      %p135 = por %p133, %p134
      %s137 = sadd.s32 %s136, 1
      %p140 = scmp.eq.s32.totalorder %s29, 1
      %p141 = scmp.ne.s32.totalorder %s136, %s138
      %p142 = scmp.eq.s32.totalorder %s29, 0
      %p143 = por %p141, %p142
      %p144 = scmp.ne.s32.totalorder %s136, %s138
      %p145 = scmp.eq.s32.totalorder %s34, 1
      %p146 = por %p144, %p145
      %p147 = scmp.ne.s32.totalorder %s138, %s139
      %p148 = scmp.eq.s32.totalorder %s34, 0
      %p149 = por %p147, %p148
      %p150 = scmp.ne.s32.totalorder %s138, %s139
      %p151 = scmp.eq.s32.totalorder %s35, 1
      %p152 = por %p150, %p151
      %p154 = scmp.ne.s32.totalorder %s139, %s153
      %p155 = scmp.eq.s32.totalorder %s35, 0
      %p156 = por %p154, %p155
      %s158 = sadd.s32 %s157, 1
      %p161 = scmp.eq.s32.totalorder %s29, 1
      %p162 = scmp.ne.s32.totalorder %s157, %s159
      %p163 = scmp.eq.s32.totalorder %s29, 0
      %p164 = por %p162, %p163
      %p165 = scmp.ne.s32.totalorder %s157, %s159
      %p166 = scmp.eq.s32.totalorder %s34, 1
      %p167 = por %p165, %p166
      %p168 = scmp.ne.s32.totalorder %s159, %s160
      %p169 = scmp.eq.s32.totalorder %s34, 0
      %p170 = por %p168, %p169
      %p171 = scmp.ne.s32.totalorder %s159, %s160
      %p172 = scmp.eq.s32.totalorder %s35, 1
      %p173 = por %p171, %p172
      %p175 = scmp.ne.s32.totalorder %s160, %s174
      %p176 = scmp.eq.s32.totalorder %s35, 0
      %p177 = por %p175, %p176
      %s179 = sadd.s32 %s178, 1
      %p182 = scmp.eq.s32.totalorder %s29, 1
      %p183 = scmp.ne.s32.totalorder %s178, %s180
      %p184 = scmp.eq.s32.totalorder %s29, 0
      %p185 = por %p183, %p184
      %p186 = scmp.ne.s32.totalorder %s178, %s180
      %p187 = scmp.eq.s32.totalorder %s34, 1
      %p188 = por %p186, %p187
      %p189 = scmp.ne.s32.totalorder %s180, %s181
      %p190 = scmp.eq.s32.totalorder %s34, 0
      %p191 = por %p189, %p190
      %p192 = scmp.ne.s32.totalorder %s180, %s181
      %p193 = scmp.eq.s32.totalorder %s35, 1
      %p194 = por %p192, %p193
      %p196 = scmp.ne.s32.totalorder %s181, %s195
      %p197 = scmp.eq.s32.totalorder %s35, 0
      %p198 = por %p196, %p197
      %s200 = sadd.s32 %s199, 1
      %p203 = scmp.eq.s32.totalorder %s29, 1
      %p204 = scmp.ne.s32.totalorder %s199, %s201
      %p205 = scmp.eq.s32.totalorder %s29, 0
      %p206 = por %p204, %p205
      %p207 = scmp.ne.s32.totalorder %s199, %s201
      %p208 = scmp.eq.s32.totalorder %s34, 1
      %p209 = por %p207, %p208
      %p210 = scmp.ne.s32.totalorder %s201, %s202
      %p211 = scmp.eq.s32.totalorder %s34, 0
      %p212 = por %p210, %p211
      %p213 = scmp.ne.s32.totalorder %s201, %s202
      %p214 = scmp.eq.s32.totalorder %s35, 1
      %p215 = por %p213, %p214
      %p217 = scmp.ne.s32.totalorder %s202, %s216
      %p218 = scmp.eq.s32.totalorder %s35, 0
      %p219 = por %p217, %p218
      %s221 = sadd.s32 %s220, 1
      %p224 = scmp.eq.s32.totalorder %s29, 1
      %p225 = scmp.ne.s32.totalorder %s220, %s222
      %p226 = scmp.eq.s32.totalorder %s29, 0
      %p227 = por %p225, %p226
      %p228 = scmp.ne.s32.totalorder %s220, %s222
      %p229 = scmp.eq.s32.totalorder %s34, 1
      %p230 = por %p228, %p229
      %p231 = scmp.ne.s32.totalorder %s222, %s223
      %p232 = scmp.eq.s32.totalorder %s34, 0
      %p233 = por %p231, %p232
      %p234 = scmp.ne.s32.totalorder %s222, %s223
      %p235 = scmp.eq.s32.totalorder %s35, 1
      %p236 = por %p234, %p235
      %p238 = scmp.ne.s32.totalorder %s223, %s237
      %p239 = scmp.eq.s32.totalorder %s35, 0
      %p240 = por %p238, %p239
      %s242 = sadd.s32 %s241, 1
      %p245 = scmp.eq.s32.totalorder %s29, 1
      %p246 = scmp.ne.s32.totalorder %s241, %s243
      %p247 = scmp.eq.s32.totalorder %s29, 0
      %p248 = por %p246, %p247
      %p249 = scmp.ne.s32.totalorder %s241, %s243
      %p250 = scmp.eq.s32.totalorder %s34, 1
      %p251 = por %p249, %p250
      %p252 = scmp.ne.s32.totalorder %s243, %s244
      %p253 = scmp.eq.s32.totalorder %s34, 0
      %p254 = por %p252, %p253
      %p255 = scmp.ne.s32.totalorder %s243, %s244
      %p256 = scmp.eq.s32.totalorder %s35, 1
      %p257 = por %p255, %p256
      %p259 = scmp.ne.s32.totalorder %s244, %s258
      %p260 = scmp.eq.s32.totalorder %s35, 0
      %p261 = por %p259, %p260
      %s263 = sadd.s32 %s262, 1
      %p266 = scmp.eq.s32.totalorder %s29, 1
      %p267 = scmp.ne.s32.totalorder %s262, %s264
      %p268 = scmp.eq.s32.totalorder %s29, 0
      %p269 = por %p267, %p268
      %p270 = scmp.ne.s32.totalorder %s262, %s264
      %p271 = scmp.eq.s32.totalorder %s34, 1
      %p272 = por %p270, %p271
      %p273 = scmp.ne.s32.totalorder %s264, %s265
      %p274 = scmp.eq.s32.totalorder %s34, 0
      %p275 = por %p273, %p274
      %p276 = scmp.ne.s32.totalorder %s264, %s265
      %p277 = scmp.eq.s32.totalorder %s35, 1
      %p278 = por %p276, %p277
      %p280 = scmp.ne.s32.totalorder %s265, %s279
      %p281 = scmp.eq.s32.totalorder %s35, 0
      %p282 = por %p280, %p281
      %s283 = ssub.s32 %s29, %s36
      %p284 = scmp.eq.s32.totalorder %s283, 0
      %s286 = sadd.s32 %s285, 1
      %s287 = scalar_select %p284, %s285, %s286
      %p290 = pneg %p284
      %p291 = scmp.eq.s32.totalorder %s29, 1
      %p292 = por %p290, %p291
      %p293 = scmp.ne.s32.totalorder %s285, %s288
      %p294 = scmp.eq.s32.totalorder %s29, 0
      %p295 = por %p293, %p294
      %p296 = scmp.ne.s32.totalorder %s285, %s288
      %p297 = scmp.eq.s32.totalorder %s34, 1
      %p298 = por %p296, %p297
      %p299 = scmp.ne.s32.totalorder %s288, %s289
      %p300 = scmp.eq.s32.totalorder %s34, 0
      %p301 = por %p299, %p300
      %p302 = scmp.ne.s32.totalorder %s288, %s289
      %p303 = scmp.eq.s32.totalorder %s35, 1
      %p304 = por %p302, %p303
      %p306 = scmp.ne.s32.totalorder %s289, %s305
      %p307 = scmp.eq.s32.totalorder %s35, 0
      %p308 = por %p306, %p307
      %p309 = scmp.le.s32.totalorder 1, %s29
      %p310 = scmp.lt.s32.totalorder %s29, 3
      %p311 = pnand %p309, %p310
      %p312 = pneg %p311
      // Predicated region
      $region9: #{core_forward.1} parent=5 // pred_check
        _
      $region10: #{core_forward.1} parent=5 // pred_check_branch
        %314 = sbr.rel (%p311) target = $region12
      $region11: #{core_forward.1} parent=5 // pred_region
        %s315 = ssub.s32 %s29, 1
        // Predicated region
        $region13: #{core_forward.1} parent=11 // pred_check
          %p316 = pneg %p128
        $region14: #{core_forward.1} parent=11 // pred_check_branch
          %318 = sbr.rel (%p316) target = $region16
        $region15: #{core_forward.1} parent=11 // pred_region
          _
        $region16: #{core_forward.1} parent=11 // pred_fallthru
          _
        // Predicated region
        $region17: #{core_forward.1} parent=11 // pred_check
          %p319 = pneg %p149
        $region18: #{core_forward.1} parent=11 // pred_check_branch
          %321 = sbr.rel (%p319) target = $region20
        $region19: #{core_forward.1} parent=11 // pred_region
          %323 = vsyncadd [#allocation10], 0
          %s325 = sshll.u32 %s4, 4
          %s326 = int_to_ptr.hbm [resolvable:$true] %s325
          %s327 = sshll.u32 [#allocation9], 4
          %s328 = int_to_ptr.vmem [resolvable:$true] %s327
          %330 = dma.hbm_to_vmem [thread:$0]  %s326, 64, %s328, [#allocation10]
        $region20: #{core_forward.1} parent=11 // pred_fallthru
          _
        // Predicated region
        $region21: #{core_forward.1} parent=11 // pred_check
          %p331 = pneg %p170
        $region22: #{core_forward.1} parent=11 // pred_check_branch
          %333 = sbr.rel (%p331) target = $region24
        $region23: #{core_forward.1} parent=11 // pred_region
          %335 = vsyncadd [#allocation10], 0
          %s336 = sshll.u32 %s5, 4
          %s337 = int_to_ptr.hbm [resolvable:$true] %s336
          %s338 = sshll.u32 [#allocation11], 4
          %s339 = int_to_ptr.vmem [resolvable:$true] %s338
          %344 = dma.hbm_to_vmem [thread:$0]  %s337, 3072, %s339, [#allocation10], 64, 64, 4
        $region24: #{core_forward.1} parent=11 // pred_fallthru
          _
        // Predicated region
        $region25: #{core_forward.1} parent=11 // pred_check
          %p345 = pneg %p191
        $region26: #{core_forward.1} parent=11 // pred_check_branch
          %347 = sbr.rel (%p345) target = $region28
        $region27: #{core_forward.1} parent=11 // pred_region
          %349 = vsyncadd [#allocation13], 0
          %s351 = sshll.u32 %s6, 4
          %s352 = int_to_ptr.hbm [resolvable:$true] %s351
          %s353 = sshll.u32 [#allocation12], 4
          %s354 = int_to_ptr.vmem [resolvable:$true] %s353
          %356 = dma.hbm_to_vmem [thread:$0]  %s352, 16, %s354, [#allocation13]
        $region28: #{core_forward.1} parent=11 // pred_fallthru
          _
        // Predicated region
        $region29: #{core_forward.1} parent=11 // pred_check
          %p357 = pneg %p212
        $region30: #{core_forward.1} parent=11 // pred_check_branch
          %359 = sbr.rel (%p357) target = $region32
        $region31: #{core_forward.1} parent=11 // pred_region
          _
        $region32: #{core_forward.1} parent=11 // pred_fallthru
          _
        // Predicated region
        $region33: #{core_forward.1} parent=11 // pred_check
          %p360 = pneg %p233
        $region34: #{core_forward.1} parent=11 // pred_check_branch
          %362 = sbr.rel (%p360) target = $region36
        $region35: #{core_forward.1} parent=11 // pred_region
          %364 = vsyncadd [#allocation13], 0
          %s366 = sshll.u32 %s8, 4
          %s367 = int_to_ptr.hbm [resolvable:$true] %s366
          %s368 = sshll.u32 [#allocation14], 4
          %s369 = int_to_ptr.vmem [resolvable:$true] %s368
          %371 = dma.hbm_to_vmem [thread:$0]  %s367, 64, %s369, [#allocation13]
        $region36: #{core_forward.1} parent=11 // pred_fallthru
          _
        // Predicated region
        $region37: #{core_forward.1} parent=11 // pred_check
          %p372 = pneg %p254
        $region38: #{core_forward.1} parent=11 // pred_check_branch
          %374 = sbr.rel (%p372) target = $region40
        $region39: #{core_forward.1} parent=11 // pred_region
          %376 = vsyncadd [#allocation16], 0
          %s377 = sshll.u32 %s9, 4
          %s378 = int_to_ptr.hbm [resolvable:$true] %s377
          %s379 = sshll.u32 [#allocation15], 4
          %s380 = int_to_ptr.vmem [resolvable:$true] %s379
          %385 = dma.hbm_to_vmem [thread:$0]  %s378, 4096, %s380, [#allocation16], 64, 64, 4
        $region40: #{core_forward.1} parent=11 // pred_fallthru
          _
        // Predicated region
        $region41: #{core_forward.1} parent=11 // pred_check
          %p386 = pneg %p275
        $region42: #{core_forward.1} parent=11 // pred_check_branch
          %388 = sbr.rel (%p386) target = $region44
        $region43: #{core_forward.1} parent=11 // pred_region
          %390 = vsyncadd [#allocation16], 0
          %s392 = sshll.u32 %s10, 4
          %s393 = int_to_ptr.hbm [resolvable:$true] %s392
          %s394 = sshll.u32 [#allocation17], 4
          %s395 = int_to_ptr.vmem [resolvable:$true] %s394
          %397 = dma.hbm_to_vmem [thread:$0]  %s393, 64, %s395, [#allocation16]
        $region44: #{core_forward.1} parent=11 // pred_fallthru
          _
      $region12: #{core_forward.1} parent=5 // pred_fallthru
        _
      %p398 = scmp.lt.s32.totalorder %s29, 2
      // Predicated region
      $region45: #{core_forward.1} parent=5 // pred_check
        %p399 = pneg %p398
      $region46: #{core_forward.1} parent=5 // pred_check_branch
        %401 = sbr.rel (%p399) target = $region48
      $region47: #{core_forward.1} parent=5 // pred_region
        // Predicated region
        $region49: #{core_forward.1} parent=47 // pred_check
          %p402 = pneg %p49
        $region50: #{core_forward.1} parent=47 // pred_check_branch
          %404 = sbr.rel (%p402) target = $region52
        $region51: #{core_forward.1} parent=47 // pred_region
          %s405 = sand.u32 %s39, 1
          %s406 = scalar_lea.sflag [#allocation4], %s405
          %s407 = sand.u32 %s39, 1
          %s408 = smul.addr %s407, 128
          %s409 = scalar_lea.vmem [#allocation3], %s408
          %s410 = smul.u32 16, %s29
          %412 = vsyncadd %s406, 0
          %s413 = smul.addr %s410, 8
          %s414 = scalar_lea.hbm %s0, %s413
          %s415 = sshll.u32 %s414, 4
          %s416 = int_to_ptr.hbm [resolvable:$true] %s415
          %s417 = sshll.u32 %s409, 4
          %s418 = int_to_ptr.vmem [resolvable:$true] %s417
          %423 = dma.hbm_to_vmem [thread:$0]  %s416, 2048, %s418, %s406, 128, 128, 8
        $region52: #{core_forward.1} parent=47 // pred_fallthru
          _
        // Predicated region
        $region53: #{core_forward.1} parent=47 // pred_check
          %p424 = pneg %p75
        $region54: #{core_forward.1} parent=47 // pred_check_branch
          %426 = sbr.rel (%p424) target = $region56
        $region55: #{core_forward.1} parent=47 // pred_region
          %s427 = sand.u32 %s29, 1
          %s428 = scalar_lea.sflag [#allocation7], %s427
          %s429 = sand.u32 %s65, 1
          %s430 = smul.addr %s429, 128
          %s431 = scalar_lea.vmem [#allocation6], %s430
          %s432 = smul.u32 16, %s29
          %434 = vsyncadd %s428, 0
          %s435 = smul.addr %s432, 8
          %s436 = scalar_lea.hbm %s1, %s435
          %s437 = sshll.u32 %s436, 4
          %s438 = int_to_ptr.hbm [resolvable:$true] %s437
          %s439 = sshll.u32 %s431, 4
          %s440 = int_to_ptr.vmem [resolvable:$true] %s439
          %445 = dma.hbm_to_vmem [thread:$0]  %s438, 2048, %s440, %s428, 128, 128, 8
        $region56: #{core_forward.1} parent=47 // pred_fallthru
          _
        // Predicated region
        $region57: #{core_forward.1} parent=47 // pred_check
          %p446 = pneg %p101
        $region58: #{core_forward.1} parent=47 // pred_check_branch
          %448 = sbr.rel (%p446) target = $region60
        $region59: #{core_forward.1} parent=47 // pred_region
          %s449 = sand.u32 %s29, 1
          %s450 = scalar_lea.sflag [#allocation7], %s449
          %s451 = sand.u32 %s91, 1
          %s452 = smul.addr %s451, 128
          %s453 = scalar_lea.vmem [#allocation8], %s452
          %s454 = smul.u32 16, %s29
          %456 = vsyncadd %s450, 0
          %s457 = smul.addr %s454, 8
          %s458 = scalar_lea.hbm %s2, %s457
          %s459 = sshll.u32 %s458, 4
          %s460 = int_to_ptr.hbm [resolvable:$true] %s459
          %s461 = sshll.u32 %s453, 4
          %s462 = int_to_ptr.vmem [resolvable:$true] %s461
          %467 = dma.hbm_to_vmem [thread:$0]  %s460, 2048, %s462, %s450, 128, 128, 8
        $region60: #{core_forward.1} parent=47 // pred_fallthru
          _
      $region48: #{core_forward.1} parent=5 // pred_fallthru
        _
      %p468 = scmp.le.s32.totalorder 1, %s29
      %p469 = scmp.lt.s32.totalorder %s29, 3
      %p470 = pnand %p468, %p469
      %p471 = pneg %p470
      // Predicated region
      $region61: #{core_forward.1} parent=5 // pred_check
        _
      $region62: #{core_forward.1} parent=5 // pred_check_branch
        %473 = sbr.rel (%p470) target = $region64
      $region63: #{core_forward.1} parent=5 // pred_region
        %s474 = ssub.s32 %s29, 1
        %s475 = sand.u32 %s42, 1
        %s476 = scalar_lea.sflag [#allocation4], %s475
        %s477 = sand.u32 %s42, 1
        %s478 = smul.addr %s477, 128
        %s479 = scalar_lea.vmem [#allocation3], %s478
        // Predicated region
        $region65: #{core_forward.1} parent=63 // pred_check
          %p480 = pneg %p55
        $region66: #{core_forward.1} parent=63 // pred_check_branch
          %482 = sbr.rel (%p480) target = $region68
        $region67: #{core_forward.1} parent=63 // pred_region
          %484 = dma.done %s476, 2048
        $region68: #{core_forward.1} parent=63 // pred_fallthru
          _
        %s485 = sand.u32 %s34, 1
        %s486 = scalar_lea.sflag [#allocation7], %s485
        %s487 = sand.u32 %s68, 1
        %s488 = smul.addr %s487, 128
        %s489 = scalar_lea.vmem [#allocation6], %s488
        // Predicated region
        $region69: #{core_forward.1} parent=63 // pred_check
          %p490 = pneg %p81
        $region70: #{core_forward.1} parent=63 // pred_check_branch
          %492 = sbr.rel (%p490) target = $region72
        $region71: #{core_forward.1} parent=63 // pred_region
          %494 = dma.done %s486, 2048
        $region72: #{core_forward.1} parent=63 // pred_fallthru
          _
        %s495 = sand.u32 %s34, 1
        %s496 = scalar_lea.sflag [#allocation7], %s495
        %s497 = sand.u32 %s94, 1
        %s498 = smul.addr %s497, 128
        %s499 = scalar_lea.vmem [#allocation8], %s498
        // Predicated region
        $region73: #{core_forward.1} parent=63 // pred_check
          %p500 = pneg %p107
        $region74: #{core_forward.1} parent=63 // pred_check_branch
          %502 = sbr.rel (%p500) target = $region76
        $region75: #{core_forward.1} parent=63 // pred_region
          %504 = dma.done %s496, 2048
        $region76: #{core_forward.1} parent=63 // pred_fallthru
          _
        // Predicated region
        $region77: #{core_forward.1} parent=63 // pred_check
          %p505 = pneg %p149
        $region78: #{core_forward.1} parent=63 // pred_check_branch
          %507 = sbr.rel (%p505) target = $region80
        $region79: #{core_forward.1} parent=63 // pred_region
          %509 = dma.done [#allocation10], 64
        $region80: #{core_forward.1} parent=63 // pred_fallthru
          _
        // Predicated region
        $region81: #{core_forward.1} parent=63 // pred_check
          %p510 = pneg %p170
        $region82: #{core_forward.1} parent=63 // pred_check_branch
          %512 = sbr.rel (%p510) target = $region84
        $region83: #{core_forward.1} parent=63 // pred_region
          %514 = dma.done [#allocation10], 3072
        $region84: #{core_forward.1} parent=63 // pred_fallthru
          _
        // Predicated region
        $region85: #{core_forward.1} parent=63 // pred_check
          %p515 = pneg %p191
        $region86: #{core_forward.1} parent=63 // pred_check_branch
          %517 = sbr.rel (%p515) target = $region88
        $region87: #{core_forward.1} parent=63 // pred_region
          %519 = dma.done [#allocation13], 16
        $region88: #{core_forward.1} parent=63 // pred_fallthru
          _
        // Predicated region
        $region89: #{core_forward.1} parent=63 // pred_check
          %p520 = pneg %p233
        $region90: #{core_forward.1} parent=63 // pred_check_branch
          %522 = sbr.rel (%p520) target = $region92
        $region91: #{core_forward.1} parent=63 // pred_region
          %524 = dma.done [#allocation13], 64
        $region92: #{core_forward.1} parent=63 // pred_fallthru
          _
        // Predicated region
        $region93: #{core_forward.1} parent=63 // pred_check
          %p525 = pneg %p254
        $region94: #{core_forward.1} parent=63 // pred_check_branch
          %527 = sbr.rel (%p525) target = $region96
        $region95: #{core_forward.1} parent=63 // pred_region
          %529 = dma.done [#allocation16], 4096
        $region96: #{core_forward.1} parent=63 // pred_fallthru
          _
        // Predicated region
        $region97: #{core_forward.1} parent=63 // pred_check
          %p530 = pneg %p275
        $region98: #{core_forward.1} parent=63 // pred_check_branch
          %532 = sbr.rel (%p530) target = $region100
        $region99: #{core_forward.1} parent=63 // pred_region
          %534 = dma.done [#allocation16], 64
        $region100: #{core_forward.1} parent=63 // pred_fallthru
          _
        %s535 = sand.u32 %s42, 1
        %s536 = scalar_lea.sflag [#allocation4], %s535
        %s537 = sand.u32 %s42, 1
        %s538 = smul.addr %s537, 128
        %s539 = scalar_lea.vmem [#allocation3], %s538
        %p540 = pneg %p55
        %p541 = pneg %p52
        %s542 = sand.u32 %s34, 1
        %s543 = scalar_lea.sflag [#allocation7], %s542
        %s544 = sand.u32 %s68, 1
        %s545 = smul.addr %s544, 128
        %s546 = scalar_lea.vmem [#allocation6], %s545
        %p547 = pneg %p81
        %p548 = pneg %p78
        %s549 = sand.u32 %s34, 1
        %s550 = scalar_lea.sflag [#allocation7], %s549
        %s551 = sand.u32 %s94, 1
        %s552 = smul.addr %s551, 128
        %s553 = scalar_lea.vmem [#allocation8], %s552
        %p554 = pneg %p107
        %p555 = pneg %p104
        %p556 = pneg %p128
        %p557 = pneg %p125
        %p558 = pneg %p149
        %p559 = pneg %p146
        %p560 = pneg %p170
        %p561 = pneg %p167
        %p562 = pneg %p191
        %p563 = pneg %p188
        %p564 = pneg %p212
        %p565 = pneg %p209
        %p566 = pneg %p233
        %p567 = pneg %p230
        %p568 = pneg %p254
        %p569 = pneg %p251
        %p570 = pneg %p275
        %p571 = pneg %p272
        %p572 = pneg %p301
        %p573 = pneg %p298
        %s574 = sand.u32 %s288, 1
        %s575 = scalar_lea.sflag [#allocation5], %s574
        %s576 = sand.u32 %s288, 1
        %s577 = smul.addr %s576, 128
        %s578 = scalar_lea.vmem [#allocation18], %s577
        %s579 = smul.u32 16, %s34
        %s580 = smul.u32 16, %s34
        %s581 = smul.u32 16, %s34
        %s582 = smul.u32 16, %s34
        %v583 = vld [vmem:[%s3] sm:$0x1]
        %v584 = vld [vmem:[#allocation9] sm:$0x1]
        %v585 = vld [vmem:[%s479] sm:$0xff]
        %v586 = vld [vmem:[%s479 + $0x8] sm:$0xff]
        %v587 = vld [vmem:[%s479 + $0x10] sm:$0xff]
        %v588 = vld [vmem:[%s479 + $0x18] sm:$0xff]
        %v589 = vld [vmem:[%s479 + $0x20] sm:$0xff]
        %v590 = vld [vmem:[%s479 + $0x28] sm:$0xff]
        %v591 = vld [vmem:[%s479 + $0x30] sm:$0xff]
        %v592 = vld [vmem:[%s479 + $0x38] sm:$0xff]
        %v593 = vld [vmem:[%s479 + $0x40] sm:$0xff]
        %v594 = vld [vmem:[%s479 + $0x48] sm:$0xff]
        %v595 = vld [vmem:[%s479 + $0x50] sm:$0xff]
        %v596 = vld [vmem:[%s479 + $0x58] sm:$0xff]
        %v597 = vld [vmem:[%s479 + $0x60] sm:$0xff]
        %v598 = vld [vmem:[%s479 + $0x68] sm:$0xff]
        %v599 = vld [vmem:[%s479 + $0x70] sm:$0xff]
        %v600 = vld [vmem:[%s479 + $0x78] sm:$0xff]
        %601 = vadd.xlane.f32.xlu0 %v585
        %v602 = vpop.xlane.xlu0 %601
        %603 = vadd.xlane.f32.xlu0 %v586
        %v604 = vpop.xlane.xlu0 %603
        %605 = vadd.xlane.f32.xlu0 %v587
        %v606 = vpop.xlane.xlu0 %605
        %607 = vadd.xlane.f32.xlu0 %v588
        %v608 = vpop.xlane.xlu0 %607
        %609 = vadd.xlane.f32.xlu0 %v589
        %v610 = vpop.xlane.xlu0 %609
        %611 = vadd.xlane.f32.xlu0 %v590
        %v612 = vpop.xlane.xlu0 %611
        %613 = vadd.xlane.f32.xlu0 %v591
        %v614 = vpop.xlane.xlu0 %613
        %615 = vadd.xlane.f32.xlu0 %v592
        %v616 = vpop.xlane.xlu0 %615
        %617 = vadd.xlane.f32.xlu0 %v593
        %v618 = vpop.xlane.xlu0 %617
        %619 = vadd.xlane.f32.xlu0 %v594
        %v620 = vpop.xlane.xlu0 %619
        %621 = vadd.xlane.f32.xlu0 %v595
        %v622 = vpop.xlane.xlu0 %621
        %623 = vadd.xlane.f32.xlu0 %v596
        %v624 = vpop.xlane.xlu0 %623
        %625 = vadd.xlane.f32.xlu0 %v597
        %v626 = vpop.xlane.xlu0 %625
        %627 = vadd.xlane.f32.xlu0 %v598
        %v628 = vpop.xlane.xlu0 %627
        %629 = vadd.xlane.f32.xlu0 %v599
        %v630 = vpop.xlane.xlu0 %629
        %631 = vadd.xlane.f32.xlu0 %v600
        %v632 = vpop.xlane.xlu0 %631
        %v633 = vrcp.pop 128.0
        %v634 = vmul.f32 128.0, %v633
        %v635 = vsub.f32 1.0, %v634
        %v636 = vmul.f32 %v633, %v635
        %v637 = vadd.f32 %v633, %v636
        %vm638 = vweird.f32 %v633
        %v639 = vsel %vm638, %v633, %v637
        %v640 = vmul.f32 %v602, %v639
        %v641 = vmul.f32 %v604, %v639
        %v642 = vmul.f32 %v606, %v639
        %v643 = vmul.f32 %v608, %v639
        %v644 = vmul.f32 %v610, %v639
        %v645 = vmul.f32 %v612, %v639
        %v646 = vmul.f32 %v614, %v639
        %v647 = vmul.f32 %v616, %v639
        %v648 = vmul.f32 %v618, %v639
        %v649 = vmul.f32 %v620, %v639
        %v650 = vmul.f32 %v622, %v639
        %v651 = vmul.f32 %v624, %v639
        %v652 = vmul.f32 %v626, %v639
        %v653 = vmul.f32 %v628, %v639
        %v654 = vmul.f32 %v630, %v639
        %v655 = vmul.f32 %v632, %v639
        %v656 = vsub.f32 %v585, %v640
        %v657 = vsub.f32 %v586, %v641
        %v658 = vsub.f32 %v587, %v642
        %v659 = vsub.f32 %v588, %v643
        %v660 = vsub.f32 %v589, %v644
        %v661 = vsub.f32 %v590, %v645
        %v662 = vsub.f32 %v591, %v646
        %v663 = vsub.f32 %v592, %v647
        %v664 = vsub.f32 %v593, %v648
        %v665 = vsub.f32 %v594, %v649
        %v666 = vsub.f32 %v595, %v650
        %v667 = vsub.f32 %v596, %v651
        %v668 = vsub.f32 %v597, %v652
        %v669 = vsub.f32 %v598, %v653
        %v670 = vsub.f32 %v599, %v654
        %v671 = vsub.f32 %v600, %v655
        %v672 = vmul.f32 %v656, %v656
        %v673 = vmul.f32 %v657, %v657
        %v674 = vmul.f32 %v658, %v658
        %v675 = vmul.f32 %v659, %v659
        %v676 = vmul.f32 %v660, %v660
        %v677 = vmul.f32 %v661, %v661
        %v678 = vmul.f32 %v662, %v662
        %v679 = vmul.f32 %v663, %v663
        %v680 = vmul.f32 %v664, %v664
        %v681 = vmul.f32 %v665, %v665
        %v682 = vmul.f32 %v666, %v666
        %v683 = vmul.f32 %v667, %v667
        %v684 = vmul.f32 %v668, %v668
        %v685 = vmul.f32 %v669, %v669
        %v686 = vmul.f32 %v670, %v670
        %v687 = vmul.f32 %v671, %v671
        %688 = vadd.xlane.f32.xlu0 %v672
        %v689 = vpop.xlane.xlu0 %688
        %690 = vadd.xlane.f32.xlu0 %v673
        %v691 = vpop.xlane.xlu0 %690
        %692 = vadd.xlane.f32.xlu0 %v674
        %v693 = vpop.xlane.xlu0 %692
        %694 = vadd.xlane.f32.xlu0 %v675
        %v695 = vpop.xlane.xlu0 %694
        %696 = vadd.xlane.f32.xlu0 %v676
        %v697 = vpop.xlane.xlu0 %696
        %698 = vadd.xlane.f32.xlu0 %v677
        %v699 = vpop.xlane.xlu0 %698
        %700 = vadd.xlane.f32.xlu0 %v678
        %v701 = vpop.xlane.xlu0 %700
        %702 = vadd.xlane.f32.xlu0 %v679
        %v703 = vpop.xlane.xlu0 %702
        %704 = vadd.xlane.f32.xlu0 %v680
        %v705 = vpop.xlane.xlu0 %704
        %706 = vadd.xlane.f32.xlu0 %v681
        %v707 = vpop.xlane.xlu0 %706
        %708 = vadd.xlane.f32.xlu0 %v682
        %v709 = vpop.xlane.xlu0 %708
        %710 = vadd.xlane.f32.xlu0 %v683
        %v711 = vpop.xlane.xlu0 %710
        %712 = vadd.xlane.f32.xlu0 %v684
        %v713 = vpop.xlane.xlu0 %712
        %714 = vadd.xlane.f32.xlu0 %v685
        %v715 = vpop.xlane.xlu0 %714
        %716 = vadd.xlane.f32.xlu0 %v686
        %v717 = vpop.xlane.xlu0 %716
        %718 = vadd.xlane.f32.xlu0 %v687
        %v719 = vpop.xlane.xlu0 %718
        %v720 = vmul.f32 %v689, %v639
        %v721 = vmul.f32 %v691, %v639
        %v722 = vmul.f32 %v693, %v639
        %v723 = vmul.f32 %v695, %v639
        %v724 = vmul.f32 %v697, %v639
        %v725 = vmul.f32 %v699, %v639
        %v726 = vmul.f32 %v701, %v639
        %v727 = vmul.f32 %v703, %v639
        %v728 = vmul.f32 %v705, %v639
        %v729 = vmul.f32 %v707, %v639
        %v730 = vmul.f32 %v709, %v639
        %v731 = vmul.f32 %v711, %v639
        %v732 = vmul.f32 %v713, %v639
        %v733 = vmul.f32 %v715, %v639
        %v734 = vmul.f32 %v717, %v639
        %v735 = vmul.f32 %v719, %v639
        %v736 = vadd.f32 %v720, 1e-05
        %v737 = vadd.f32 %v721, 1e-05
        %v738 = vadd.f32 %v722, 1e-05
        %v739 = vadd.f32 %v723, 1e-05
        %v740 = vadd.f32 %v724, 1e-05
        %v741 = vadd.f32 %v725, 1e-05
        %v742 = vadd.f32 %v726, 1e-05
        %v743 = vadd.f32 %v727, 1e-05
        %v744 = vadd.f32 %v728, 1e-05
        %v745 = vadd.f32 %v729, 1e-05
        %v746 = vadd.f32 %v730, 1e-05
        %v747 = vadd.f32 %v731, 1e-05
        %v748 = vadd.f32 %v732, 1e-05
        %v749 = vadd.f32 %v733, 1e-05
        %v750 = vadd.f32 %v734, 1e-05
        %v751 = vadd.f32 %v735, 1e-05
        %v752 = vrsqrt.pop %v736
        %v753 = vmul.f32 %v752, %v736
        %v754 = vmul.f32 %v753, %v752
        %v755 = vmul.f32 0.5, %v754
        %v756 = vsub.f32 1.5, %v755
        %v757 = vmul.f32 %v752, %v756
        %vm758 = vweird.f32 %v736
        %vm759 = vweird.f32 %v752
        %vm760 = vmor %vm758, %vm759
        %v761 = vsel %vm760, %v752, %v757
        %v762 = vrsqrt.pop %v737
        %v763 = vmul.f32 %v762, %v737
        %v764 = vmul.f32 %v763, %v762
        %v765 = vmul.f32 0.5, %v764
        %v766 = vsub.f32 1.5, %v765
        %v767 = vmul.f32 %v762, %v766
        %vm768 = vweird.f32 %v737
        %vm769 = vweird.f32 %v762
        %vm770 = vmor %vm768, %vm769
        %v771 = vsel %vm770, %v762, %v767
        %v772 = vrsqrt.pop %v738
        %v773 = vmul.f32 %v772, %v738
        %v774 = vmul.f32 %v773, %v772
        %v775 = vmul.f32 0.5, %v774
        %v776 = vsub.f32 1.5, %v775
        %v777 = vmul.f32 %v772, %v776
        %vm778 = vweird.f32 %v738
        %vm779 = vweird.f32 %v772
        %vm780 = vmor %vm778, %vm779
        %v781 = vsel %vm780, %v772, %v777
        %v782 = vrsqrt.pop %v739
        %v783 = vmul.f32 %v782, %v739
        %v784 = vmul.f32 %v783, %v782
        %v785 = vmul.f32 0.5, %v784
        %v786 = vsub.f32 1.5, %v785
        %v787 = vmul.f32 %v782, %v786
        %vm788 = vweird.f32 %v739
        %vm789 = vweird.f32 %v782
        %vm790 = vmor %vm788, %vm789
        %v791 = vsel %vm790, %v782, %v787
        %v792 = vrsqrt.pop %v740
        %v793 = vmul.f32 %v792, %v740
        %v794 = vmul.f32 %v793, %v792
        %v795 = vmul.f32 0.5, %v794
        %v796 = vsub.f32 1.5, %v795
        %v797 = vmul.f32 %v792, %v796
        %vm798 = vweird.f32 %v740
        %vm799 = vweird.f32 %v792
        %vm800 = vmor %vm798, %vm799
        %v801 = vsel %vm800, %v792, %v797
        %v802 = vrsqrt.pop %v741
        %v803 = vmul.f32 %v802, %v741
        %v804 = vmul.f32 %v803, %v802
        %v805 = vmul.f32 0.5, %v804
        %v806 = vsub.f32 1.5, %v805
        %v807 = vmul.f32 %v802, %v806
        %vm808 = vweird.f32 %v741
        %vm809 = vweird.f32 %v802
        %vm810 = vmor %vm808, %vm809
        %v811 = vsel %vm810, %v802, %v807
        %v812 = vrsqrt.pop %v742
        %v813 = vmul.f32 %v812, %v742
        %v814 = vmul.f32 %v813, %v812
        %v815 = vmul.f32 0.5, %v814
        %v816 = vsub.f32 1.5, %v815
        %v817 = vmul.f32 %v812, %v816
        %vm818 = vweird.f32 %v742
        %vm819 = vweird.f32 %v812
        %vm820 = vmor %vm818, %vm819
        %v821 = vsel %vm820, %v812, %v817
        %v822 = vrsqrt.pop %v743
        %v823 = vmul.f32 %v822, %v743
        %v824 = vmul.f32 %v823, %v822
        %v825 = vmul.f32 0.5, %v824
        %v826 = vsub.f32 1.5, %v825
        %v827 = vmul.f32 %v822, %v826
        %vm828 = vweird.f32 %v743
        %vm829 = vweird.f32 %v822
        %vm830 = vmor %vm828, %vm829
        %v831 = vsel %vm830, %v822, %v827
        %v832 = vrsqrt.pop %v744
        %v833 = vmul.f32 %v832, %v744
        %v834 = vmul.f32 %v833, %v832
        %v835 = vmul.f32 0.5, %v834
        %v836 = vsub.f32 1.5, %v835
        %v837 = vmul.f32 %v832, %v836
        %vm838 = vweird.f32 %v744
        %vm839 = vweird.f32 %v832
        %vm840 = vmor %vm838, %vm839
        %v841 = vsel %vm840, %v832, %v837
        %v842 = vrsqrt.pop %v745
        %v843 = vmul.f32 %v842, %v745
        %v844 = vmul.f32 %v843, %v842
        %v845 = vmul.f32 0.5, %v844
        %v846 = vsub.f32 1.5, %v845
        %v847 = vmul.f32 %v842, %v846
        %vm848 = vweird.f32 %v745
        %vm849 = vweird.f32 %v842
        %vm850 = vmor %vm848, %vm849
        %v851 = vsel %vm850, %v842, %v847
        %v852 = vrsqrt.pop %v746
        %v853 = vmul.f32 %v852, %v746
        %v854 = vmul.f32 %v853, %v852
        %v855 = vmul.f32 0.5, %v854
        %v856 = vsub.f32 1.5, %v855
        %v857 = vmul.f32 %v852, %v856
        %vm858 = vweird.f32 %v746
        %vm859 = vweird.f32 %v852
        %vm860 = vmor %vm858, %vm859
        %v861 = vsel %vm860, %v852, %v857
        %v862 = vrsqrt.pop %v747
        %v863 = vmul.f32 %v862, %v747
        %v864 = vmul.f32 %v863, %v862
        %v865 = vmul.f32 0.5, %v864
        %v866 = vsub.f32 1.5, %v865
        %v867 = vmul.f32 %v862, %v866
        %vm868 = vweird.f32 %v747
        %vm869 = vweird.f32 %v862
        %vm870 = vmor %vm868, %vm869
        %v871 = vsel %vm870, %v862, %v867
        %v872 = vrsqrt.pop %v748
        %v873 = vmul.f32 %v872, %v748
        %v874 = vmul.f32 %v873, %v872
        %v875 = vmul.f32 0.5, %v874
        %v876 = vsub.f32 1.5, %v875
        %v877 = vmul.f32 %v872, %v876
        %vm878 = vweird.f32 %v748
        %vm879 = vweird.f32 %v872
        %vm880 = vmor %vm878, %vm879
        %v881 = vsel %vm880, %v872, %v877
        %v882 = vrsqrt.pop %v749
        %v883 = vmul.f32 %v882, %v749
        %v884 = vmul.f32 %v883, %v882
        %v885 = vmul.f32 0.5, %v884
        %v886 = vsub.f32 1.5, %v885
        %v887 = vmul.f32 %v882, %v886
        %vm888 = vweird.f32 %v749
        %vm889 = vweird.f32 %v882
        %vm890 = vmor %vm888, %vm889
        %v891 = vsel %vm890, %v882, %v887
        %v892 = vrsqrt.pop %v750
        %v893 = vmul.f32 %v892, %v750
        %v894 = vmul.f32 %v893, %v892
        %v895 = vmul.f32 0.5, %v894
        %v896 = vsub.f32 1.5, %v895
        %v897 = vmul.f32 %v892, %v896
        %vm898 = vweird.f32 %v750
        %vm899 = vweird.f32 %v892
        %vm900 = vmor %vm898, %vm899
        %v901 = vsel %vm900, %v892, %v897
        %v902 = vrsqrt.pop %v751
        %v903 = vmul.f32 %v902, %v751
        %v904 = vmul.f32 %v903, %v902
        %v905 = vmul.f32 0.5, %v904
        %v906 = vsub.f32 1.5, %v905
        %v907 = vmul.f32 %v902, %v906
        %vm908 = vweird.f32 %v751
        %vm909 = vweird.f32 %v902
        %vm910 = vmor %vm908, %vm909
        %v911 = vsel %vm910, %v902, %v907
        %v912 = vmul.f32 %v656, %v761
        %v913 = vmul.f32 %v657, %v771
        %v914 = vmul.f32 %v658, %v781
        %v915 = vmul.f32 %v659, %v791
        %v916 = vmul.f32 %v660, %v801
        %v917 = vmul.f32 %v661, %v811
        %v918 = vmul.f32 %v662, %v821
        %v919 = vmul.f32 %v663, %v831
        %v920 = vmul.f32 %v664, %v841
        %v921 = vmul.f32 %v665, %v851
        %v922 = vmul.f32 %v666, %v861
        %v923 = vmul.f32 %v667, %v871
        %v924 = vmul.f32 %v668, %v881
        %v925 = vmul.f32 %v669, %v891
        %v926 = vmul.f32 %v670, %v901
        %v927 = vmul.f32 %v671, %v911
        %v928 = vperm.slane %v583, 0
        %v929 = vmul.f32 %v912, %v928
        %v930 = vmul.f32 %v913, %v928
        %v931 = vmul.f32 %v914, %v928
        %v932 = vmul.f32 %v915, %v928
        %v933 = vmul.f32 %v916, %v928
        %v934 = vmul.f32 %v917, %v928
        %v935 = vmul.f32 %v918, %v928
        %v936 = vmul.f32 %v919, %v928
        %v937 = vmul.f32 %v920, %v928
        %v938 = vmul.f32 %v921, %v928
        %v939 = vmul.f32 %v922, %v928
        %v940 = vmul.f32 %v923, %v928
        %v941 = vmul.f32 %v924, %v928
        %v942 = vmul.f32 %v925, %v928
        %v943 = vmul.f32 %v926, %v928
        %v944 = vmul.f32 %v927, %v928
        %v945 = vperm.slane %v584, 0
        %v946 = vadd.f32 %v929, %v945
        %v947 = vadd.f32 %v930, %v945
        %v948 = vadd.f32 %v931, %v945
        %v949 = vadd.f32 %v932, %v945
        %v950 = vadd.f32 %v933, %v945
        %v951 = vadd.f32 %v934, %v945
        %v952 = vadd.f32 %v935, %v945
        %v953 = vadd.f32 %v936, %v945
        %v954 = vadd.f32 %v937, %v945
        %v955 = vadd.f32 %v938, %v945
        %v956 = vadd.f32 %v939, %v945
        %v957 = vadd.f32 %v940, %v945
        %v958 = vadd.f32 %v941, %v945
        %v959 = vadd.f32 %v942, %v945
        %v960 = vadd.f32 %v943, %v945
        %v961 = vadd.f32 %v944, %v945
        %v962 = vmax.f32 %v946, 0.0
        %v963 = vmax.f32 %v947, 0.0
        %v964 = vmax.f32 %v948, 0.0
        %v965 = vmax.f32 %v949, 0.0
        %v966 = vmax.f32 %v950, 0.0
        %v967 = vmax.f32 %v951, 0.0
        %v968 = vmax.f32 %v952, 0.0
        %v969 = vmax.f32 %v953, 0.0
        %v970 = vmax.f32 %v954, 0.0
        %v971 = vmax.f32 %v955, 0.0
        %v972 = vmax.f32 %v956, 0.0
        %v973 = vmax.f32 %v957, 0.0
        %v974 = vmax.f32 %v958, 0.0
        %v975 = vmax.f32 %v959, 0.0
        %v976 = vmax.f32 %v960, 0.0
        %v977 = vmax.f32 %v961, 0.0
        %v978 = vpack.c.bf16 %v962, %v962
        %v979 = vpack.c.bf16 %v963, %v963
        %v980 = vpack.c.bf16 %v964, %v964
        %v981 = vpack.c.bf16 %v965, %v965
        %v982 = vpack.c.bf16 %v966, %v966
        %v983 = vpack.c.bf16 %v967, %v967
        %v984 = vpack.c.bf16 %v968, %v968
        %v985 = vpack.c.bf16 %v969, %v969
        %v986 = vpack.c.bf16 %v970, %v970
        %v987 = vpack.c.bf16 %v971, %v971
        %v988 = vpack.c.bf16 %v972, %v972
        %v989 = vpack.c.bf16 %v973, %v973
        %v990 = vpack.c.bf16 %v974, %v974
        %v991 = vpack.c.bf16 %v975, %v975
        %v992 = vpack.c.bf16 %v976, %v976
        %v993 = vpack.c.bf16 %v977, %v977
        %v994 = vld [vmem:[%s3 + $0x1] sm:$0x1]
        %v995 = vld [vmem:[#allocation9 + $0x1] sm:$0x1]
        %v996 = vld [vmem:[%s489] sm:$0xff]
        %v997 = vld [vmem:[%s489 + $0x8] sm:$0xff]
        %v998 = vld [vmem:[%s489 + $0x10] sm:$0xff]
        %v999 = vld [vmem:[%s489 + $0x18] sm:$0xff]
        %v1000 = vld [vmem:[%s489 + $0x20] sm:$0xff]
        %v1001 = vld [vmem:[%s489 + $0x28] sm:$0xff]
        %v1002 = vld [vmem:[%s489 + $0x30] sm:$0xff]
        %v1003 = vld [vmem:[%s489 + $0x38] sm:$0xff]
        %v1004 = vld [vmem:[%s489 + $0x40] sm:$0xff]
        %v1005 = vld [vmem:[%s489 + $0x48] sm:$0xff]
        %v1006 = vld [vmem:[%s489 + $0x50] sm:$0xff]
        %v1007 = vld [vmem:[%s489 + $0x58] sm:$0xff]
        %v1008 = vld [vmem:[%s489 + $0x60] sm:$0xff]
        %v1009 = vld [vmem:[%s489 + $0x68] sm:$0xff]
        %v1010 = vld [vmem:[%s489 + $0x70] sm:$0xff]
        %v1011 = vld [vmem:[%s489 + $0x78] sm:$0xff]
        %1012 = vadd.xlane.f32.xlu0 %v996
        %v1013 = vpop.xlane.xlu0 %1012
        %1014 = vadd.xlane.f32.xlu0 %v997
        %v1015 = vpop.xlane.xlu0 %1014
        %1016 = vadd.xlane.f32.xlu0 %v998
        %v1017 = vpop.xlane.xlu0 %1016
        %1018 = vadd.xlane.f32.xlu0 %v999
        %v1019 = vpop.xlane.xlu0 %1018
        %1020 = vadd.xlane.f32.xlu0 %v1000
        %v1021 = vpop.xlane.xlu0 %1020
        %1022 = vadd.xlane.f32.xlu0 %v1001
        %v1023 = vpop.xlane.xlu0 %1022
        %1024 = vadd.xlane.f32.xlu0 %v1002
        %v1025 = vpop.xlane.xlu0 %1024
        %1026 = vadd.xlane.f32.xlu0 %v1003
        %v1027 = vpop.xlane.xlu0 %1026
        %1028 = vadd.xlane.f32.xlu0 %v1004
        %v1029 = vpop.xlane.xlu0 %1028
        %1030 = vadd.xlane.f32.xlu0 %v1005
        %v1031 = vpop.xlane.xlu0 %1030
        %1032 = vadd.xlane.f32.xlu0 %v1006
        %v1033 = vpop.xlane.xlu0 %1032
        %1034 = vadd.xlane.f32.xlu0 %v1007
        %v1035 = vpop.xlane.xlu0 %1034
        %1036 = vadd.xlane.f32.xlu0 %v1008
        %v1037 = vpop.xlane.xlu0 %1036
        %1038 = vadd.xlane.f32.xlu0 %v1009
        %v1039 = vpop.xlane.xlu0 %1038
        %1040 = vadd.xlane.f32.xlu0 %v1010
        %v1041 = vpop.xlane.xlu0 %1040
        %1042 = vadd.xlane.f32.xlu0 %v1011
        %v1043 = vpop.xlane.xlu0 %1042
        %v1044 = vmul.f32 %v1013, %v639
        %v1045 = vmul.f32 %v1015, %v639
        %v1046 = vmul.f32 %v1017, %v639
        %v1047 = vmul.f32 %v1019, %v639
        %v1048 = vmul.f32 %v1021, %v639
        %v1049 = vmul.f32 %v1023, %v639
        %v1050 = vmul.f32 %v1025, %v639
        %v1051 = vmul.f32 %v1027, %v639
        %v1052 = vmul.f32 %v1029, %v639
        %v1053 = vmul.f32 %v1031, %v639
        %v1054 = vmul.f32 %v1033, %v639
        %v1055 = vmul.f32 %v1035, %v639
        %v1056 = vmul.f32 %v1037, %v639
        %v1057 = vmul.f32 %v1039, %v639
        %v1058 = vmul.f32 %v1041, %v639
        %v1059 = vmul.f32 %v1043, %v639
        %v1060 = vsub.f32 %v996, %v1044
        %v1061 = vsub.f32 %v997, %v1045
        %v1062 = vsub.f32 %v998, %v1046
        %v1063 = vsub.f32 %v999, %v1047
        %v1064 = vsub.f32 %v1000, %v1048
        %v1065 = vsub.f32 %v1001, %v1049
        %v1066 = vsub.f32 %v1002, %v1050
        %v1067 = vsub.f32 %v1003, %v1051
        %v1068 = vsub.f32 %v1004, %v1052
        %v1069 = vsub.f32 %v1005, %v1053
        %v1070 = vsub.f32 %v1006, %v1054
        %v1071 = vsub.f32 %v1007, %v1055
        %v1072 = vsub.f32 %v1008, %v1056
        %v1073 = vsub.f32 %v1009, %v1057
        %v1074 = vsub.f32 %v1010, %v1058
        %v1075 = vsub.f32 %v1011, %v1059
        %v1076 = vmul.f32 %v1060, %v1060
        %v1077 = vmul.f32 %v1061, %v1061
        %v1078 = vmul.f32 %v1062, %v1062
        %v1079 = vmul.f32 %v1063, %v1063
        %v1080 = vmul.f32 %v1064, %v1064
        %v1081 = vmul.f32 %v1065, %v1065
        %v1082 = vmul.f32 %v1066, %v1066
        %v1083 = vmul.f32 %v1067, %v1067
        %v1084 = vmul.f32 %v1068, %v1068
        %v1085 = vmul.f32 %v1069, %v1069
        %v1086 = vmul.f32 %v1070, %v1070
        %v1087 = vmul.f32 %v1071, %v1071
        %v1088 = vmul.f32 %v1072, %v1072
        %v1089 = vmul.f32 %v1073, %v1073
        %v1090 = vmul.f32 %v1074, %v1074
        %v1091 = vmul.f32 %v1075, %v1075
        %1092 = vadd.xlane.f32.xlu0 %v1076
        %v1093 = vpop.xlane.xlu0 %1092
        %1094 = vadd.xlane.f32.xlu0 %v1077
        %v1095 = vpop.xlane.xlu0 %1094
        %1096 = vadd.xlane.f32.xlu0 %v1078
        %v1097 = vpop.xlane.xlu0 %1096
        %1098 = vadd.xlane.f32.xlu0 %v1079
        %v1099 = vpop.xlane.xlu0 %1098
        %1100 = vadd.xlane.f32.xlu0 %v1080
        %v1101 = vpop.xlane.xlu0 %1100
        %1102 = vadd.xlane.f32.xlu0 %v1081
        %v1103 = vpop.xlane.xlu0 %1102
        %1104 = vadd.xlane.f32.xlu0 %v1082
        %v1105 = vpop.xlane.xlu0 %1104
        %1106 = vadd.xlane.f32.xlu0 %v1083
        %v1107 = vpop.xlane.xlu0 %1106
        %1108 = vadd.xlane.f32.xlu0 %v1084
        %v1109 = vpop.xlane.xlu0 %1108
        %1110 = vadd.xlane.f32.xlu0 %v1085
        %v1111 = vpop.xlane.xlu0 %1110
        %1112 = vadd.xlane.f32.xlu0 %v1086
        %v1113 = vpop.xlane.xlu0 %1112
        %1114 = vadd.xlane.f32.xlu0 %v1087
        %v1115 = vpop.xlane.xlu0 %1114
        %1116 = vadd.xlane.f32.xlu0 %v1088
        %v1117 = vpop.xlane.xlu0 %1116
        %1118 = vadd.xlane.f32.xlu0 %v1089
        %v1119 = vpop.xlane.xlu0 %1118
        %1120 = vadd.xlane.f32.xlu0 %v1090
        %v1121 = vpop.xlane.xlu0 %1120
        %1122 = vadd.xlane.f32.xlu0 %v1091
        %v1123 = vpop.xlane.xlu0 %1122
        %v1124 = vmul.f32 %v1093, %v639
        %v1125 = vmul.f32 %v1095, %v639
        %v1126 = vmul.f32 %v1097, %v639
        %v1127 = vmul.f32 %v1099, %v639
        %v1128 = vmul.f32 %v1101, %v639
        %v1129 = vmul.f32 %v1103, %v639
        %v1130 = vmul.f32 %v1105, %v639
        %v1131 = vmul.f32 %v1107, %v639
        %v1132 = vmul.f32 %v1109, %v639
        %v1133 = vmul.f32 %v1111, %v639
        %v1134 = vmul.f32 %v1113, %v639
        %v1135 = vmul.f32 %v1115, %v639
        %v1136 = vmul.f32 %v1117, %v639
        %v1137 = vmul.f32 %v1119, %v639
        %v1138 = vmul.f32 %v1121, %v639
        %v1139 = vmul.f32 %v1123, %v639
        %v1140 = vadd.f32 %v1124, 1e-05
        %v1141 = vadd.f32 %v1125, 1e-05
        %v1142 = vadd.f32 %v1126, 1e-05
        %v1143 = vadd.f32 %v1127, 1e-05
        %v1144 = vadd.f32 %v1128, 1e-05
        %v1145 = vadd.f32 %v1129, 1e-05
        %v1146 = vadd.f32 %v1130, 1e-05
        %v1147 = vadd.f32 %v1131, 1e-05
        %v1148 = vadd.f32 %v1132, 1e-05
        %v1149 = vadd.f32 %v1133, 1e-05
        %v1150 = vadd.f32 %v1134, 1e-05
        %v1151 = vadd.f32 %v1135, 1e-05
        %v1152 = vadd.f32 %v1136, 1e-05
        %v1153 = vadd.f32 %v1137, 1e-05
        %v1154 = vadd.f32 %v1138, 1e-05
        %v1155 = vadd.f32 %v1139, 1e-05
        %v1156 = vrsqrt.pop %v1140
        %v1157 = vmul.f32 %v1156, %v1140
        %v1158 = vmul.f32 %v1157, %v1156
        %v1159 = vmul.f32 0.5, %v1158
        %v1160 = vsub.f32 1.5, %v1159
        %v1161 = vmul.f32 %v1156, %v1160
        %vm1162 = vweird.f32 %v1140
        %vm1163 = vweird.f32 %v1156
        %vm1164 = vmor %vm1162, %vm1163
        %v1165 = vsel %vm1164, %v1156, %v1161
        %v1166 = vrsqrt.pop %v1141
        %v1167 = vmul.f32 %v1166, %v1141
        %v1168 = vmul.f32 %v1167, %v1166
        %v1169 = vmul.f32 0.5, %v1168
        %v1170 = vsub.f32 1.5, %v1169
        %v1171 = vmul.f32 %v1166, %v1170
        %vm1172 = vweird.f32 %v1141
        %vm1173 = vweird.f32 %v1166
        %vm1174 = vmor %vm1172, %vm1173
        %v1175 = vsel %vm1174, %v1166, %v1171
        %v1176 = vrsqrt.pop %v1142
        %v1177 = vmul.f32 %v1176, %v1142
        %v1178 = vmul.f32 %v1177, %v1176
        %v1179 = vmul.f32 0.5, %v1178
        %v1180 = vsub.f32 1.5, %v1179
        %v1181 = vmul.f32 %v1176, %v1180
        %vm1182 = vweird.f32 %v1142
        %vm1183 = vweird.f32 %v1176
        %vm1184 = vmor %vm1182, %vm1183
        %v1185 = vsel %vm1184, %v1176, %v1181
        %v1186 = vrsqrt.pop %v1143
        %v1187 = vmul.f32 %v1186, %v1143
        %v1188 = vmul.f32 %v1187, %v1186
        %v1189 = vmul.f32 0.5, %v1188
        %v1190 = vsub.f32 1.5, %v1189
        %v1191 = vmul.f32 %v1186, %v1190
        %vm1192 = vweird.f32 %v1143
        %vm1193 = vweird.f32 %v1186
        %vm1194 = vmor %vm1192, %vm1193
        %v1195 = vsel %vm1194, %v1186, %v1191
        %v1196 = vrsqrt.pop %v1144
        %v1197 = vmul.f32 %v1196, %v1144
        %v1198 = vmul.f32 %v1197, %v1196
        %v1199 = vmul.f32 0.5, %v1198
        %v1200 = vsub.f32 1.5, %v1199
        %v1201 = vmul.f32 %v1196, %v1200
        %vm1202 = vweird.f32 %v1144
        %vm1203 = vweird.f32 %v1196
        %vm1204 = vmor %vm1202, %vm1203
        %v1205 = vsel %vm1204, %v1196, %v1201
        %v1206 = vrsqrt.pop %v1145
        %v1207 = vmul.f32 %v1206, %v1145
        %v1208 = vmul.f32 %v1207, %v1206
        %v1209 = vmul.f32 0.5, %v1208
        %v1210 = vsub.f32 1.5, %v1209
        %v1211 = vmul.f32 %v1206, %v1210
        %vm1212 = vweird.f32 %v1145
        %vm1213 = vweird.f32 %v1206
        %vm1214 = vmor %vm1212, %vm1213
        %v1215 = vsel %vm1214, %v1206, %v1211
        %v1216 = vrsqrt.pop %v1146
        %v1217 = vmul.f32 %v1216, %v1146
        %v1218 = vmul.f32 %v1217, %v1216
        %v1219 = vmul.f32 0.5, %v1218
        %v1220 = vsub.f32 1.5, %v1219
        %v1221 = vmul.f32 %v1216, %v1220
        %vm1222 = vweird.f32 %v1146
        %vm1223 = vweird.f32 %v1216
        %vm1224 = vmor %vm1222, %vm1223
        %v1225 = vsel %vm1224, %v1216, %v1221
        %v1226 = vrsqrt.pop %v1147
        %v1227 = vmul.f32 %v1226, %v1147
        %v1228 = vmul.f32 %v1227, %v1226
        %v1229 = vmul.f32 0.5, %v1228
        %v1230 = vsub.f32 1.5, %v1229
        %v1231 = vmul.f32 %v1226, %v1230
        %vm1232 = vweird.f32 %v1147
        %vm1233 = vweird.f32 %v1226
        %vm1234 = vmor %vm1232, %vm1233
        %v1235 = vsel %vm1234, %v1226, %v1231
        %v1236 = vrsqrt.pop %v1148
        %v1237 = vmul.f32 %v1236, %v1148
        %v1238 = vmul.f32 %v1237, %v1236
        %v1239 = vmul.f32 0.5, %v1238
        %v1240 = vsub.f32 1.5, %v1239
        %v1241 = vmul.f32 %v1236, %v1240
        %vm1242 = vweird.f32 %v1148
        %vm1243 = vweird.f32 %v1236
        %vm1244 = vmor %vm1242, %vm1243
        %v1245 = vsel %vm1244, %v1236, %v1241
        %v1246 = vrsqrt.pop %v1149
        %v1247 = vmul.f32 %v1246, %v1149
        %v1248 = vmul.f32 %v1247, %v1246
        %v1249 = vmul.f32 0.5, %v1248
        %v1250 = vsub.f32 1.5, %v1249
        %v1251 = vmul.f32 %v1246, %v1250
        %vm1252 = vweird.f32 %v1149
        %vm1253 = vweird.f32 %v1246
        %vm1254 = vmor %vm1252, %vm1253
        %v1255 = vsel %vm1254, %v1246, %v1251
        %v1256 = vrsqrt.pop %v1150
        %v1257 = vmul.f32 %v1256, %v1150
        %v1258 = vmul.f32 %v1257, %v1256
        %v1259 = vmul.f32 0.5, %v1258
        %v1260 = vsub.f32 1.5, %v1259
        %v1261 = vmul.f32 %v1256, %v1260
        %vm1262 = vweird.f32 %v1150
        %vm1263 = vweird.f32 %v1256
        %vm1264 = vmor %vm1262, %vm1263
        %v1265 = vsel %vm1264, %v1256, %v1261
        %v1266 = vrsqrt.pop %v1151
        %v1267 = vmul.f32 %v1266, %v1151
        %v1268 = vmul.f32 %v1267, %v1266
        %v1269 = vmul.f32 0.5, %v1268
        %v1270 = vsub.f32 1.5, %v1269
        %v1271 = vmul.f32 %v1266, %v1270
        %vm1272 = vweird.f32 %v1151
        %vm1273 = vweird.f32 %v1266
        %vm1274 = vmor %vm1272, %vm1273
        %v1275 = vsel %vm1274, %v1266, %v1271
        %v1276 = vrsqrt.pop %v1152
        %v1277 = vmul.f32 %v1276, %v1152
        %v1278 = vmul.f32 %v1277, %v1276
        %v1279 = vmul.f32 0.5, %v1278
        %v1280 = vsub.f32 1.5, %v1279
        %v1281 = vmul.f32 %v1276, %v1280
        %vm1282 = vweird.f32 %v1152
        %vm1283 = vweird.f32 %v1276
        %vm1284 = vmor %vm1282, %vm1283
        %v1285 = vsel %vm1284, %v1276, %v1281
        %v1286 = vrsqrt.pop %v1153
        %v1287 = vmul.f32 %v1286, %v1153
        %v1288 = vmul.f32 %v1287, %v1286
        %v1289 = vmul.f32 0.5, %v1288
        %v1290 = vsub.f32 1.5, %v1289
        %v1291 = vmul.f32 %v1286, %v1290
        %vm1292 = vweird.f32 %v1153
        %vm1293 = vweird.f32 %v1286
        %vm1294 = vmor %vm1292, %vm1293
        %v1295 = vsel %vm1294, %v1286, %v1291
        %v1296 = vrsqrt.pop %v1154
        %v1297 = vmul.f32 %v1296, %v1154
        %v1298 = vmul.f32 %v1297, %v1296
        %v1299 = vmul.f32 0.5, %v1298
        %v1300 = vsub.f32 1.5, %v1299
        %v1301 = vmul.f32 %v1296, %v1300
        %vm1302 = vweird.f32 %v1154
        %vm1303 = vweird.f32 %v1296
        %vm1304 = vmor %vm1302, %vm1303
        %v1305 = vsel %vm1304, %v1296, %v1301
        %v1306 = vrsqrt.pop %v1155
        %v1307 = vmul.f32 %v1306, %v1155
        %v1308 = vmul.f32 %v1307, %v1306
        %v1309 = vmul.f32 0.5, %v1308
        %v1310 = vsub.f32 1.5, %v1309
        %v1311 = vmul.f32 %v1306, %v1310
        %vm1312 = vweird.f32 %v1155
        %vm1313 = vweird.f32 %v1306
        %vm1314 = vmor %vm1312, %vm1313
        %v1315 = vsel %vm1314, %v1306, %v1311
        %v1316 = vmul.f32 %v1060, %v1165
        %v1317 = vmul.f32 %v1061, %v1175
        %v1318 = vmul.f32 %v1062, %v1185
        %v1319 = vmul.f32 %v1063, %v1195
        %v1320 = vmul.f32 %v1064, %v1205
        %v1321 = vmul.f32 %v1065, %v1215
        %v1322 = vmul.f32 %v1066, %v1225
        %v1323 = vmul.f32 %v1067, %v1235
        %v1324 = vmul.f32 %v1068, %v1245
        %v1325 = vmul.f32 %v1069, %v1255
        %v1326 = vmul.f32 %v1070, %v1265
        %v1327 = vmul.f32 %v1071, %v1275
        %v1328 = vmul.f32 %v1072, %v1285
        %v1329 = vmul.f32 %v1073, %v1295
        %v1330 = vmul.f32 %v1074, %v1305
        %v1331 = vmul.f32 %v1075, %v1315
        %v1332 = vperm.slane %v994, 0
        %v1333 = vmul.f32 %v1316, %v1332
        %v1334 = vmul.f32 %v1317, %v1332
        %v1335 = vmul.f32 %v1318, %v1332
        %v1336 = vmul.f32 %v1319, %v1332
        %v1337 = vmul.f32 %v1320, %v1332
        %v1338 = vmul.f32 %v1321, %v1332
        %v1339 = vmul.f32 %v1322, %v1332
        %v1340 = vmul.f32 %v1323, %v1332
        %v1341 = vmul.f32 %v1324, %v1332
        %v1342 = vmul.f32 %v1325, %v1332
        %v1343 = vmul.f32 %v1326, %v1332
        %v1344 = vmul.f32 %v1327, %v1332
        %v1345 = vmul.f32 %v1328, %v1332
        %v1346 = vmul.f32 %v1329, %v1332
        %v1347 = vmul.f32 %v1330, %v1332
        %v1348 = vmul.f32 %v1331, %v1332
        %v1349 = vperm.slane %v995, 0
        %v1350 = vadd.f32 %v1333, %v1349
        %v1351 = vadd.f32 %v1334, %v1349
        %v1352 = vadd.f32 %v1335, %v1349
        %v1353 = vadd.f32 %v1336, %v1349
        %v1354 = vadd.f32 %v1337, %v1349
        %v1355 = vadd.f32 %v1338, %v1349
        %v1356 = vadd.f32 %v1339, %v1349
        %v1357 = vadd.f32 %v1340, %v1349
        %v1358 = vadd.f32 %v1341, %v1349
        %v1359 = vadd.f32 %v1342, %v1349
        %v1360 = vadd.f32 %v1343, %v1349
        %v1361 = vadd.f32 %v1344, %v1349
        %v1362 = vadd.f32 %v1345, %v1349
        %v1363 = vadd.f32 %v1346, %v1349
        %v1364 = vadd.f32 %v1347, %v1349
        %v1365 = vadd.f32 %v1348, %v1349
        %v1366 = vmax.f32 %v1350, 0.0
        %v1367 = vmax.f32 %v1351, 0.0
        %v1368 = vmax.f32 %v1352, 0.0
        %v1369 = vmax.f32 %v1353, 0.0
        %v1370 = vmax.f32 %v1354, 0.0
        %v1371 = vmax.f32 %v1355, 0.0
        %v1372 = vmax.f32 %v1356, 0.0
        %v1373 = vmax.f32 %v1357, 0.0
        %v1374 = vmax.f32 %v1358, 0.0
        %v1375 = vmax.f32 %v1359, 0.0
        %v1376 = vmax.f32 %v1360, 0.0
        %v1377 = vmax.f32 %v1361, 0.0
        %v1378 = vmax.f32 %v1362, 0.0
        %v1379 = vmax.f32 %v1363, 0.0
        %v1380 = vmax.f32 %v1364, 0.0
        %v1381 = vmax.f32 %v1365, 0.0
        %v1382 = vpack.c.bf16 %v1366, %v1366
        %v1383 = vpack.c.bf16 %v1367, %v1367
        %v1384 = vpack.c.bf16 %v1368, %v1368
        %v1385 = vpack.c.bf16 %v1369, %v1369
        %v1386 = vpack.c.bf16 %v1370, %v1370
        %v1387 = vpack.c.bf16 %v1371, %v1371
        %v1388 = vpack.c.bf16 %v1372, %v1372
        %v1389 = vpack.c.bf16 %v1373, %v1373
        %v1390 = vpack.c.bf16 %v1374, %v1374
        %v1391 = vpack.c.bf16 %v1375, %v1375
        %v1392 = vpack.c.bf16 %v1376, %v1376
        %v1393 = vpack.c.bf16 %v1377, %v1377
        %v1394 = vpack.c.bf16 %v1378, %v1378
        %v1395 = vpack.c.bf16 %v1379, %v1379
        %v1396 = vpack.c.bf16 %v1380, %v1380
        %v1397 = vpack.c.bf16 %v1381, %v1381
        %v1398 = vld [vmem:[%s3 + $0x2] sm:$0x1]
        %v1399 = vld [vmem:[#allocation9 + $0x2] sm:$0x1]
        %v1400 = vld [vmem:[%s499] sm:$0xff]
        %v1401 = vld [vmem:[%s499 + $0x8] sm:$0xff]
        %v1402 = vld [vmem:[%s499 + $0x10] sm:$0xff]
        %v1403 = vld [vmem:[%s499 + $0x18] sm:$0xff]
        %v1404 = vld [vmem:[%s499 + $0x20] sm:$0xff]
        %v1405 = vld [vmem:[%s499 + $0x28] sm:$0xff]
        %v1406 = vld [vmem:[%s499 + $0x30] sm:$0xff]
        %v1407 = vld [vmem:[%s499 + $0x38] sm:$0xff]
        %v1408 = vld [vmem:[%s499 + $0x40] sm:$0xff]
        %v1409 = vld [vmem:[%s499 + $0x48] sm:$0xff]
        %v1410 = vld [vmem:[%s499 + $0x50] sm:$0xff]
        %v1411 = vld [vmem:[%s499 + $0x58] sm:$0xff]
        %v1412 = vld [vmem:[%s499 + $0x60] sm:$0xff]
        %v1413 = vld [vmem:[%s499 + $0x68] sm:$0xff]
        %v1414 = vld [vmem:[%s499 + $0x70] sm:$0xff]
        %v1415 = vld [vmem:[%s499 + $0x78] sm:$0xff]
        %1416 = vadd.xlane.f32.xlu0 %v1400
        %v1417 = vpop.xlane.xlu0 %1416
        %1418 = vadd.xlane.f32.xlu0 %v1401
        %v1419 = vpop.xlane.xlu0 %1418
        %1420 = vadd.xlane.f32.xlu0 %v1402
        %v1421 = vpop.xlane.xlu0 %1420
        %1422 = vadd.xlane.f32.xlu0 %v1403
        %v1423 = vpop.xlane.xlu0 %1422
        %1424 = vadd.xlane.f32.xlu0 %v1404
        %v1425 = vpop.xlane.xlu0 %1424
        %1426 = vadd.xlane.f32.xlu0 %v1405
        %v1427 = vpop.xlane.xlu0 %1426
        %1428 = vadd.xlane.f32.xlu0 %v1406
        %v1429 = vpop.xlane.xlu0 %1428
        %1430 = vadd.xlane.f32.xlu0 %v1407
        %v1431 = vpop.xlane.xlu0 %1430
        %1432 = vadd.xlane.f32.xlu0 %v1408
        %v1433 = vpop.xlane.xlu0 %1432
        %1434 = vadd.xlane.f32.xlu0 %v1409
        %v1435 = vpop.xlane.xlu0 %1434
        %1436 = vadd.xlane.f32.xlu0 %v1410
        %v1437 = vpop.xlane.xlu0 %1436
        %1438 = vadd.xlane.f32.xlu0 %v1411
        %v1439 = vpop.xlane.xlu0 %1438
        %1440 = vadd.xlane.f32.xlu0 %v1412
        %v1441 = vpop.xlane.xlu0 %1440
        %1442 = vadd.xlane.f32.xlu0 %v1413
        %v1443 = vpop.xlane.xlu0 %1442
        %1444 = vadd.xlane.f32.xlu0 %v1414
        %v1445 = vpop.xlane.xlu0 %1444
        %1446 = vadd.xlane.f32.xlu0 %v1415
        %v1447 = vpop.xlane.xlu0 %1446
        %v1448 = vmul.f32 %v1417, %v639
        %v1449 = vmul.f32 %v1419, %v639
        %v1450 = vmul.f32 %v1421, %v639
        %v1451 = vmul.f32 %v1423, %v639
        %v1452 = vmul.f32 %v1425, %v639
        %v1453 = vmul.f32 %v1427, %v639
        %v1454 = vmul.f32 %v1429, %v639
        %v1455 = vmul.f32 %v1431, %v639
        %v1456 = vmul.f32 %v1433, %v639
        %v1457 = vmul.f32 %v1435, %v639
        %v1458 = vmul.f32 %v1437, %v639
        %v1459 = vmul.f32 %v1439, %v639
        %v1460 = vmul.f32 %v1441, %v639
        %v1461 = vmul.f32 %v1443, %v639
        %v1462 = vmul.f32 %v1445, %v639
        %v1463 = vmul.f32 %v1447, %v639
        %v1464 = vsub.f32 %v1400, %v1448
        %v1465 = vsub.f32 %v1401, %v1449
        %v1466 = vsub.f32 %v1402, %v1450
        %v1467 = vsub.f32 %v1403, %v1451
        %v1468 = vsub.f32 %v1404, %v1452
        %v1469 = vsub.f32 %v1405, %v1453
        %v1470 = vsub.f32 %v1406, %v1454
        %v1471 = vsub.f32 %v1407, %v1455
        %v1472 = vsub.f32 %v1408, %v1456
        %v1473 = vsub.f32 %v1409, %v1457
        %v1474 = vsub.f32 %v1410, %v1458
        %v1475 = vsub.f32 %v1411, %v1459
        %v1476 = vsub.f32 %v1412, %v1460
        %v1477 = vsub.f32 %v1413, %v1461
        %v1478 = vsub.f32 %v1414, %v1462
        %v1479 = vsub.f32 %v1415, %v1463
        %v1480 = vmul.f32 %v1464, %v1464
        %v1481 = vmul.f32 %v1465, %v1465
        %v1482 = vmul.f32 %v1466, %v1466
        %v1483 = vmul.f32 %v1467, %v1467
        %v1484 = vmul.f32 %v1468, %v1468
        %v1485 = vmul.f32 %v1469, %v1469
        %v1486 = vmul.f32 %v1470, %v1470
        %v1487 = vmul.f32 %v1471, %v1471
        %v1488 = vmul.f32 %v1472, %v1472
        %v1489 = vmul.f32 %v1473, %v1473
        %v1490 = vmul.f32 %v1474, %v1474
        %v1491 = vmul.f32 %v1475, %v1475
        %v1492 = vmul.f32 %v1476, %v1476
        %v1493 = vmul.f32 %v1477, %v1477
        %v1494 = vmul.f32 %v1478, %v1478
        %v1495 = vmul.f32 %v1479, %v1479
        %1496 = vadd.xlane.f32.xlu0 %v1480
        %v1497 = vpop.xlane.xlu0 %1496
        %1498 = vadd.xlane.f32.xlu0 %v1481
        %v1499 = vpop.xlane.xlu0 %1498
        %1500 = vadd.xlane.f32.xlu0 %v1482
        %v1501 = vpop.xlane.xlu0 %1500
        %1502 = vadd.xlane.f32.xlu0 %v1483
        %v1503 = vpop.xlane.xlu0 %1502
        %1504 = vadd.xlane.f32.xlu0 %v1484
        %v1505 = vpop.xlane.xlu0 %1504
        %1506 = vadd.xlane.f32.xlu0 %v1485
        %v1507 = vpop.xlane.xlu0 %1506
        %1508 = vadd.xlane.f32.xlu0 %v1486
        %v1509 = vpop.xlane.xlu0 %1508
        %1510 = vadd.xlane.f32.xlu0 %v1487
        %v1511 = vpop.xlane.xlu0 %1510
        %1512 = vadd.xlane.f32.xlu0 %v1488
        %v1513 = vpop.xlane.xlu0 %1512
        %1514 = vadd.xlane.f32.xlu0 %v1489
        %v1515 = vpop.xlane.xlu0 %1514
        %1516 = vadd.xlane.f32.xlu0 %v1490
        %v1517 = vpop.xlane.xlu0 %1516
        %1518 = vadd.xlane.f32.xlu0 %v1491
        %v1519 = vpop.xlane.xlu0 %1518
        %1520 = vadd.xlane.f32.xlu0 %v1492
        %v1521 = vpop.xlane.xlu0 %1520
        %1522 = vadd.xlane.f32.xlu0 %v1493
        %v1523 = vpop.xlane.xlu0 %1522
        %1524 = vadd.xlane.f32.xlu0 %v1494
        %v1525 = vpop.xlane.xlu0 %1524
        %1526 = vadd.xlane.f32.xlu0 %v1495
        %v1527 = vpop.xlane.xlu0 %1526
        %v1528 = vmul.f32 %v1497, %v639
        %v1529 = vmul.f32 %v1499, %v639
        %v1530 = vmul.f32 %v1501, %v639
        %v1531 = vmul.f32 %v1503, %v639
        %v1532 = vmul.f32 %v1505, %v639
        %v1533 = vmul.f32 %v1507, %v639
        %v1534 = vmul.f32 %v1509, %v639
        %v1535 = vmul.f32 %v1511, %v639
        %v1536 = vmul.f32 %v1513, %v639
        %v1537 = vmul.f32 %v1515, %v639
        %v1538 = vmul.f32 %v1517, %v639
        %v1539 = vmul.f32 %v1519, %v639
        %v1540 = vmul.f32 %v1521, %v639
        %v1541 = vmul.f32 %v1523, %v639
        %v1542 = vmul.f32 %v1525, %v639
        %v1543 = vmul.f32 %v1527, %v639
        %v1544 = vadd.f32 %v1528, 1e-05
        %v1545 = vadd.f32 %v1529, 1e-05
        %v1546 = vadd.f32 %v1530, 1e-05
        %v1547 = vadd.f32 %v1531, 1e-05
        %v1548 = vadd.f32 %v1532, 1e-05
        %v1549 = vadd.f32 %v1533, 1e-05
        %v1550 = vadd.f32 %v1534, 1e-05
        %v1551 = vadd.f32 %v1535, 1e-05
        %v1552 = vadd.f32 %v1536, 1e-05
        %v1553 = vadd.f32 %v1537, 1e-05
        %v1554 = vadd.f32 %v1538, 1e-05
        %v1555 = vadd.f32 %v1539, 1e-05
        %v1556 = vadd.f32 %v1540, 1e-05
        %v1557 = vadd.f32 %v1541, 1e-05
        %v1558 = vadd.f32 %v1542, 1e-05
        %v1559 = vadd.f32 %v1543, 1e-05
        %v1560 = vrsqrt.pop %v1544
        %v1561 = vmul.f32 %v1560, %v1544
        %v1562 = vmul.f32 %v1561, %v1560
        %v1563 = vmul.f32 0.5, %v1562
        %v1564 = vsub.f32 1.5, %v1563
        %v1565 = vmul.f32 %v1560, %v1564
        %vm1566 = vweird.f32 %v1544
        %vm1567 = vweird.f32 %v1560
        %vm1568 = vmor %vm1566, %vm1567
        %v1569 = vsel %vm1568, %v1560, %v1565
        %v1570 = vrsqrt.pop %v1545
        %v1571 = vmul.f32 %v1570, %v1545
        %v1572 = vmul.f32 %v1571, %v1570
        %v1573 = vmul.f32 0.5, %v1572
        %v1574 = vsub.f32 1.5, %v1573
        %v1575 = vmul.f32 %v1570, %v1574
        %vm1576 = vweird.f32 %v1545
        %vm1577 = vweird.f32 %v1570
        %vm1578 = vmor %vm1576, %vm1577
        %v1579 = vsel %vm1578, %v1570, %v1575
        %v1580 = vrsqrt.pop %v1546
        %v1581 = vmul.f32 %v1580, %v1546
        %v1582 = vmul.f32 %v1581, %v1580
        %v1583 = vmul.f32 0.5, %v1582
        %v1584 = vsub.f32 1.5, %v1583
        %v1585 = vmul.f32 %v1580, %v1584
        %vm1586 = vweird.f32 %v1546
        %vm1587 = vweird.f32 %v1580
        %vm1588 = vmor %vm1586, %vm1587
        %v1589 = vsel %vm1588, %v1580, %v1585
        %v1590 = vrsqrt.pop %v1547
        %v1591 = vmul.f32 %v1590, %v1547
        %v1592 = vmul.f32 %v1591, %v1590
        %v1593 = vmul.f32 0.5, %v1592
        %v1594 = vsub.f32 1.5, %v1593
        %v1595 = vmul.f32 %v1590, %v1594
        %vm1596 = vweird.f32 %v1547
        %vm1597 = vweird.f32 %v1590
        %vm1598 = vmor %vm1596, %vm1597
        %v1599 = vsel %vm1598, %v1590, %v1595
        %v1600 = vrsqrt.pop %v1548
        %v1601 = vmul.f32 %v1600, %v1548
        %v1602 = vmul.f32 %v1601, %v1600
        %v1603 = vmul.f32 0.5, %v1602
        %v1604 = vsub.f32 1.5, %v1603
        %v1605 = vmul.f32 %v1600, %v1604
        %vm1606 = vweird.f32 %v1548
        %vm1607 = vweird.f32 %v1600
        %vm1608 = vmor %vm1606, %vm1607
        %v1609 = vsel %vm1608, %v1600, %v1605
        %v1610 = vrsqrt.pop %v1549
        %v1611 = vmul.f32 %v1610, %v1549
        %v1612 = vmul.f32 %v1611, %v1610
        %v1613 = vmul.f32 0.5, %v1612
        %v1614 = vsub.f32 1.5, %v1613
        %v1615 = vmul.f32 %v1610, %v1614
        %vm1616 = vweird.f32 %v1549
        %vm1617 = vweird.f32 %v1610
        %vm1618 = vmor %vm1616, %vm1617
        %v1619 = vsel %vm1618, %v1610, %v1615
        %v1620 = vrsqrt.pop %v1550
        %v1621 = vmul.f32 %v1620, %v1550
        %v1622 = vmul.f32 %v1621, %v1620
        %v1623 = vmul.f32 0.5, %v1622
        %v1624 = vsub.f32 1.5, %v1623
        %v1625 = vmul.f32 %v1620, %v1624
        %vm1626 = vweird.f32 %v1550
        %vm1627 = vweird.f32 %v1620
        %vm1628 = vmor %vm1626, %vm1627
        %v1629 = vsel %vm1628, %v1620, %v1625
        %v1630 = vrsqrt.pop %v1551
        %v1631 = vmul.f32 %v1630, %v1551
        %v1632 = vmul.f32 %v1631, %v1630
        %v1633 = vmul.f32 0.5, %v1632
        %v1634 = vsub.f32 1.5, %v1633
        %v1635 = vmul.f32 %v1630, %v1634
        %vm1636 = vweird.f32 %v1551
        %vm1637 = vweird.f32 %v1630
        %vm1638 = vmor %vm1636, %vm1637
        %v1639 = vsel %vm1638, %v1630, %v1635
        %v1640 = vrsqrt.pop %v1552
        %v1641 = vmul.f32 %v1640, %v1552
        %v1642 = vmul.f32 %v1641, %v1640
        %v1643 = vmul.f32 0.5, %v1642
        %v1644 = vsub.f32 1.5, %v1643
        %v1645 = vmul.f32 %v1640, %v1644
        %vm1646 = vweird.f32 %v1552
        %vm1647 = vweird.f32 %v1640
        %vm1648 = vmor %vm1646, %vm1647
        %v1649 = vsel %vm1648, %v1640, %v1645
        %v1650 = vrsqrt.pop %v1553
        %v1651 = vmul.f32 %v1650, %v1553
        %v1652 = vmul.f32 %v1651, %v1650
        %v1653 = vmul.f32 0.5, %v1652
        %v1654 = vsub.f32 1.5, %v1653
        %v1655 = vmul.f32 %v1650, %v1654
        %vm1656 = vweird.f32 %v1553
        %vm1657 = vweird.f32 %v1650
        %vm1658 = vmor %vm1656, %vm1657
        %v1659 = vsel %vm1658, %v1650, %v1655
        %v1660 = vrsqrt.pop %v1554
        %v1661 = vmul.f32 %v1660, %v1554
        %v1662 = vmul.f32 %v1661, %v1660
        %v1663 = vmul.f32 0.5, %v1662
        %v1664 = vsub.f32 1.5, %v1663
        %v1665 = vmul.f32 %v1660, %v1664
        %vm1666 = vweird.f32 %v1554
        %vm1667 = vweird.f32 %v1660
        %vm1668 = vmor %vm1666, %vm1667
        %v1669 = vsel %vm1668, %v1660, %v1665
        %v1670 = vrsqrt.pop %v1555
        %v1671 = vmul.f32 %v1670, %v1555
        %v1672 = vmul.f32 %v1671, %v1670
        %v1673 = vmul.f32 0.5, %v1672
        %v1674 = vsub.f32 1.5, %v1673
        %v1675 = vmul.f32 %v1670, %v1674
        %vm1676 = vweird.f32 %v1555
        %vm1677 = vweird.f32 %v1670
        %vm1678 = vmor %vm1676, %vm1677
        %v1679 = vsel %vm1678, %v1670, %v1675
        %v1680 = vrsqrt.pop %v1556
        %v1681 = vmul.f32 %v1680, %v1556
        %v1682 = vmul.f32 %v1681, %v1680
        %v1683 = vmul.f32 0.5, %v1682
        %v1684 = vsub.f32 1.5, %v1683
        %v1685 = vmul.f32 %v1680, %v1684
        %vm1686 = vweird.f32 %v1556
        %vm1687 = vweird.f32 %v1680
        %vm1688 = vmor %vm1686, %vm1687
        %v1689 = vsel %vm1688, %v1680, %v1685
        %v1690 = vrsqrt.pop %v1557
        %v1691 = vmul.f32 %v1690, %v1557
        %v1692 = vmul.f32 %v1691, %v1690
        %v1693 = vmul.f32 0.5, %v1692
        %v1694 = vsub.f32 1.5, %v1693
        %v1695 = vmul.f32 %v1690, %v1694
        %vm1696 = vweird.f32 %v1557
        %vm1697 = vweird.f32 %v1690
        %vm1698 = vmor %vm1696, %vm1697
        %v1699 = vsel %vm1698, %v1690, %v1695
        %v1700 = vrsqrt.pop %v1558
        %v1701 = vmul.f32 %v1700, %v1558
        %v1702 = vmul.f32 %v1701, %v1700
        %v1703 = vmul.f32 0.5, %v1702
        %v1704 = vsub.f32 1.5, %v1703
        %v1705 = vmul.f32 %v1700, %v1704
        %vm1706 = vweird.f32 %v1558
        %vm1707 = vweird.f32 %v1700
        %vm1708 = vmor %vm1706, %vm1707
        %v1709 = vsel %vm1708, %v1700, %v1705
        %v1710 = vrsqrt.pop %v1559
        %v1711 = vmul.f32 %v1710, %v1559
        %v1712 = vmul.f32 %v1711, %v1710
        %v1713 = vmul.f32 0.5, %v1712
        %v1714 = vsub.f32 1.5, %v1713
        %v1715 = vmul.f32 %v1710, %v1714
        %vm1716 = vweird.f32 %v1559
        %vm1717 = vweird.f32 %v1710
        %vm1718 = vmor %vm1716, %vm1717
        %v1719 = vsel %vm1718, %v1710, %v1715
        %v1720 = vmul.f32 %v1464, %v1569
        %v1721 = vmul.f32 %v1465, %v1579
        %v1722 = vmul.f32 %v1466, %v1589
        %v1723 = vmul.f32 %v1467, %v1599
        %v1724 = vmul.f32 %v1468, %v1609
        %v1725 = vmul.f32 %v1469, %v1619
        %v1726 = vmul.f32 %v1470, %v1629
        %v1727 = vmul.f32 %v1471, %v1639
        %v1728 = vmul.f32 %v1472, %v1649
        %v1729 = vmul.f32 %v1473, %v1659
        %v1730 = vmul.f32 %v1474, %v1669
        %v1731 = vmul.f32 %v1475, %v1679
        %v1732 = vmul.f32 %v1476, %v1689
        %v1733 = vmul.f32 %v1477, %v1699
        %v1734 = vmul.f32 %v1478, %v1709
        %v1735 = vmul.f32 %v1479, %v1719
        %v1736 = vperm.slane %v1398, 0
        %v1737 = vmul.f32 %v1720, %v1736
        %v1738 = vmul.f32 %v1721, %v1736
        %v1739 = vmul.f32 %v1722, %v1736
        %v1740 = vmul.f32 %v1723, %v1736
        %v1741 = vmul.f32 %v1724, %v1736
        %v1742 = vmul.f32 %v1725, %v1736
        %v1743 = vmul.f32 %v1726, %v1736
        %v1744 = vmul.f32 %v1727, %v1736
        %v1745 = vmul.f32 %v1728, %v1736
        %v1746 = vmul.f32 %v1729, %v1736
        %v1747 = vmul.f32 %v1730, %v1736
        %v1748 = vmul.f32 %v1731, %v1736
        %v1749 = vmul.f32 %v1732, %v1736
        %v1750 = vmul.f32 %v1733, %v1736
        %v1751 = vmul.f32 %v1734, %v1736
        %v1752 = vmul.f32 %v1735, %v1736
        %v1753 = vperm.slane %v1399, 0
        %v1754 = vadd.f32 %v1737, %v1753
        %v1755 = vadd.f32 %v1738, %v1753
        %v1756 = vadd.f32 %v1739, %v1753
        %v1757 = vadd.f32 %v1740, %v1753
        %v1758 = vadd.f32 %v1741, %v1753
        %v1759 = vadd.f32 %v1742, %v1753
        %v1760 = vadd.f32 %v1743, %v1753
        %v1761 = vadd.f32 %v1744, %v1753
        %v1762 = vadd.f32 %v1745, %v1753
        %v1763 = vadd.f32 %v1746, %v1753
        %v1764 = vadd.f32 %v1747, %v1753
        %v1765 = vadd.f32 %v1748, %v1753
        %v1766 = vadd.f32 %v1749, %v1753
        %v1767 = vadd.f32 %v1750, %v1753
        %v1768 = vadd.f32 %v1751, %v1753
        %v1769 = vadd.f32 %v1752, %v1753
        %v1770 = vmax.f32 %v1754, 0.0
        %v1771 = vmax.f32 %v1755, 0.0
        %v1772 = vmax.f32 %v1756, 0.0
        %v1773 = vmax.f32 %v1757, 0.0
        %v1774 = vmax.f32 %v1758, 0.0
        %v1775 = vmax.f32 %v1759, 0.0
        %v1776 = vmax.f32 %v1760, 0.0
        %v1777 = vmax.f32 %v1761, 0.0
        %v1778 = vmax.f32 %v1762, 0.0
        %v1779 = vmax.f32 %v1763, 0.0
        %v1780 = vmax.f32 %v1764, 0.0
        %v1781 = vmax.f32 %v1765, 0.0
        %v1782 = vmax.f32 %v1766, 0.0
        %v1783 = vmax.f32 %v1767, 0.0
        %v1784 = vmax.f32 %v1768, 0.0
        %v1785 = vmax.f32 %v1769, 0.0
        %v1786 = vpack.c.bf16 %v1770, %v1770
        %v1787 = vpack.c.bf16 %v1771, %v1771
        %v1788 = vpack.c.bf16 %v1772, %v1772
        %v1789 = vpack.c.bf16 %v1773, %v1773
        %v1790 = vpack.c.bf16 %v1774, %v1774
        %v1791 = vpack.c.bf16 %v1775, %v1775
        %v1792 = vpack.c.bf16 %v1776, %v1776
        %v1793 = vpack.c.bf16 %v1777, %v1777
        %v1794 = vpack.c.bf16 %v1778, %v1778
        %v1795 = vpack.c.bf16 %v1779, %v1779
        %v1796 = vpack.c.bf16 %v1780, %v1780
        %v1797 = vpack.c.bf16 %v1781, %v1781
        %v1798 = vpack.c.bf16 %v1782, %v1782
        %v1799 = vpack.c.bf16 %v1783, %v1783
        %v1800 = vpack.c.bf16 %v1784, %v1784
        %v1801 = vpack.c.bf16 %v1785, %v1785
        %v1818 = vunpack.c.l.b16 %v978
        %v1819 = vunpack.c.l.b16 %v979
        %v1820 = vunpack.c.l.b16 %v980
        %v1821 = vunpack.c.l.b16 %v981
        %v1822 = vunpack.c.l.b16 %v982
        %v1823 = vunpack.c.l.b16 %v983
        %v1824 = vunpack.c.l.b16 %v984
        %v1825 = vunpack.c.l.b16 %v985
        %v1826 = vunpack.c.l.b16 %v986
        %v1827 = vunpack.c.l.b16 %v987
        %v1828 = vunpack.c.l.b16 %v988
        %v1829 = vunpack.c.l.b16 %v989
        %v1830 = vunpack.c.l.b16 %v990
        %v1831 = vunpack.c.l.b16 %v991
        %v1832 = vunpack.c.l.b16 %v992
        %v1833 = vunpack.c.l.b16 %v993
        %v1834 = vpack.c.b16 %v1819, %v1818
        %v1835 = vpack.c.b16 %v1821, %v1820
        %v1836 = vpack.c.b16 %v1823, %v1822
        %v1837 = vpack.c.b16 %v1825, %v1824
        %v1838 = vpack.c.b16 %v1827, %v1826
        %v1839 = vpack.c.b16 %v1829, %v1828
        %v1840 = vpack.c.b16 %v1831, %v1830
        %v1841 = vpack.c.b16 %v1833, %v1832
        %v1866 = vunpack.c.l.b16 %v1382
        %v1867 = vunpack.c.l.b16 %v1383
        %v1868 = vunpack.c.l.b16 %v1384
        %v1869 = vunpack.c.l.b16 %v1385
        %v1870 = vunpack.c.l.b16 %v1386
        %v1871 = vunpack.c.l.b16 %v1387
        %v1872 = vunpack.c.l.b16 %v1388
        %v1873 = vunpack.c.l.b16 %v1389
        %v1874 = vunpack.c.l.b16 %v1390
        %v1875 = vunpack.c.l.b16 %v1391
        %v1876 = vunpack.c.l.b16 %v1392
        %v1877 = vunpack.c.l.b16 %v1393
        %v1878 = vunpack.c.l.b16 %v1394
        %v1879 = vunpack.c.l.b16 %v1395
        %v1880 = vunpack.c.l.b16 %v1396
        %v1881 = vunpack.c.l.b16 %v1397
        %v1882 = vpack.c.b16 %v1867, %v1866
        %v1883 = vpack.c.b16 %v1869, %v1868
        %v1884 = vpack.c.b16 %v1871, %v1870
        %v1885 = vpack.c.b16 %v1873, %v1872
        %v1886 = vpack.c.b16 %v1875, %v1874
        %v1887 = vpack.c.b16 %v1877, %v1876
        %v1888 = vpack.c.b16 %v1879, %v1878
        %v1889 = vpack.c.b16 %v1881, %v1880
        %v1914 = vunpack.c.l.b16 %v1786
        %v1915 = vunpack.c.l.b16 %v1787
        %v1916 = vunpack.c.l.b16 %v1788
        %v1917 = vunpack.c.l.b16 %v1789
        %v1918 = vunpack.c.l.b16 %v1790
        %v1919 = vunpack.c.l.b16 %v1791
        %v1920 = vunpack.c.l.b16 %v1792
        %v1921 = vunpack.c.l.b16 %v1793
        %v1922 = vunpack.c.l.b16 %v1794
        %v1923 = vunpack.c.l.b16 %v1795
        %v1924 = vunpack.c.l.b16 %v1796
        %v1925 = vunpack.c.l.b16 %v1797
        %v1926 = vunpack.c.l.b16 %v1798
        %v1927 = vunpack.c.l.b16 %v1799
        %v1928 = vunpack.c.l.b16 %v1800
        %v1929 = vunpack.c.l.b16 %v1801
        %v1930 = vpack.c.b16 %v1915, %v1914
        %v1931 = vpack.c.b16 %v1917, %v1916
        %v1932 = vpack.c.b16 %v1919, %v1918
        %v1933 = vpack.c.b16 %v1921, %v1920
        %v1934 = vpack.c.b16 %v1923, %v1922
        %v1935 = vpack.c.b16 %v1925, %v1924
        %v1936 = vpack.c.b16 %v1927, %v1926
        %v1937 = vpack.c.b16 %v1929, %v1928
        %v1946 = vld [vmem:[#allocation11] sm:$0xf]
        %v1947 = vld [vmem:[#allocation11 + $0x4] sm:$0xf]
        %v1948 = vld [vmem:[#allocation11 + $0x8] sm:$0xf]
        %v1949 = vld [vmem:[#allocation11 + $0xc] sm:$0xf]
        %v1950 = vld [vmem:[#allocation11 + $0x10] sm:$0xf]
        %v1951 = vld [vmem:[#allocation11 + $0x14] sm:$0xf]
        %v1952 = vld [vmem:[#allocation11 + $0x18] sm:$0xf]
        %v1953 = vld [vmem:[#allocation11 + $0x1c] sm:$0xf]
        %v1954 = vld [vmem:[#allocation11 + $0x20] sm:$0xf]
        %v1955 = vld [vmem:[#allocation11 + $0x24] sm:$0xf]
        %v1956 = vld [vmem:[#allocation11 + $0x28] sm:$0xf]
        %v1957 = vld [vmem:[#allocation11 + $0x2c] sm:$0xf]
        %v1958 = vld [vmem:[#allocation11 + $0x30] sm:$0xf]
        %v1959 = vld [vmem:[#allocation11 + $0x34] sm:$0xf]
        %v1960 = vld [vmem:[#allocation11 + $0x38] sm:$0xf]
        %v1961 = vld [vmem:[#allocation11 + $0x3c] sm:$0xf]
        %v1962 = vld [vmem:[#allocation11 + $0x40] sm:$0xf]
        %v1963 = vld [vmem:[#allocation11 + $0x44] sm:$0xf]
        %v1964 = vld [vmem:[#allocation11 + $0x48] sm:$0xf]
        %v1965 = vld [vmem:[#allocation11 + $0x4c] sm:$0xf]
        %v1966 = vld [vmem:[#allocation11 + $0x50] sm:$0xf]
        %v1967 = vld [vmem:[#allocation11 + $0x54] sm:$0xf]
        %v1968 = vld [vmem:[#allocation11 + $0x58] sm:$0xf]
        %v1969 = vld [vmem:[#allocation11 + $0x5c] sm:$0xf]
        %v1970 = vld [vmem:[#allocation11 + $0x60] sm:$0xf]
        %v1971 = vld [vmem:[#allocation11 + $0x64] sm:$0xf]
        %v1972 = vld [vmem:[#allocation11 + $0x68] sm:$0xf]
        %v1973 = vld [vmem:[#allocation11 + $0x6c] sm:$0xf]
        %v1974 = vld [vmem:[#allocation11 + $0x70] sm:$0xf]
        %v1975 = vld [vmem:[#allocation11 + $0x74] sm:$0xf]
        %v1976 = vld [vmem:[#allocation11 + $0x78] sm:$0xf]
        %v1977 = vld [vmem:[#allocation11 + $0x7c] sm:$0xf]
        %v1978 = vld [vmem:[#allocation11 + $0x80] sm:$0xf]
        %v1979 = vld [vmem:[#allocation11 + $0x84] sm:$0xf]
        %v1980 = vld [vmem:[#allocation11 + $0x88] sm:$0xf]
        %v1981 = vld [vmem:[#allocation11 + $0x8c] sm:$0xf]
        %v1982 = vld [vmem:[#allocation11 + $0x90] sm:$0xf]
        %v1983 = vld [vmem:[#allocation11 + $0x94] sm:$0xf]
        %v1984 = vld [vmem:[#allocation11 + $0x98] sm:$0xf]
        %v1985 = vld [vmem:[#allocation11 + $0x9c] sm:$0xf]
        %v1986 = vld [vmem:[#allocation11 + $0xa0] sm:$0xf]
        %v1987 = vld [vmem:[#allocation11 + $0xa4] sm:$0xf]
        %v1988 = vld [vmem:[#allocation11 + $0xa8] sm:$0xf]
        %v1989 = vld [vmem:[#allocation11 + $0xac] sm:$0xf]
        %v1990 = vld [vmem:[#allocation11 + $0xb0] sm:$0xf]
        %v1991 = vld [vmem:[#allocation11 + $0xb4] sm:$0xf]
        %v1992 = vld [vmem:[#allocation11 + $0xb8] sm:$0xf]
        %v1993 = vld [vmem:[#allocation11 + $0xbc] sm:$0xf]
        %v1994 = vld [vmem:[#allocation12] sm:$0x1]
        %v1996 = vperm.slane %v1994, 0
        %v2046 = vunpack.c.l.b16 %v1946
        %v2047 = vunpack.c.l.b16 %v1947
        %v2048 = vunpack.c.l.b16 %v1948
        %v2049 = vunpack.c.l.b16 %v1949
        %v2050 = vunpack.c.l.b16 %v1950
        %v2051 = vunpack.c.l.b16 %v1951
        %v2052 = vunpack.c.l.b16 %v1952
        %v2053 = vunpack.c.l.b16 %v1953
        %v2054 = vunpack.c.l.b16 %v1954
        %v2055 = vunpack.c.l.b16 %v1955
        %v2056 = vunpack.c.l.b16 %v1956
        %v2057 = vunpack.c.l.b16 %v1957
        %v2058 = vunpack.c.l.b16 %v1958
        %v2059 = vunpack.c.l.b16 %v1959
        %v2060 = vunpack.c.l.b16 %v1960
        %v2061 = vunpack.c.l.b16 %v1961
        %v2062 = vunpack.c.l.b16 %v1962
        %v2063 = vunpack.c.l.b16 %v1963
        %v2064 = vunpack.c.l.b16 %v1964
        %v2065 = vunpack.c.l.b16 %v1965
        %v2066 = vunpack.c.l.b16 %v1966
        %v2067 = vunpack.c.l.b16 %v1967
        %v2068 = vunpack.c.l.b16 %v1968
        %v2069 = vunpack.c.l.b16 %v1969
        %v2070 = vunpack.c.l.b16 %v1970
        %v2071 = vunpack.c.l.b16 %v1971
        %v2072 = vunpack.c.l.b16 %v1972
        %v2073 = vunpack.c.l.b16 %v1973
        %v2074 = vunpack.c.l.b16 %v1974
        %v2075 = vunpack.c.l.b16 %v1975
        %v2076 = vunpack.c.l.b16 %v1976
        %v2077 = vunpack.c.l.b16 %v1977
        %v2078 = vunpack.c.l.b16 %v1978
        %v2079 = vunpack.c.l.b16 %v1979
        %v2080 = vunpack.c.l.b16 %v1980
        %v2081 = vunpack.c.l.b16 %v1981
        %v2082 = vunpack.c.l.b16 %v1982
        %v2083 = vunpack.c.l.b16 %v1983
        %v2084 = vunpack.c.l.b16 %v1984
        %v2085 = vunpack.c.l.b16 %v1985
        %v2086 = vunpack.c.l.b16 %v1986
        %v2087 = vunpack.c.l.b16 %v1987
        %v2088 = vunpack.c.l.b16 %v1988
        %v2089 = vunpack.c.l.b16 %v1989
        %v2090 = vunpack.c.l.b16 %v1990
        %v2091 = vunpack.c.l.b16 %v1991
        %v2092 = vunpack.c.l.b16 %v1992
        %v2093 = vunpack.c.l.b16 %v1993
        %v2094 = vpack.c.b16 %v2047, %v2046
        %v2095 = vpack.c.b16 %v2049, %v2048
        %v2096 = vpack.c.b16 %v2051, %v2050
        %v2097 = vpack.c.b16 %v2053, %v2052
        %v2098 = vpack.c.b16 %v2055, %v2054
        %v2099 = vpack.c.b16 %v2057, %v2056
        %v2100 = vpack.c.b16 %v2059, %v2058
        %v2101 = vpack.c.b16 %v2061, %v2060
        %v2102 = vpack.c.b16 %v2063, %v2062
        %v2103 = vpack.c.b16 %v2065, %v2064
        %v2104 = vpack.c.b16 %v2067, %v2066
        %v2105 = vpack.c.b16 %v2069, %v2068
        %v2106 = vpack.c.b16 %v2071, %v2070
        %v2107 = vpack.c.b16 %v2073, %v2072
        %v2108 = vpack.c.b16 %v2075, %v2074
        %v2109 = vpack.c.b16 %v2077, %v2076
        %v2110 = vpack.c.b16 %v2079, %v2078
        %v2111 = vpack.c.b16 %v2081, %v2080
        %v2112 = vpack.c.b16 %v2083, %v2082
        %v2113 = vpack.c.b16 %v2085, %v2084
        %v2114 = vpack.c.b16 %v2087, %v2086
        %v2115 = vpack.c.b16 %v2089, %v2088
        %v2116 = vpack.c.b16 %v2091, %v2090
        %v2117 = vpack.c.b16 %v2093, %v2092
        %2142 = vmatpush.bf16.msra.mxu0 %v2101
        %2143 = vmatpush.bf16.msra.mxu0 %v2100
        %2144 = vmatpush.bf16.msra.mxu0 %v2099
        %2145 = vmatpush.bf16.msra.mxu0 %v2098
        %2146 = vmatpush.bf16.msra.mxu0 %v2097
        %2147 = vmatpush.bf16.msra.mxu0 %v2096
        %2148 = vmatpush.bf16.msra.mxu0 %v2095
        %2149 = vmatpush.bf16.msra.mxu0 %v2094
        %2150 = vmatmul.bf16.gmra.mxu0 %v1834
        %v2151 = vpop.f32.mrf.mxu0
        %v2152 = vadd.f32 %v1996, %v2151
        %v2153 = vpop.f32.mrf.mxu0
        %v2154 = vadd.f32 %v1996, %v2153
        %2155 = vmatmul.bf16.gmra.mxu0 %v1835
        %v2156 = vpop.f32.mrf.mxu0
        %v2157 = vadd.f32 %v1996, %v2156
        %v2158 = vpop.f32.mrf.mxu0
        %v2159 = vadd.f32 %v1996, %v2158
        %2160 = vmatmul.bf16.gmra.mxu0 %v1836
        %v2161 = vpop.f32.mrf.mxu0
        %v2162 = vadd.f32 %v1996, %v2161
        %v2163 = vpop.f32.mrf.mxu0
        %v2164 = vadd.f32 %v1996, %v2163
        %2165 = vmatmul.bf16.gmra.mxu0 %v1837
        %v2166 = vpop.f32.mrf.mxu0
        %v2167 = vadd.f32 %v1996, %v2166
        %v2168 = vpop.f32.mrf.mxu0
        %v2169 = vadd.f32 %v1996, %v2168
        %2170 = vmatmul.bf16.gmra.mxu0 %v1838
        %v2171 = vpop.f32.mrf.mxu0
        %v2172 = vadd.f32 %v1996, %v2171
        %v2173 = vpop.f32.mrf.mxu0
        %v2174 = vadd.f32 %v1996, %v2173
        %2175 = vmatmul.bf16.gmra.mxu0 %v1839
        %v2176 = vpop.f32.mrf.mxu0
        %v2177 = vadd.f32 %v1996, %v2176
        %v2178 = vpop.f32.mrf.mxu0
        %v2179 = vadd.f32 %v1996, %v2178
        %2180 = vmatmul.bf16.gmra.mxu0 %v1840
        %v2181 = vpop.f32.mrf.mxu0
        %v2182 = vadd.f32 %v1996, %v2181
        %v2183 = vpop.f32.mrf.mxu0
        %v2184 = vadd.f32 %v1996, %v2183
        %2185 = vmatmul.bf16.gmra.mxu0 %v1841
        %v2186 = vpop.f32.mrf.mxu0
        %v2187 = vadd.f32 %v1996, %v2186
        %v2188 = vpop.f32.mrf.mxu0
        %v2189 = vadd.f32 %v1996, %v2188
        %2190 = vdwg.mxu0
        %2191 = vmatpush.bf16.msra.mxu0 %v2109
        %2192 = vmatpush.bf16.msra.mxu0 %v2108
        %2193 = vmatpush.bf16.msra.mxu0 %v2107
        %2194 = vmatpush.bf16.msra.mxu0 %v2106
        %2195 = vmatpush.bf16.msra.mxu0 %v2105
        %2196 = vmatpush.bf16.msra.mxu0 %v2104
        %2197 = vmatpush.bf16.msra.mxu0 %v2103
        %2198 = vmatpush.bf16.msra.mxu0 %v2102
        %2199 = vmatmul.bf16.gmra.mxu0 %v1882
        %v2200 = vpop.f32.mrf.mxu0
        %v2201 = vadd.f32 %v2152, %v2200
        %v2202 = vpop.f32.mrf.mxu0
        %v2203 = vadd.f32 %v2154, %v2202
        %2204 = vmatmul.bf16.gmra.mxu0 %v1883
        %v2205 = vpop.f32.mrf.mxu0
        %v2206 = vadd.f32 %v2157, %v2205
        %v2207 = vpop.f32.mrf.mxu0
        %v2208 = vadd.f32 %v2159, %v2207
        %2209 = vmatmul.bf16.gmra.mxu0 %v1884
        %v2210 = vpop.f32.mrf.mxu0
        %v2211 = vadd.f32 %v2162, %v2210
        %v2212 = vpop.f32.mrf.mxu0
        %v2213 = vadd.f32 %v2164, %v2212
        %2214 = vmatmul.bf16.gmra.mxu0 %v1885
        %v2215 = vpop.f32.mrf.mxu0
        %v2216 = vadd.f32 %v2167, %v2215
        %v2217 = vpop.f32.mrf.mxu0
        %v2218 = vadd.f32 %v2169, %v2217
        %2219 = vmatmul.bf16.gmra.mxu0 %v1886
        %v2220 = vpop.f32.mrf.mxu0
        %v2221 = vadd.f32 %v2172, %v2220
        %v2222 = vpop.f32.mrf.mxu0
        %v2223 = vadd.f32 %v2174, %v2222
        %2224 = vmatmul.bf16.gmra.mxu0 %v1887
        %v2225 = vpop.f32.mrf.mxu0
        %v2226 = vadd.f32 %v2177, %v2225
        %v2227 = vpop.f32.mrf.mxu0
        %v2228 = vadd.f32 %v2179, %v2227
        %2229 = vmatmul.bf16.gmra.mxu0 %v1888
        %v2230 = vpop.f32.mrf.mxu0
        %v2231 = vadd.f32 %v2182, %v2230
        %v2232 = vpop.f32.mrf.mxu0
        %v2233 = vadd.f32 %v2184, %v2232
        %2234 = vmatmul.bf16.gmra.mxu0 %v1889
        %v2235 = vpop.f32.mrf.mxu0
        %v2236 = vadd.f32 %v2187, %v2235
        %v2237 = vpop.f32.mrf.mxu0
        %v2238 = vadd.f32 %v2189, %v2237
        %2239 = vdwg.mxu0
        %2240 = vmatpush.bf16.msra.mxu0 %v2117
        %2241 = vmatpush.bf16.msra.mxu0 %v2116
        %2242 = vmatpush.bf16.msra.mxu0 %v2115
        %2243 = vmatpush.bf16.msra.mxu0 %v2114
        %2244 = vmatpush.bf16.msra.mxu0 %v2113
        %2245 = vmatpush.bf16.msra.mxu0 %v2112
        %2246 = vmatpush.bf16.msra.mxu0 %v2111
        %2247 = vmatpush.bf16.msra.mxu0 %v2110
        %2248 = vmatmul.bf16.gmra.mxu0 %v1930
        %v2249 = vpop.f32.mrf.mxu0
        %v2250 = vadd.f32 %v2201, %v2249
        %v2251 = vpop.f32.mrf.mxu0
        %v2252 = vadd.f32 %v2203, %v2251
        %2253 = vmatmul.bf16.gmra.mxu0 %v1931
        %v2254 = vpop.f32.mrf.mxu0
        %v2255 = vadd.f32 %v2206, %v2254
        %v2256 = vpop.f32.mrf.mxu0
        %v2257 = vadd.f32 %v2208, %v2256
        %2258 = vmatmul.bf16.gmra.mxu0 %v1932
        %v2259 = vpop.f32.mrf.mxu0
        %v2260 = vadd.f32 %v2211, %v2259
        %v2261 = vpop.f32.mrf.mxu0
        %v2262 = vadd.f32 %v2213, %v2261
        %2263 = vmatmul.bf16.gmra.mxu0 %v1933
        %v2264 = vpop.f32.mrf.mxu0
        %v2265 = vadd.f32 %v2216, %v2264
        %v2266 = vpop.f32.mrf.mxu0
        %v2267 = vadd.f32 %v2218, %v2266
        %2268 = vmatmul.bf16.gmra.mxu0 %v1934
        %v2269 = vpop.f32.mrf.mxu0
        %v2270 = vadd.f32 %v2221, %v2269
        %v2271 = vpop.f32.mrf.mxu0
        %v2272 = vadd.f32 %v2223, %v2271
        %2273 = vmatmul.bf16.gmra.mxu0 %v1935
        %v2274 = vpop.f32.mrf.mxu0
        %v2275 = vadd.f32 %v2226, %v2274
        %v2276 = vpop.f32.mrf.mxu0
        %v2277 = vadd.f32 %v2228, %v2276
        %2278 = vmatmul.bf16.gmra.mxu0 %v1936
        %v2279 = vpop.f32.mrf.mxu0
        %v2280 = vadd.f32 %v2231, %v2279
        %v2281 = vpop.f32.mrf.mxu0
        %v2282 = vadd.f32 %v2233, %v2281
        %2283 = vmatmul.bf16.gmra.mxu0 %v1937
        %v2284 = vpop.f32.mrf.mxu0
        %v2285 = vadd.f32 %v2236, %v2284
        %v2286 = vpop.f32.mrf.mxu0
        %v2287 = vadd.f32 %v2238, %v2286
        %2288 = vdwg.mxu0
        %2289 = vst [vmem:[#allocation2] sm:$0xff] %v2250
        %2290 = vst [vmem:[#allocation2 + $0x8] sm:$0xff] %v2252
        %2291 = vst [vmem:[#allocation2 + $0x10] sm:$0xff] %v2255
        %2292 = vst [vmem:[#allocation2 + $0x18] sm:$0xff] %v2257
        %2293 = vst [vmem:[#allocation2 + $0x20] sm:$0xff] %v2260
        %2294 = vst [vmem:[#allocation2 + $0x28] sm:$0xff] %v2262
        %2295 = vst [vmem:[#allocation2 + $0x30] sm:$0xff] %v2265
        %2296 = vst [vmem:[#allocation2 + $0x38] sm:$0xff] %v2267
        %2297 = vst [vmem:[#allocation2 + $0x40] sm:$0xff] %v2270
        %2298 = vst [vmem:[#allocation2 + $0x48] sm:$0xff] %v2272
        %2299 = vst [vmem:[#allocation2 + $0x50] sm:$0xff] %v2275
        %2300 = vst [vmem:[#allocation2 + $0x58] sm:$0xff] %v2277
        %2301 = vst [vmem:[#allocation2 + $0x60] sm:$0xff] %v2280
        %2302 = vst [vmem:[#allocation2 + $0x68] sm:$0xff] %v2282
        %2303 = vst [vmem:[#allocation2 + $0x70] sm:$0xff] %v2285
        %2304 = vst [vmem:[#allocation2 + $0x78] sm:$0xff] %v2287
        %v2305 = vld [vmem:[#allocation2] sm:$0xff]
        %v2306 = vld [vmem:[#allocation2 + $0x8] sm:$0xff]
        %v2307 = vld [vmem:[#allocation2 + $0x10] sm:$0xff]
        %v2308 = vld [vmem:[#allocation2 + $0x18] sm:$0xff]
        %v2309 = vld [vmem:[#allocation2 + $0x20] sm:$0xff]
        %v2310 = vld [vmem:[#allocation2 + $0x28] sm:$0xff]
        %v2311 = vld [vmem:[#allocation2 + $0x30] sm:$0xff]
        %v2312 = vld [vmem:[#allocation2 + $0x38] sm:$0xff]
        %v2313 = vld [vmem:[#allocation2 + $0x40] sm:$0xff]
        %v2314 = vld [vmem:[#allocation2 + $0x48] sm:$0xff]
        %v2315 = vld [vmem:[#allocation2 + $0x50] sm:$0xff]
        %v2316 = vld [vmem:[#allocation2 + $0x58] sm:$0xff]
        %v2317 = vld [vmem:[#allocation2 + $0x60] sm:$0xff]
        %v2318 = vld [vmem:[#allocation2 + $0x68] sm:$0xff]
        %v2319 = vld [vmem:[#allocation2 + $0x70] sm:$0xff]
        %v2320 = vld [vmem:[#allocation2 + $0x78] sm:$0xff]
        %v2321 = vld [vmem:[%s7] sm:$0x1]
        %v2322 = vld [vmem:[#allocation14] sm:$0x1]
        %2323 = vadd.xlane.f32.xlu0 %v2305
        %v2324 = vpop.xlane.xlu0 %2323
        %2325 = vadd.xlane.f32.xlu0 %v2306
        %v2326 = vpop.xlane.xlu0 %2325
        %2327 = vadd.xlane.f32.xlu0 %v2307
        %v2328 = vpop.xlane.xlu0 %2327
        %2329 = vadd.xlane.f32.xlu0 %v2308
        %v2330 = vpop.xlane.xlu0 %2329
        %2331 = vadd.xlane.f32.xlu0 %v2309
        %v2332 = vpop.xlane.xlu0 %2331
        %2333 = vadd.xlane.f32.xlu0 %v2310
        %v2334 = vpop.xlane.xlu0 %2333
        %2335 = vadd.xlane.f32.xlu0 %v2311
        %v2336 = vpop.xlane.xlu0 %2335
        %2337 = vadd.xlane.f32.xlu0 %v2312
        %v2338 = vpop.xlane.xlu0 %2337
        %2339 = vadd.xlane.f32.xlu0 %v2313
        %v2340 = vpop.xlane.xlu0 %2339
        %2341 = vadd.xlane.f32.xlu0 %v2314
        %v2342 = vpop.xlane.xlu0 %2341
        %2343 = vadd.xlane.f32.xlu0 %v2315
        %v2344 = vpop.xlane.xlu0 %2343
        %2345 = vadd.xlane.f32.xlu0 %v2316
        %v2346 = vpop.xlane.xlu0 %2345
        %2347 = vadd.xlane.f32.xlu0 %v2317
        %v2348 = vpop.xlane.xlu0 %2347
        %2349 = vadd.xlane.f32.xlu0 %v2318
        %v2350 = vpop.xlane.xlu0 %2349
        %2351 = vadd.xlane.f32.xlu0 %v2319
        %v2352 = vpop.xlane.xlu0 %2351
        %2353 = vadd.xlane.f32.xlu0 %v2320
        %v2354 = vpop.xlane.xlu0 %2353
        %v2355 = vmul.f32 %v2324, %v639
        %v2356 = vmul.f32 %v2326, %v639
        %v2357 = vmul.f32 %v2328, %v639
        %v2358 = vmul.f32 %v2330, %v639
        %v2359 = vmul.f32 %v2332, %v639
        %v2360 = vmul.f32 %v2334, %v639
        %v2361 = vmul.f32 %v2336, %v639
        %v2362 = vmul.f32 %v2338, %v639
        %v2363 = vmul.f32 %v2340, %v639
        %v2364 = vmul.f32 %v2342, %v639
        %v2365 = vmul.f32 %v2344, %v639
        %v2366 = vmul.f32 %v2346, %v639
        %v2367 = vmul.f32 %v2348, %v639
        %v2368 = vmul.f32 %v2350, %v639
        %v2369 = vmul.f32 %v2352, %v639
        %v2370 = vmul.f32 %v2354, %v639
        %v2371 = vsub.f32 %v2305, %v2355
        %v2372 = vsub.f32 %v2306, %v2356
        %v2373 = vsub.f32 %v2307, %v2357
        %v2374 = vsub.f32 %v2308, %v2358
        %v2375 = vsub.f32 %v2309, %v2359
        %v2376 = vsub.f32 %v2310, %v2360
        %v2377 = vsub.f32 %v2311, %v2361
        %v2378 = vsub.f32 %v2312, %v2362
        %v2379 = vsub.f32 %v2313, %v2363
        %v2380 = vsub.f32 %v2314, %v2364
        %v2381 = vsub.f32 %v2315, %v2365
        %v2382 = vsub.f32 %v2316, %v2366
        %v2383 = vsub.f32 %v2317, %v2367
        %v2384 = vsub.f32 %v2318, %v2368
        %v2385 = vsub.f32 %v2319, %v2369
        %v2386 = vsub.f32 %v2320, %v2370
        %v2387 = vmul.f32 %v2371, %v2371
        %v2388 = vmul.f32 %v2372, %v2372
        %v2389 = vmul.f32 %v2373, %v2373
        %v2390 = vmul.f32 %v2374, %v2374
        %v2391 = vmul.f32 %v2375, %v2375
        %v2392 = vmul.f32 %v2376, %v2376
        %v2393 = vmul.f32 %v2377, %v2377
        %v2394 = vmul.f32 %v2378, %v2378
        %v2395 = vmul.f32 %v2379, %v2379
        %v2396 = vmul.f32 %v2380, %v2380
        %v2397 = vmul.f32 %v2381, %v2381
        %v2398 = vmul.f32 %v2382, %v2382
        %v2399 = vmul.f32 %v2383, %v2383
        %v2400 = vmul.f32 %v2384, %v2384
        %v2401 = vmul.f32 %v2385, %v2385
        %v2402 = vmul.f32 %v2386, %v2386
        %2403 = vadd.xlane.f32.xlu0 %v2387
        %v2404 = vpop.xlane.xlu0 %2403
        %2405 = vadd.xlane.f32.xlu0 %v2388
        %v2406 = vpop.xlane.xlu0 %2405
        %2407 = vadd.xlane.f32.xlu0 %v2389
        %v2408 = vpop.xlane.xlu0 %2407
        %2409 = vadd.xlane.f32.xlu0 %v2390
        %v2410 = vpop.xlane.xlu0 %2409
        %2411 = vadd.xlane.f32.xlu0 %v2391
        %v2412 = vpop.xlane.xlu0 %2411
        %2413 = vadd.xlane.f32.xlu0 %v2392
        %v2414 = vpop.xlane.xlu0 %2413
        %2415 = vadd.xlane.f32.xlu0 %v2393
        %v2416 = vpop.xlane.xlu0 %2415
        %2417 = vadd.xlane.f32.xlu0 %v2394
        %v2418 = vpop.xlane.xlu0 %2417
        %2419 = vadd.xlane.f32.xlu0 %v2395
        %v2420 = vpop.xlane.xlu0 %2419
        %2421 = vadd.xlane.f32.xlu0 %v2396
        %v2422 = vpop.xlane.xlu0 %2421
        %2423 = vadd.xlane.f32.xlu0 %v2397
        %v2424 = vpop.xlane.xlu0 %2423
        %2425 = vadd.xlane.f32.xlu0 %v2398
        %v2426 = vpop.xlane.xlu0 %2425
        %2427 = vadd.xlane.f32.xlu0 %v2399
        %v2428 = vpop.xlane.xlu0 %2427
        %2429 = vadd.xlane.f32.xlu0 %v2400
        %v2430 = vpop.xlane.xlu0 %2429
        %2431 = vadd.xlane.f32.xlu0 %v2401
        %v2432 = vpop.xlane.xlu0 %2431
        %2433 = vadd.xlane.f32.xlu0 %v2402
        %v2434 = vpop.xlane.xlu0 %2433
        %v2435 = vmul.f32 %v2404, %v639
        %v2436 = vmul.f32 %v2406, %v639
        %v2437 = vmul.f32 %v2408, %v639
        %v2438 = vmul.f32 %v2410, %v639
        %v2439 = vmul.f32 %v2412, %v639
        %v2440 = vmul.f32 %v2414, %v639
        %v2441 = vmul.f32 %v2416, %v639
        %v2442 = vmul.f32 %v2418, %v639
        %v2443 = vmul.f32 %v2420, %v639
        %v2444 = vmul.f32 %v2422, %v639
        %v2445 = vmul.f32 %v2424, %v639
        %v2446 = vmul.f32 %v2426, %v639
        %v2447 = vmul.f32 %v2428, %v639
        %v2448 = vmul.f32 %v2430, %v639
        %v2449 = vmul.f32 %v2432, %v639
        %v2450 = vmul.f32 %v2434, %v639
        %v2451 = vadd.f32 %v2435, 1e-05
        %v2452 = vadd.f32 %v2436, 1e-05
        %v2453 = vadd.f32 %v2437, 1e-05
        %v2454 = vadd.f32 %v2438, 1e-05
        %v2455 = vadd.f32 %v2439, 1e-05
        %v2456 = vadd.f32 %v2440, 1e-05
        %v2457 = vadd.f32 %v2441, 1e-05
        %v2458 = vadd.f32 %v2442, 1e-05
        %v2459 = vadd.f32 %v2443, 1e-05
        %v2460 = vadd.f32 %v2444, 1e-05
        %v2461 = vadd.f32 %v2445, 1e-05
        %v2462 = vadd.f32 %v2446, 1e-05
        %v2463 = vadd.f32 %v2447, 1e-05
        %v2464 = vadd.f32 %v2448, 1e-05
        %v2465 = vadd.f32 %v2449, 1e-05
        %v2466 = vadd.f32 %v2450, 1e-05
        %v2467 = vrsqrt.pop %v2451
        %v2468 = vmul.f32 %v2467, %v2451
        %v2469 = vmul.f32 %v2468, %v2467
        %v2470 = vmul.f32 0.5, %v2469
        %v2471 = vsub.f32 1.5, %v2470
        %v2472 = vmul.f32 %v2467, %v2471
        %vm2473 = vweird.f32 %v2451
        %vm2474 = vweird.f32 %v2467
        %vm2475 = vmor %vm2473, %vm2474
        %v2476 = vsel %vm2475, %v2467, %v2472
        %v2477 = vrsqrt.pop %v2452
        %v2478 = vmul.f32 %v2477, %v2452
        %v2479 = vmul.f32 %v2478, %v2477
        %v2480 = vmul.f32 0.5, %v2479
        %v2481 = vsub.f32 1.5, %v2480
        %v2482 = vmul.f32 %v2477, %v2481
        %vm2483 = vweird.f32 %v2452
        %vm2484 = vweird.f32 %v2477
        %vm2485 = vmor %vm2483, %vm2484
        %v2486 = vsel %vm2485, %v2477, %v2482
        %v2487 = vrsqrt.pop %v2453
        %v2488 = vmul.f32 %v2487, %v2453
        %v2489 = vmul.f32 %v2488, %v2487
        %v2490 = vmul.f32 0.5, %v2489
        %v2491 = vsub.f32 1.5, %v2490
        %v2492 = vmul.f32 %v2487, %v2491
        %vm2493 = vweird.f32 %v2453
        %vm2494 = vweird.f32 %v2487
        %vm2495 = vmor %vm2493, %vm2494
        %v2496 = vsel %vm2495, %v2487, %v2492
        %v2497 = vrsqrt.pop %v2454
        %v2498 = vmul.f32 %v2497, %v2454
        %v2499 = vmul.f32 %v2498, %v2497
        %v2500 = vmul.f32 0.5, %v2499
        %v2501 = vsub.f32 1.5, %v2500
        %v2502 = vmul.f32 %v2497, %v2501
        %vm2503 = vweird.f32 %v2454
        %vm2504 = vweird.f32 %v2497
        %vm2505 = vmor %vm2503, %vm2504
        %v2506 = vsel %vm2505, %v2497, %v2502
        %v2507 = vrsqrt.pop %v2455
        %v2508 = vmul.f32 %v2507, %v2455
        %v2509 = vmul.f32 %v2508, %v2507
        %v2510 = vmul.f32 0.5, %v2509
        %v2511 = vsub.f32 1.5, %v2510
        %v2512 = vmul.f32 %v2507, %v2511
        %vm2513 = vweird.f32 %v2455
        %vm2514 = vweird.f32 %v2507
        %vm2515 = vmor %vm2513, %vm2514
        %v2516 = vsel %vm2515, %v2507, %v2512
        %v2517 = vrsqrt.pop %v2456
        %v2518 = vmul.f32 %v2517, %v2456
        %v2519 = vmul.f32 %v2518, %v2517
        %v2520 = vmul.f32 0.5, %v2519
        %v2521 = vsub.f32 1.5, %v2520
        %v2522 = vmul.f32 %v2517, %v2521
        %vm2523 = vweird.f32 %v2456
        %vm2524 = vweird.f32 %v2517
        %vm2525 = vmor %vm2523, %vm2524
        %v2526 = vsel %vm2525, %v2517, %v2522
        %v2527 = vrsqrt.pop %v2457
        %v2528 = vmul.f32 %v2527, %v2457
        %v2529 = vmul.f32 %v2528, %v2527
        %v2530 = vmul.f32 0.5, %v2529
        %v2531 = vsub.f32 1.5, %v2530
        %v2532 = vmul.f32 %v2527, %v2531
        %vm2533 = vweird.f32 %v2457
        %vm2534 = vweird.f32 %v2527
        %vm2535 = vmor %vm2533, %vm2534
        %v2536 = vsel %vm2535, %v2527, %v2532
        %v2537 = vrsqrt.pop %v2458
        %v2538 = vmul.f32 %v2537, %v2458
        %v2539 = vmul.f32 %v2538, %v2537
        %v2540 = vmul.f32 0.5, %v2539
        %v2541 = vsub.f32 1.5, %v2540
        %v2542 = vmul.f32 %v2537, %v2541
        %vm2543 = vweird.f32 %v2458
        %vm2544 = vweird.f32 %v2537
        %vm2545 = vmor %vm2543, %vm2544
        %v2546 = vsel %vm2545, %v2537, %v2542
        %v2547 = vrsqrt.pop %v2459
        %v2548 = vmul.f32 %v2547, %v2459
        %v2549 = vmul.f32 %v2548, %v2547
        %v2550 = vmul.f32 0.5, %v2549
        %v2551 = vsub.f32 1.5, %v2550
        %v2552 = vmul.f32 %v2547, %v2551
        %vm2553 = vweird.f32 %v2459
        %vm2554 = vweird.f32 %v2547
        %vm2555 = vmor %vm2553, %vm2554
        %v2556 = vsel %vm2555, %v2547, %v2552
        %v2557 = vrsqrt.pop %v2460
        %v2558 = vmul.f32 %v2557, %v2460
        %v2559 = vmul.f32 %v2558, %v2557
        %v2560 = vmul.f32 0.5, %v2559
        %v2561 = vsub.f32 1.5, %v2560
        %v2562 = vmul.f32 %v2557, %v2561
        %vm2563 = vweird.f32 %v2460
        %vm2564 = vweird.f32 %v2557
        %vm2565 = vmor %vm2563, %vm2564
        %v2566 = vsel %vm2565, %v2557, %v2562
        %v2567 = vrsqrt.pop %v2461
        %v2568 = vmul.f32 %v2567, %v2461
        %v2569 = vmul.f32 %v2568, %v2567
        %v2570 = vmul.f32 0.5, %v2569
        %v2571 = vsub.f32 1.5, %v2570
        %v2572 = vmul.f32 %v2567, %v2571
        %vm2573 = vweird.f32 %v2461
        %vm2574 = vweird.f32 %v2567
        %vm2575 = vmor %vm2573, %vm2574
        %v2576 = vsel %vm2575, %v2567, %v2572
        %v2577 = vrsqrt.pop %v2462
        %v2578 = vmul.f32 %v2577, %v2462
        %v2579 = vmul.f32 %v2578, %v2577
        %v2580 = vmul.f32 0.5, %v2579
        %v2581 = vsub.f32 1.5, %v2580
        %v2582 = vmul.f32 %v2577, %v2581
        %vm2583 = vweird.f32 %v2462
        %vm2584 = vweird.f32 %v2577
        %vm2585 = vmor %vm2583, %vm2584
        %v2586 = vsel %vm2585, %v2577, %v2582
        %v2587 = vrsqrt.pop %v2463
        %v2588 = vmul.f32 %v2587, %v2463
        %v2589 = vmul.f32 %v2588, %v2587
        %v2590 = vmul.f32 0.5, %v2589
        %v2591 = vsub.f32 1.5, %v2590
        %v2592 = vmul.f32 %v2587, %v2591
        %vm2593 = vweird.f32 %v2463
        %vm2594 = vweird.f32 %v2587
        %vm2595 = vmor %vm2593, %vm2594
        %v2596 = vsel %vm2595, %v2587, %v2592
        %v2597 = vrsqrt.pop %v2464
        %v2598 = vmul.f32 %v2597, %v2464
        %v2599 = vmul.f32 %v2598, %v2597
        %v2600 = vmul.f32 0.5, %v2599
        %v2601 = vsub.f32 1.5, %v2600
        %v2602 = vmul.f32 %v2597, %v2601
        %vm2603 = vweird.f32 %v2464
        %vm2604 = vweird.f32 %v2597
        %vm2605 = vmor %vm2603, %vm2604
        %v2606 = vsel %vm2605, %v2597, %v2602
        %v2607 = vrsqrt.pop %v2465
        %v2608 = vmul.f32 %v2607, %v2465
        %v2609 = vmul.f32 %v2608, %v2607
        %v2610 = vmul.f32 0.5, %v2609
        %v2611 = vsub.f32 1.5, %v2610
        %v2612 = vmul.f32 %v2607, %v2611
        %vm2613 = vweird.f32 %v2465
        %vm2614 = vweird.f32 %v2607
        %vm2615 = vmor %vm2613, %vm2614
        %v2616 = vsel %vm2615, %v2607, %v2612
        %v2617 = vrsqrt.pop %v2466
        %v2618 = vmul.f32 %v2617, %v2466
        %v2619 = vmul.f32 %v2618, %v2617
        %v2620 = vmul.f32 0.5, %v2619
        %v2621 = vsub.f32 1.5, %v2620
        %v2622 = vmul.f32 %v2617, %v2621
        %vm2623 = vweird.f32 %v2466
        %vm2624 = vweird.f32 %v2617
        %vm2625 = vmor %vm2623, %vm2624
        %v2626 = vsel %vm2625, %v2617, %v2622
        %v2627 = vmul.f32 %v2371, %v2476
        %v2628 = vmul.f32 %v2372, %v2486
        %v2629 = vmul.f32 %v2373, %v2496
        %v2630 = vmul.f32 %v2374, %v2506
        %v2631 = vmul.f32 %v2375, %v2516
        %v2632 = vmul.f32 %v2376, %v2526
        %v2633 = vmul.f32 %v2377, %v2536
        %v2634 = vmul.f32 %v2378, %v2546
        %v2635 = vmul.f32 %v2379, %v2556
        %v2636 = vmul.f32 %v2380, %v2566
        %v2637 = vmul.f32 %v2381, %v2576
        %v2638 = vmul.f32 %v2382, %v2586
        %v2639 = vmul.f32 %v2383, %v2596
        %v2640 = vmul.f32 %v2384, %v2606
        %v2641 = vmul.f32 %v2385, %v2616
        %v2642 = vmul.f32 %v2386, %v2626
        %v2643 = vperm.slane %v2321, 0
        %v2644 = vmul.f32 %v2627, %v2643
        %v2645 = vmul.f32 %v2628, %v2643
        %v2646 = vmul.f32 %v2629, %v2643
        %v2647 = vmul.f32 %v2630, %v2643
        %v2648 = vmul.f32 %v2631, %v2643
        %v2649 = vmul.f32 %v2632, %v2643
        %v2650 = vmul.f32 %v2633, %v2643
        %v2651 = vmul.f32 %v2634, %v2643
        %v2652 = vmul.f32 %v2635, %v2643
        %v2653 = vmul.f32 %v2636, %v2643
        %v2654 = vmul.f32 %v2637, %v2643
        %v2655 = vmul.f32 %v2638, %v2643
        %v2656 = vmul.f32 %v2639, %v2643
        %v2657 = vmul.f32 %v2640, %v2643
        %v2658 = vmul.f32 %v2641, %v2643
        %v2659 = vmul.f32 %v2642, %v2643
        %v2660 = vperm.slane %v2322, 0
        %v2661 = vadd.f32 %v2644, %v2660
        %v2662 = vadd.f32 %v2645, %v2660
        %v2663 = vadd.f32 %v2646, %v2660
        %v2664 = vadd.f32 %v2647, %v2660
        %v2665 = vadd.f32 %v2648, %v2660
        %v2666 = vadd.f32 %v2649, %v2660
        %v2667 = vadd.f32 %v2650, %v2660
        %v2668 = vadd.f32 %v2651, %v2660
        %v2669 = vadd.f32 %v2652, %v2660
        %v2670 = vadd.f32 %v2653, %v2660
        %v2671 = vadd.f32 %v2654, %v2660
        %v2672 = vadd.f32 %v2655, %v2660
        %v2673 = vadd.f32 %v2656, %v2660
        %v2674 = vadd.f32 %v2657, %v2660
        %v2675 = vadd.f32 %v2658, %v2660
        %v2676 = vadd.f32 %v2659, %v2660
        %v2677 = vmax.f32 %v2661, 0.0
        %v2678 = vmax.f32 %v2662, 0.0
        %v2679 = vmax.f32 %v2663, 0.0
        %v2680 = vmax.f32 %v2664, 0.0
        %v2681 = vmax.f32 %v2665, 0.0
        %v2682 = vmax.f32 %v2666, 0.0
        %v2683 = vmax.f32 %v2667, 0.0
        %v2684 = vmax.f32 %v2668, 0.0
        %v2685 = vmax.f32 %v2669, 0.0
        %v2686 = vmax.f32 %v2670, 0.0
        %v2687 = vmax.f32 %v2671, 0.0
        %v2688 = vmax.f32 %v2672, 0.0
        %v2689 = vmax.f32 %v2673, 0.0
        %v2690 = vmax.f32 %v2674, 0.0
        %v2691 = vmax.f32 %v2675, 0.0
        %v2692 = vmax.f32 %v2676, 0.0
        %v2693 = vpack.c.bf16 %v2678, %v2677
        %v2694 = vpack.c.bf16 %v2680, %v2679
        %v2695 = vpack.c.bf16 %v2682, %v2681
        %v2696 = vpack.c.bf16 %v2684, %v2683
        %v2697 = vpack.c.bf16 %v2686, %v2685
        %v2698 = vpack.c.bf16 %v2688, %v2687
        %v2699 = vpack.c.bf16 %v2690, %v2689
        %v2700 = vpack.c.bf16 %v2692, %v2691
        %v2701 = vld [vmem:[#allocation15] sm:$0xf]
        %v2702 = vld [vmem:[#allocation15 + $0x4] sm:$0xf]
        %v2703 = vld [vmem:[#allocation15 + $0x8] sm:$0xf]
        %v2704 = vld [vmem:[#allocation15 + $0xc] sm:$0xf]
        %v2705 = vld [vmem:[#allocation15 + $0x10] sm:$0xf]
        %v2706 = vld [vmem:[#allocation15 + $0x14] sm:$0xf]
        %v2707 = vld [vmem:[#allocation15 + $0x18] sm:$0xf]
        %v2708 = vld [vmem:[#allocation15 + $0x1c] sm:$0xf]
        %v2709 = vld [vmem:[#allocation15 + $0x20] sm:$0xf]
        %v2710 = vld [vmem:[#allocation15 + $0x24] sm:$0xf]
        %v2711 = vld [vmem:[#allocation15 + $0x28] sm:$0xf]
        %v2712 = vld [vmem:[#allocation15 + $0x2c] sm:$0xf]
        %v2713 = vld [vmem:[#allocation15 + $0x30] sm:$0xf]
        %v2714 = vld [vmem:[#allocation15 + $0x34] sm:$0xf]
        %v2715 = vld [vmem:[#allocation15 + $0x38] sm:$0xf]
        %v2716 = vld [vmem:[#allocation15 + $0x3c] sm:$0xf]
        %v2717 = vld [vmem:[#allocation17] sm:$0x1]
        %v2718 = vperm.slane %v2717, 0
        %v2735 = vunpack.c.l.b16 %v2701
        %v2736 = vunpack.c.l.b16 %v2702
        %v2737 = vunpack.c.l.b16 %v2703
        %v2738 = vunpack.c.l.b16 %v2704
        %v2739 = vunpack.c.l.b16 %v2705
        %v2740 = vunpack.c.l.b16 %v2706
        %v2741 = vunpack.c.l.b16 %v2707
        %v2742 = vunpack.c.l.b16 %v2708
        %v2743 = vunpack.c.l.b16 %v2709
        %v2744 = vunpack.c.l.b16 %v2710
        %v2745 = vunpack.c.l.b16 %v2711
        %v2746 = vunpack.c.l.b16 %v2712
        %v2747 = vunpack.c.l.b16 %v2713
        %v2748 = vunpack.c.l.b16 %v2714
        %v2749 = vunpack.c.l.b16 %v2715
        %v2750 = vunpack.c.l.b16 %v2716
        %v2751 = vpack.c.b16 %v2736, %v2735
        %v2752 = vpack.c.b16 %v2738, %v2737
        %v2753 = vpack.c.b16 %v2740, %v2739
        %v2754 = vpack.c.b16 %v2742, %v2741
        %v2755 = vpack.c.b16 %v2744, %v2743
        %v2756 = vpack.c.b16 %v2746, %v2745
        %v2757 = vpack.c.b16 %v2748, %v2747
        %v2758 = vpack.c.b16 %v2750, %v2749
        %2767 = vmatpush.bf16.msra.mxu0 %v2758
        %2768 = vmatpush.bf16.msra.mxu0 %v2757
        %2769 = vmatpush.bf16.msra.mxu0 %v2756
        %2770 = vmatpush.bf16.msra.mxu0 %v2755
        %2771 = vmatpush.bf16.msra.mxu0 %v2754
        %2772 = vmatpush.bf16.msra.mxu0 %v2753
        %2773 = vmatpush.bf16.msra.mxu0 %v2752
        %2774 = vmatpush.bf16.msra.mxu0 %v2751
        %2775 = vmatmul.bf16.gmra.mxu0 %v2693
        %v2776 = vpop.f32.mrf.mxu0
        %v2777 = vadd.f32 %v2718, %v2776
        %v2778 = vpop.f32.mrf.mxu0
        %v2779 = vadd.f32 %v2718, %v2778
        %2780 = vmatmul.bf16.gmra.mxu0 %v2694
        %v2781 = vpop.f32.mrf.mxu0
        %v2782 = vadd.f32 %v2718, %v2781
        %v2783 = vpop.f32.mrf.mxu0
        %v2784 = vadd.f32 %v2718, %v2783
        %2785 = vmatmul.bf16.gmra.mxu0 %v2695
        %v2786 = vpop.f32.mrf.mxu0
        %v2787 = vadd.f32 %v2718, %v2786
        %v2788 = vpop.f32.mrf.mxu0
        %v2789 = vadd.f32 %v2718, %v2788
        %2790 = vmatmul.bf16.gmra.mxu0 %v2696
        %v2791 = vpop.f32.mrf.mxu0
        %v2792 = vadd.f32 %v2718, %v2791
        %v2793 = vpop.f32.mrf.mxu0
        %v2794 = vadd.f32 %v2718, %v2793
        %2795 = vmatmul.bf16.gmra.mxu0 %v2697
        %v2796 = vpop.f32.mrf.mxu0
        %v2797 = vadd.f32 %v2718, %v2796
        %v2798 = vpop.f32.mrf.mxu0
        %v2799 = vadd.f32 %v2718, %v2798
        %2800 = vmatmul.bf16.gmra.mxu0 %v2698
        %v2801 = vpop.f32.mrf.mxu0
        %v2802 = vadd.f32 %v2718, %v2801
        %v2803 = vpop.f32.mrf.mxu0
        %v2804 = vadd.f32 %v2718, %v2803
        %2805 = vmatmul.bf16.gmra.mxu0 %v2699
        %v2806 = vpop.f32.mrf.mxu0
        %v2807 = vadd.f32 %v2718, %v2806
        %v2808 = vpop.f32.mrf.mxu0
        %v2809 = vadd.f32 %v2718, %v2808
        %2810 = vmatmul.bf16.gmra.mxu0 %v2700
        %v2811 = vpop.f32.mrf.mxu0
        %v2812 = vadd.f32 %v2718, %v2811
        %v2813 = vpop.f32.mrf.mxu0
        %v2814 = vadd.f32 %v2718, %v2813
        %2815 = vdwg.mxu0
        %v2816 = vld [vmem:[%s7 + $0x1] sm:$0x1]
        %v2817 = vld [vmem:[#allocation14 + $0x1] sm:$0x1]
        %2818 = vadd.xlane.f32.xlu0 %v2777
        %v2819 = vpop.xlane.xlu0 %2818
        %2820 = vadd.xlane.f32.xlu0 %v2779
        %v2821 = vpop.xlane.xlu0 %2820
        %2822 = vadd.xlane.f32.xlu0 %v2782
        %v2823 = vpop.xlane.xlu0 %2822
        %2824 = vadd.xlane.f32.xlu0 %v2784
        %v2825 = vpop.xlane.xlu0 %2824
        %2826 = vadd.xlane.f32.xlu0 %v2787
        %v2827 = vpop.xlane.xlu0 %2826
        %2828 = vadd.xlane.f32.xlu0 %v2789
        %v2829 = vpop.xlane.xlu0 %2828
        %2830 = vadd.xlane.f32.xlu0 %v2792
        %v2831 = vpop.xlane.xlu0 %2830
        %2832 = vadd.xlane.f32.xlu0 %v2794
        %v2833 = vpop.xlane.xlu0 %2832
        %2834 = vadd.xlane.f32.xlu0 %v2797
        %v2835 = vpop.xlane.xlu0 %2834
        %2836 = vadd.xlane.f32.xlu0 %v2799
        %v2837 = vpop.xlane.xlu0 %2836
        %2838 = vadd.xlane.f32.xlu0 %v2802
        %v2839 = vpop.xlane.xlu0 %2838
        %2840 = vadd.xlane.f32.xlu0 %v2804
        %v2841 = vpop.xlane.xlu0 %2840
        %2842 = vadd.xlane.f32.xlu0 %v2807
        %v2843 = vpop.xlane.xlu0 %2842
        %2844 = vadd.xlane.f32.xlu0 %v2809
        %v2845 = vpop.xlane.xlu0 %2844
        %2846 = vadd.xlane.f32.xlu0 %v2812
        %v2847 = vpop.xlane.xlu0 %2846
        %2848 = vadd.xlane.f32.xlu0 %v2814
        %v2849 = vpop.xlane.xlu0 %2848
        %v2850 = vmul.f32 %v2819, %v639
        %v2851 = vmul.f32 %v2821, %v639
        %v2852 = vmul.f32 %v2823, %v639
        %v2853 = vmul.f32 %v2825, %v639
        %v2854 = vmul.f32 %v2827, %v639
        %v2855 = vmul.f32 %v2829, %v639
        %v2856 = vmul.f32 %v2831, %v639
        %v2857 = vmul.f32 %v2833, %v639
        %v2858 = vmul.f32 %v2835, %v639
        %v2859 = vmul.f32 %v2837, %v639
        %v2860 = vmul.f32 %v2839, %v639
        %v2861 = vmul.f32 %v2841, %v639
        %v2862 = vmul.f32 %v2843, %v639
        %v2863 = vmul.f32 %v2845, %v639
        %v2864 = vmul.f32 %v2847, %v639
        %v2865 = vmul.f32 %v2849, %v639
        %v2866 = vsub.f32 %v2777, %v2850
        %v2867 = vsub.f32 %v2779, %v2851
        %v2868 = vsub.f32 %v2782, %v2852
        %v2869 = vsub.f32 %v2784, %v2853
        %v2870 = vsub.f32 %v2787, %v2854
        %v2871 = vsub.f32 %v2789, %v2855
        %v2872 = vsub.f32 %v2792, %v2856
        %v2873 = vsub.f32 %v2794, %v2857
        %v2874 = vsub.f32 %v2797, %v2858
        %v2875 = vsub.f32 %v2799, %v2859
        %v2876 = vsub.f32 %v2802, %v2860
        %v2877 = vsub.f32 %v2804, %v2861
        %v2878 = vsub.f32 %v2807, %v2862
        %v2879 = vsub.f32 %v2809, %v2863
        %v2880 = vsub.f32 %v2812, %v2864
        %v2881 = vsub.f32 %v2814, %v2865
        %v2882 = vmul.f32 %v2866, %v2866
        %v2883 = vmul.f32 %v2867, %v2867
        %v2884 = vmul.f32 %v2868, %v2868
        %v2885 = vmul.f32 %v2869, %v2869
        %v2886 = vmul.f32 %v2870, %v2870
        %v2887 = vmul.f32 %v2871, %v2871
        %v2888 = vmul.f32 %v2872, %v2872
        %v2889 = vmul.f32 %v2873, %v2873
        %v2890 = vmul.f32 %v2874, %v2874
        %v2891 = vmul.f32 %v2875, %v2875
        %v2892 = vmul.f32 %v2876, %v2876
        %v2893 = vmul.f32 %v2877, %v2877
        %v2894 = vmul.f32 %v2878, %v2878
        %v2895 = vmul.f32 %v2879, %v2879
        %v2896 = vmul.f32 %v2880, %v2880
        %v2897 = vmul.f32 %v2881, %v2881
        %2898 = vadd.xlane.f32.xlu0 %v2882
        %v2899 = vpop.xlane.xlu0 %2898
        %2900 = vadd.xlane.f32.xlu0 %v2883
        %v2901 = vpop.xlane.xlu0 %2900
        %2902 = vadd.xlane.f32.xlu0 %v2884
        %v2903 = vpop.xlane.xlu0 %2902
        %2904 = vadd.xlane.f32.xlu0 %v2885
        %v2905 = vpop.xlane.xlu0 %2904
        %2906 = vadd.xlane.f32.xlu0 %v2886
        %v2907 = vpop.xlane.xlu0 %2906
        %2908 = vadd.xlane.f32.xlu0 %v2887
        %v2909 = vpop.xlane.xlu0 %2908
        %2910 = vadd.xlane.f32.xlu0 %v2888
        %v2911 = vpop.xlane.xlu0 %2910
        %2912 = vadd.xlane.f32.xlu0 %v2889
        %v2913 = vpop.xlane.xlu0 %2912
        %2914 = vadd.xlane.f32.xlu0 %v2890
        %v2915 = vpop.xlane.xlu0 %2914
        %2916 = vadd.xlane.f32.xlu0 %v2891
        %v2917 = vpop.xlane.xlu0 %2916
        %2918 = vadd.xlane.f32.xlu0 %v2892
        %v2919 = vpop.xlane.xlu0 %2918
        %2920 = vadd.xlane.f32.xlu0 %v2893
        %v2921 = vpop.xlane.xlu0 %2920
        %2922 = vadd.xlane.f32.xlu0 %v2894
        %v2923 = vpop.xlane.xlu0 %2922
        %2924 = vadd.xlane.f32.xlu0 %v2895
        %v2925 = vpop.xlane.xlu0 %2924
        %2926 = vadd.xlane.f32.xlu0 %v2896
        %v2927 = vpop.xlane.xlu0 %2926
        %2928 = vadd.xlane.f32.xlu0 %v2897
        %v2929 = vpop.xlane.xlu0 %2928
        %v2930 = vmul.f32 %v2899, %v639
        %v2931 = vmul.f32 %v2901, %v639
        %v2932 = vmul.f32 %v2903, %v639
        %v2933 = vmul.f32 %v2905, %v639
        %v2934 = vmul.f32 %v2907, %v639
        %v2935 = vmul.f32 %v2909, %v639
        %v2936 = vmul.f32 %v2911, %v639
        %v2937 = vmul.f32 %v2913, %v639
        %v2938 = vmul.f32 %v2915, %v639
        %v2939 = vmul.f32 %v2917, %v639
        %v2940 = vmul.f32 %v2919, %v639
        %v2941 = vmul.f32 %v2921, %v639
        %v2942 = vmul.f32 %v2923, %v639
        %v2943 = vmul.f32 %v2925, %v639
        %v2944 = vmul.f32 %v2927, %v639
        %v2945 = vmul.f32 %v2929, %v639
        %v2946 = vadd.f32 %v2930, 1e-05
        %v2947 = vadd.f32 %v2931, 1e-05
        %v2948 = vadd.f32 %v2932, 1e-05
        %v2949 = vadd.f32 %v2933, 1e-05
        %v2950 = vadd.f32 %v2934, 1e-05
        %v2951 = vadd.f32 %v2935, 1e-05
        %v2952 = vadd.f32 %v2936, 1e-05
        %v2953 = vadd.f32 %v2937, 1e-05
        %v2954 = vadd.f32 %v2938, 1e-05
        %v2955 = vadd.f32 %v2939, 1e-05
        %v2956 = vadd.f32 %v2940, 1e-05
        %v2957 = vadd.f32 %v2941, 1e-05
        %v2958 = vadd.f32 %v2942, 1e-05
        %v2959 = vadd.f32 %v2943, 1e-05
        %v2960 = vadd.f32 %v2944, 1e-05
        %v2961 = vadd.f32 %v2945, 1e-05
        %v2962 = vrsqrt.pop %v2946
        %v2963 = vmul.f32 %v2962, %v2946
        %v2964 = vmul.f32 %v2963, %v2962
        %v2965 = vmul.f32 0.5, %v2964
        %v2966 = vsub.f32 1.5, %v2965
        %v2967 = vmul.f32 %v2962, %v2966
        %vm2968 = vweird.f32 %v2946
        %vm2969 = vweird.f32 %v2962
        %vm2970 = vmor %vm2968, %vm2969
        %v2971 = vsel %vm2970, %v2962, %v2967
        %v2972 = vrsqrt.pop %v2947
        %v2973 = vmul.f32 %v2972, %v2947
        %v2974 = vmul.f32 %v2973, %v2972
        %v2975 = vmul.f32 0.5, %v2974
        %v2976 = vsub.f32 1.5, %v2975
        %v2977 = vmul.f32 %v2972, %v2976
        %vm2978 = vweird.f32 %v2947
        %vm2979 = vweird.f32 %v2972
        %vm2980 = vmor %vm2978, %vm2979
        %v2981 = vsel %vm2980, %v2972, %v2977
        %v2982 = vrsqrt.pop %v2948
        %v2983 = vmul.f32 %v2982, %v2948
        %v2984 = vmul.f32 %v2983, %v2982
        %v2985 = vmul.f32 0.5, %v2984
        %v2986 = vsub.f32 1.5, %v2985
        %v2987 = vmul.f32 %v2982, %v2986
        %vm2988 = vweird.f32 %v2948
        %vm2989 = vweird.f32 %v2982
        %vm2990 = vmor %vm2988, %vm2989
        %v2991 = vsel %vm2990, %v2982, %v2987
        %v2992 = vrsqrt.pop %v2949
        %v2993 = vmul.f32 %v2992, %v2949
        %v2994 = vmul.f32 %v2993, %v2992
        %v2995 = vmul.f32 0.5, %v2994
        %v2996 = vsub.f32 1.5, %v2995
        %v2997 = vmul.f32 %v2992, %v2996
        %vm2998 = vweird.f32 %v2949
        %vm2999 = vweird.f32 %v2992
        %vm3000 = vmor %vm2998, %vm2999
        %v3001 = vsel %vm3000, %v2992, %v2997
        %v3002 = vrsqrt.pop %v2950
        %v3003 = vmul.f32 %v3002, %v2950
        %v3004 = vmul.f32 %v3003, %v3002
        %v3005 = vmul.f32 0.5, %v3004
        %v3006 = vsub.f32 1.5, %v3005
        %v3007 = vmul.f32 %v3002, %v3006
        %vm3008 = vweird.f32 %v2950
        %vm3009 = vweird.f32 %v3002
        %vm3010 = vmor %vm3008, %vm3009
        %v3011 = vsel %vm3010, %v3002, %v3007
        %v3012 = vrsqrt.pop %v2951
        %v3013 = vmul.f32 %v3012, %v2951
        %v3014 = vmul.f32 %v3013, %v3012
        %v3015 = vmul.f32 0.5, %v3014
        %v3016 = vsub.f32 1.5, %v3015
        %v3017 = vmul.f32 %v3012, %v3016
        %vm3018 = vweird.f32 %v2951
        %vm3019 = vweird.f32 %v3012
        %vm3020 = vmor %vm3018, %vm3019
        %v3021 = vsel %vm3020, %v3012, %v3017
        %v3022 = vrsqrt.pop %v2952
        %v3023 = vmul.f32 %v3022, %v2952
        %v3024 = vmul.f32 %v3023, %v3022
        %v3025 = vmul.f32 0.5, %v3024
        %v3026 = vsub.f32 1.5, %v3025
        %v3027 = vmul.f32 %v3022, %v3026
        %vm3028 = vweird.f32 %v2952
        %vm3029 = vweird.f32 %v3022
        %vm3030 = vmor %vm3028, %vm3029
        %v3031 = vsel %vm3030, %v3022, %v3027
        %v3032 = vrsqrt.pop %v2953
        %v3033 = vmul.f32 %v3032, %v2953
        %v3034 = vmul.f32 %v3033, %v3032
        %v3035 = vmul.f32 0.5, %v3034
        %v3036 = vsub.f32 1.5, %v3035
        %v3037 = vmul.f32 %v3032, %v3036
        %vm3038 = vweird.f32 %v2953
        %vm3039 = vweird.f32 %v3032
        %vm3040 = vmor %vm3038, %vm3039
        %v3041 = vsel %vm3040, %v3032, %v3037
        %v3042 = vrsqrt.pop %v2954
        %v3043 = vmul.f32 %v3042, %v2954
        %v3044 = vmul.f32 %v3043, %v3042
        %v3045 = vmul.f32 0.5, %v3044
        %v3046 = vsub.f32 1.5, %v3045
        %v3047 = vmul.f32 %v3042, %v3046
        %vm3048 = vweird.f32 %v2954
        %vm3049 = vweird.f32 %v3042
        %vm3050 = vmor %vm3048, %vm3049
        %v3051 = vsel %vm3050, %v3042, %v3047
        %v3052 = vrsqrt.pop %v2955
        %v3053 = vmul.f32 %v3052, %v2955
        %v3054 = vmul.f32 %v3053, %v3052
        %v3055 = vmul.f32 0.5, %v3054
        %v3056 = vsub.f32 1.5, %v3055
        %v3057 = vmul.f32 %v3052, %v3056
        %vm3058 = vweird.f32 %v2955
        %vm3059 = vweird.f32 %v3052
        %vm3060 = vmor %vm3058, %vm3059
        %v3061 = vsel %vm3060, %v3052, %v3057
        %v3062 = vrsqrt.pop %v2956
        %v3063 = vmul.f32 %v3062, %v2956
        %v3064 = vmul.f32 %v3063, %v3062
        %v3065 = vmul.f32 0.5, %v3064
        %v3066 = vsub.f32 1.5, %v3065
        %v3067 = vmul.f32 %v3062, %v3066
        %vm3068 = vweird.f32 %v2956
        %vm3069 = vweird.f32 %v3062
        %vm3070 = vmor %vm3068, %vm3069
        %v3071 = vsel %vm3070, %v3062, %v3067
        %v3072 = vrsqrt.pop %v2957
        %v3073 = vmul.f32 %v3072, %v2957
        %v3074 = vmul.f32 %v3073, %v3072
        %v3075 = vmul.f32 0.5, %v3074
        %v3076 = vsub.f32 1.5, %v3075
        %v3077 = vmul.f32 %v3072, %v3076
        %vm3078 = vweird.f32 %v2957
        %vm3079 = vweird.f32 %v3072
        %vm3080 = vmor %vm3078, %vm3079
        %v3081 = vsel %vm3080, %v3072, %v3077
        %v3082 = vrsqrt.pop %v2958
        %v3083 = vmul.f32 %v3082, %v2958
        %v3084 = vmul.f32 %v3083, %v3082
        %v3085 = vmul.f32 0.5, %v3084
        %v3086 = vsub.f32 1.5, %v3085
        %v3087 = vmul.f32 %v3082, %v3086
        %vm3088 = vweird.f32 %v2958
        %vm3089 = vweird.f32 %v3082
        %vm3090 = vmor %vm3088, %vm3089
        %v3091 = vsel %vm3090, %v3082, %v3087
        %v3092 = vrsqrt.pop %v2959
        %v3093 = vmul.f32 %v3092, %v2959
        %v3094 = vmul.f32 %v3093, %v3092
        %v3095 = vmul.f32 0.5, %v3094
        %v3096 = vsub.f32 1.5, %v3095
        %v3097 = vmul.f32 %v3092, %v3096
        %vm3098 = vweird.f32 %v2959
        %vm3099 = vweird.f32 %v3092
        %vm3100 = vmor %vm3098, %vm3099
        %v3101 = vsel %vm3100, %v3092, %v3097
        %v3102 = vrsqrt.pop %v2960
        %v3103 = vmul.f32 %v3102, %v2960
        %v3104 = vmul.f32 %v3103, %v3102
        %v3105 = vmul.f32 0.5, %v3104
        %v3106 = vsub.f32 1.5, %v3105
        %v3107 = vmul.f32 %v3102, %v3106
        %vm3108 = vweird.f32 %v2960
        %vm3109 = vweird.f32 %v3102
        %vm3110 = vmor %vm3108, %vm3109
        %v3111 = vsel %vm3110, %v3102, %v3107
        %v3112 = vrsqrt.pop %v2961
        %v3113 = vmul.f32 %v3112, %v2961
        %v3114 = vmul.f32 %v3113, %v3112
        %v3115 = vmul.f32 0.5, %v3114
        %v3116 = vsub.f32 1.5, %v3115
        %v3117 = vmul.f32 %v3112, %v3116
        %vm3118 = vweird.f32 %v2961
        %vm3119 = vweird.f32 %v3112
        %vm3120 = vmor %vm3118, %vm3119
        %v3121 = vsel %vm3120, %v3112, %v3117
        %v3122 = vmul.f32 %v2866, %v2971
        %v3123 = vmul.f32 %v2867, %v2981
        %v3124 = vmul.f32 %v2868, %v2991
        %v3125 = vmul.f32 %v2869, %v3001
        %v3126 = vmul.f32 %v2870, %v3011
        %v3127 = vmul.f32 %v2871, %v3021
        %v3128 = vmul.f32 %v2872, %v3031
        %v3129 = vmul.f32 %v2873, %v3041
        %v3130 = vmul.f32 %v2874, %v3051
        %v3131 = vmul.f32 %v2875, %v3061
        %v3132 = vmul.f32 %v2876, %v3071
        %v3133 = vmul.f32 %v2877, %v3081
        %v3134 = vmul.f32 %v2878, %v3091
        %v3135 = vmul.f32 %v2879, %v3101
        %v3136 = vmul.f32 %v2880, %v3111
        %v3137 = vmul.f32 %v2881, %v3121
        %v3138 = vperm.slane %v2816, 0
        %v3139 = vmul.f32 %v3122, %v3138
        %v3140 = vmul.f32 %v3123, %v3138
        %v3141 = vmul.f32 %v3124, %v3138
        %v3142 = vmul.f32 %v3125, %v3138
        %v3143 = vmul.f32 %v3126, %v3138
        %v3144 = vmul.f32 %v3127, %v3138
        %v3145 = vmul.f32 %v3128, %v3138
        %v3146 = vmul.f32 %v3129, %v3138
        %v3147 = vmul.f32 %v3130, %v3138
        %v3148 = vmul.f32 %v3131, %v3138
        %v3149 = vmul.f32 %v3132, %v3138
        %v3150 = vmul.f32 %v3133, %v3138
        %v3151 = vmul.f32 %v3134, %v3138
        %v3152 = vmul.f32 %v3135, %v3138
        %v3153 = vmul.f32 %v3136, %v3138
        %v3154 = vmul.f32 %v3137, %v3138
        %v3155 = vperm.slane %v2817, 0
        %v3156 = vadd.f32 %v3139, %v3155
        %v3157 = vadd.f32 %v3140, %v3155
        %v3158 = vadd.f32 %v3141, %v3155
        %v3159 = vadd.f32 %v3142, %v3155
        %v3160 = vadd.f32 %v3143, %v3155
        %v3161 = vadd.f32 %v3144, %v3155
        %v3162 = vadd.f32 %v3145, %v3155
        %v3163 = vadd.f32 %v3146, %v3155
        %v3164 = vadd.f32 %v3147, %v3155
        %v3165 = vadd.f32 %v3148, %v3155
        %v3166 = vadd.f32 %v3149, %v3155
        %v3167 = vadd.f32 %v3150, %v3155
        %v3168 = vadd.f32 %v3151, %v3155
        %v3169 = vadd.f32 %v3152, %v3155
        %v3170 = vadd.f32 %v3153, %v3155
        %v3171 = vadd.f32 %v3154, %v3155
        %v3172 = vmax.f32 %v3156, 0.0
        %v3173 = vmax.f32 %v3157, 0.0
        %v3174 = vmax.f32 %v3158, 0.0
        %v3175 = vmax.f32 %v3159, 0.0
        %v3176 = vmax.f32 %v3160, 0.0
        %v3177 = vmax.f32 %v3161, 0.0
        %v3178 = vmax.f32 %v3162, 0.0
        %v3179 = vmax.f32 %v3163, 0.0
        %v3180 = vmax.f32 %v3164, 0.0
        %v3181 = vmax.f32 %v3165, 0.0
        %v3182 = vmax.f32 %v3166, 0.0
        %v3183 = vmax.f32 %v3167, 0.0
        %v3184 = vmax.f32 %v3168, 0.0
        %v3185 = vmax.f32 %v3169, 0.0
        %v3186 = vmax.f32 %v3170, 0.0
        %v3187 = vmax.f32 %v3171, 0.0
        %v3188 = vpack.c.bf16 %v3173, %v3172
        %v3189 = vpack.c.bf16 %v3175, %v3174
        %v3190 = vpack.c.bf16 %v3177, %v3176
        %v3191 = vpack.c.bf16 %v3179, %v3178
        %v3192 = vpack.c.bf16 %v3181, %v3180
        %v3193 = vpack.c.bf16 %v3183, %v3182
        %v3194 = vpack.c.bf16 %v3185, %v3184
        %v3195 = vpack.c.bf16 %v3187, %v3186
        %s3196 = scalar_lea.vmem [#allocation15], 64
        %v3197 = vld [vmem:[%s3196] sm:$0xf]
        %v3198 = vld [vmem:[%s3196 + $0x4] sm:$0xf]
        %v3199 = vld [vmem:[%s3196 + $0x8] sm:$0xf]
        %v3200 = vld [vmem:[%s3196 + $0xc] sm:$0xf]
        %v3201 = vld [vmem:[%s3196 + $0x10] sm:$0xf]
        %v3202 = vld [vmem:[%s3196 + $0x14] sm:$0xf]
        %v3203 = vld [vmem:[%s3196 + $0x18] sm:$0xf]
        %v3204 = vld [vmem:[%s3196 + $0x1c] sm:$0xf]
        %v3205 = vld [vmem:[%s3196 + $0x20] sm:$0xf]
        %v3206 = vld [vmem:[%s3196 + $0x24] sm:$0xf]
        %v3207 = vld [vmem:[%s3196 + $0x28] sm:$0xf]
        %v3208 = vld [vmem:[%s3196 + $0x2c] sm:$0xf]
        %v3209 = vld [vmem:[%s3196 + $0x30] sm:$0xf]
        %v3210 = vld [vmem:[%s3196 + $0x34] sm:$0xf]
        %v3211 = vld [vmem:[%s3196 + $0x38] sm:$0xf]
        %v3212 = vld [vmem:[%s3196 + $0x3c] sm:$0xf]
        %v3213 = vld [vmem:[#allocation17 + $0x1] sm:$0x1]
        %v3214 = vperm.slane %v3213, 0
        %v3231 = vunpack.c.l.b16 %v3197
        %v3232 = vunpack.c.l.b16 %v3198
        %v3233 = vunpack.c.l.b16 %v3199
        %v3234 = vunpack.c.l.b16 %v3200
        %v3235 = vunpack.c.l.b16 %v3201
        %v3236 = vunpack.c.l.b16 %v3202
        %v3237 = vunpack.c.l.b16 %v3203
        %v3238 = vunpack.c.l.b16 %v3204
        %v3239 = vunpack.c.l.b16 %v3205
        %v3240 = vunpack.c.l.b16 %v3206
        %v3241 = vunpack.c.l.b16 %v3207
        %v3242 = vunpack.c.l.b16 %v3208
        %v3243 = vunpack.c.l.b16 %v3209
        %v3244 = vunpack.c.l.b16 %v3210
        %v3245 = vunpack.c.l.b16 %v3211
        %v3246 = vunpack.c.l.b16 %v3212
        %v3247 = vpack.c.b16 %v3232, %v3231
        %v3248 = vpack.c.b16 %v3234, %v3233
        %v3249 = vpack.c.b16 %v3236, %v3235
        %v3250 = vpack.c.b16 %v3238, %v3237
        %v3251 = vpack.c.b16 %v3240, %v3239
        %v3252 = vpack.c.b16 %v3242, %v3241
        %v3253 = vpack.c.b16 %v3244, %v3243
        %v3254 = vpack.c.b16 %v3246, %v3245
        %3263 = vmatpush.bf16.msra.mxu0 %v3254
        %3264 = vmatpush.bf16.msra.mxu0 %v3253
        %3265 = vmatpush.bf16.msra.mxu0 %v3252
        %3266 = vmatpush.bf16.msra.mxu0 %v3251
        %3267 = vmatpush.bf16.msra.mxu0 %v3250
        %3268 = vmatpush.bf16.msra.mxu0 %v3249
        %3269 = vmatpush.bf16.msra.mxu0 %v3248
        %3270 = vmatpush.bf16.msra.mxu0 %v3247
        %3271 = vmatmul.bf16.gmra.mxu0 %v3188
        %v3272 = vpop.f32.mrf.mxu0
        %v3273 = vadd.f32 %v3214, %v3272
        %v3274 = vpop.f32.mrf.mxu0
        %v3275 = vadd.f32 %v3214, %v3274
        %3276 = vmatmul.bf16.gmra.mxu0 %v3189
        %v3277 = vpop.f32.mrf.mxu0
        %v3278 = vadd.f32 %v3214, %v3277
        %v3279 = vpop.f32.mrf.mxu0
        %v3280 = vadd.f32 %v3214, %v3279
        %3281 = vmatmul.bf16.gmra.mxu0 %v3190
        %v3282 = vpop.f32.mrf.mxu0
        %v3283 = vadd.f32 %v3214, %v3282
        %v3284 = vpop.f32.mrf.mxu0
        %v3285 = vadd.f32 %v3214, %v3284
        %3286 = vmatmul.bf16.gmra.mxu0 %v3191
        %v3287 = vpop.f32.mrf.mxu0
        %v3288 = vadd.f32 %v3214, %v3287
        %v3289 = vpop.f32.mrf.mxu0
        %v3290 = vadd.f32 %v3214, %v3289
        %3291 = vmatmul.bf16.gmra.mxu0 %v3192
        %v3292 = vpop.f32.mrf.mxu0
        %v3293 = vadd.f32 %v3214, %v3292
        %v3294 = vpop.f32.mrf.mxu0
        %v3295 = vadd.f32 %v3214, %v3294
        %3296 = vmatmul.bf16.gmra.mxu0 %v3193
        %v3297 = vpop.f32.mrf.mxu0
        %v3298 = vadd.f32 %v3214, %v3297
        %v3299 = vpop.f32.mrf.mxu0
        %v3300 = vadd.f32 %v3214, %v3299
        %3301 = vmatmul.bf16.gmra.mxu0 %v3194
        %v3302 = vpop.f32.mrf.mxu0
        %v3303 = vadd.f32 %v3214, %v3302
        %v3304 = vpop.f32.mrf.mxu0
        %v3305 = vadd.f32 %v3214, %v3304
        %3306 = vmatmul.bf16.gmra.mxu0 %v3195
        %v3307 = vpop.f32.mrf.mxu0
        %v3308 = vadd.f32 %v3214, %v3307
        %v3309 = vpop.f32.mrf.mxu0
        %v3310 = vadd.f32 %v3214, %v3309
        %3311 = vdwg.mxu0
        %v3312 = vadd.f32 %v2305, %v3273
        %v3313 = vadd.f32 %v2306, %v3275
        %v3314 = vadd.f32 %v2307, %v3278
        %v3315 = vadd.f32 %v2308, %v3280
        %v3316 = vadd.f32 %v2309, %v3283
        %v3317 = vadd.f32 %v2310, %v3285
        %v3318 = vadd.f32 %v2311, %v3288
        %v3319 = vadd.f32 %v2312, %v3290
        %v3320 = vadd.f32 %v2313, %v3293
        %v3321 = vadd.f32 %v2314, %v3295
        %v3322 = vadd.f32 %v2315, %v3298
        %v3323 = vadd.f32 %v2316, %v3300
        %v3324 = vadd.f32 %v2317, %v3303
        %v3325 = vadd.f32 %v2318, %v3305
        %v3326 = vadd.f32 %v2319, %v3308
        %v3327 = vadd.f32 %v2320, %v3310
        %3328 = vst [vmem:[#allocation2] sm:$0xff] %v3312
        %3329 = vst [vmem:[#allocation2 + $0x8] sm:$0xff] %v3313
        %3330 = vst [vmem:[#allocation2 + $0x10] sm:$0xff] %v3314
        %3331 = vst [vmem:[#allocation2 + $0x18] sm:$0xff] %v3315
        %3332 = vst [vmem:[#allocation2 + $0x20] sm:$0xff] %v3316
        %3333 = vst [vmem:[#allocation2 + $0x28] sm:$0xff] %v3317
        %3334 = vst [vmem:[#allocation2 + $0x30] sm:$0xff] %v3318
        %3335 = vst [vmem:[#allocation2 + $0x38] sm:$0xff] %v3319
        %3336 = vst [vmem:[#allocation2 + $0x40] sm:$0xff] %v3320
        %3337 = vst [vmem:[#allocation2 + $0x48] sm:$0xff] %v3321
        %3338 = vst [vmem:[#allocation2 + $0x50] sm:$0xff] %v3322
        %3339 = vst [vmem:[#allocation2 + $0x58] sm:$0xff] %v3323
        %3340 = vst [vmem:[#allocation2 + $0x60] sm:$0xff] %v3324
        %3341 = vst [vmem:[#allocation2 + $0x68] sm:$0xff] %v3325
        %3342 = vst [vmem:[#allocation2 + $0x70] sm:$0xff] %v3326
        %3343 = vst [vmem:[#allocation2 + $0x78] sm:$0xff] %v3327
        %v3344 = vld [vmem:[#allocation2] sm:$0xff]
        %v3345 = vld [vmem:[#allocation2 + $0x8] sm:$0xff]
        %v3346 = vld [vmem:[#allocation2 + $0x10] sm:$0xff]
        %v3347 = vld [vmem:[#allocation2 + $0x18] sm:$0xff]
        %v3348 = vld [vmem:[#allocation2 + $0x20] sm:$0xff]
        %v3349 = vld [vmem:[#allocation2 + $0x28] sm:$0xff]
        %v3350 = vld [vmem:[#allocation2 + $0x30] sm:$0xff]
        %v3351 = vld [vmem:[#allocation2 + $0x38] sm:$0xff]
        %v3352 = vld [vmem:[#allocation2 + $0x40] sm:$0xff]
        %v3353 = vld [vmem:[#allocation2 + $0x48] sm:$0xff]
        %v3354 = vld [vmem:[#allocation2 + $0x50] sm:$0xff]
        %v3355 = vld [vmem:[#allocation2 + $0x58] sm:$0xff]
        %v3356 = vld [vmem:[#allocation2 + $0x60] sm:$0xff]
        %v3357 = vld [vmem:[#allocation2 + $0x68] sm:$0xff]
        %v3358 = vld [vmem:[#allocation2 + $0x70] sm:$0xff]
        %v3359 = vld [vmem:[#allocation2 + $0x78] sm:$0xff]
        %v3360 = vld [vmem:[%s7 + $0x2] sm:$0x1]
        %v3361 = vld [vmem:[#allocation14 + $0x2] sm:$0x1]
        %3362 = vadd.xlane.f32.xlu0 %v3344
        %v3363 = vpop.xlane.xlu0 %3362
        %3364 = vadd.xlane.f32.xlu0 %v3345
        %v3365 = vpop.xlane.xlu0 %3364
        %3366 = vadd.xlane.f32.xlu0 %v3346
        %v3367 = vpop.xlane.xlu0 %3366
        %3368 = vadd.xlane.f32.xlu0 %v3347
        %v3369 = vpop.xlane.xlu0 %3368
        %3370 = vadd.xlane.f32.xlu0 %v3348
        %v3371 = vpop.xlane.xlu0 %3370
        %3372 = vadd.xlane.f32.xlu0 %v3349
        %v3373 = vpop.xlane.xlu0 %3372
        %3374 = vadd.xlane.f32.xlu0 %v3350
        %v3375 = vpop.xlane.xlu0 %3374
        %3376 = vadd.xlane.f32.xlu0 %v3351
        %v3377 = vpop.xlane.xlu0 %3376
        %3378 = vadd.xlane.f32.xlu0 %v3352
        %v3379 = vpop.xlane.xlu0 %3378
        %3380 = vadd.xlane.f32.xlu0 %v3353
        %v3381 = vpop.xlane.xlu0 %3380
        %3382 = vadd.xlane.f32.xlu0 %v3354
        %v3383 = vpop.xlane.xlu0 %3382
        %3384 = vadd.xlane.f32.xlu0 %v3355
        %v3385 = vpop.xlane.xlu0 %3384
        %3386 = vadd.xlane.f32.xlu0 %v3356
        %v3387 = vpop.xlane.xlu0 %3386
        %3388 = vadd.xlane.f32.xlu0 %v3357
        %v3389 = vpop.xlane.xlu0 %3388
        %3390 = vadd.xlane.f32.xlu0 %v3358
        %v3391 = vpop.xlane.xlu0 %3390
        %3392 = vadd.xlane.f32.xlu0 %v3359
        %v3393 = vpop.xlane.xlu0 %3392
        %v3394 = vmul.f32 %v3363, %v639
        %v3395 = vmul.f32 %v3365, %v639
        %v3396 = vmul.f32 %v3367, %v639
        %v3397 = vmul.f32 %v3369, %v639
        %v3398 = vmul.f32 %v3371, %v639
        %v3399 = vmul.f32 %v3373, %v639
        %v3400 = vmul.f32 %v3375, %v639
        %v3401 = vmul.f32 %v3377, %v639
        %v3402 = vmul.f32 %v3379, %v639
        %v3403 = vmul.f32 %v3381, %v639
        %v3404 = vmul.f32 %v3383, %v639
        %v3405 = vmul.f32 %v3385, %v639
        %v3406 = vmul.f32 %v3387, %v639
        %v3407 = vmul.f32 %v3389, %v639
        %v3408 = vmul.f32 %v3391, %v639
        %v3409 = vmul.f32 %v3393, %v639
        %v3410 = vsub.f32 %v3344, %v3394
        %v3411 = vsub.f32 %v3345, %v3395
        %v3412 = vsub.f32 %v3346, %v3396
        %v3413 = vsub.f32 %v3347, %v3397
        %v3414 = vsub.f32 %v3348, %v3398
        %v3415 = vsub.f32 %v3349, %v3399
        %v3416 = vsub.f32 %v3350, %v3400
        %v3417 = vsub.f32 %v3351, %v3401
        %v3418 = vsub.f32 %v3352, %v3402
        %v3419 = vsub.f32 %v3353, %v3403
        %v3420 = vsub.f32 %v3354, %v3404
        %v3421 = vsub.f32 %v3355, %v3405
        %v3422 = vsub.f32 %v3356, %v3406
        %v3423 = vsub.f32 %v3357, %v3407
        %v3424 = vsub.f32 %v3358, %v3408
        %v3425 = vsub.f32 %v3359, %v3409
        %v3426 = vmul.f32 %v3410, %v3410
        %v3427 = vmul.f32 %v3411, %v3411
        %v3428 = vmul.f32 %v3412, %v3412
        %v3429 = vmul.f32 %v3413, %v3413
        %v3430 = vmul.f32 %v3414, %v3414
        %v3431 = vmul.f32 %v3415, %v3415
        %v3432 = vmul.f32 %v3416, %v3416
        %v3433 = vmul.f32 %v3417, %v3417
        %v3434 = vmul.f32 %v3418, %v3418
        %v3435 = vmul.f32 %v3419, %v3419
        %v3436 = vmul.f32 %v3420, %v3420
        %v3437 = vmul.f32 %v3421, %v3421
        %v3438 = vmul.f32 %v3422, %v3422
        %v3439 = vmul.f32 %v3423, %v3423
        %v3440 = vmul.f32 %v3424, %v3424
        %v3441 = vmul.f32 %v3425, %v3425
        %3442 = vadd.xlane.f32.xlu0 %v3426
        %v3443 = vpop.xlane.xlu0 %3442
        %3444 = vadd.xlane.f32.xlu0 %v3427
        %v3445 = vpop.xlane.xlu0 %3444
        %3446 = vadd.xlane.f32.xlu0 %v3428
        %v3447 = vpop.xlane.xlu0 %3446
        %3448 = vadd.xlane.f32.xlu0 %v3429
        %v3449 = vpop.xlane.xlu0 %3448
        %3450 = vadd.xlane.f32.xlu0 %v3430
        %v3451 = vpop.xlane.xlu0 %3450
        %3452 = vadd.xlane.f32.xlu0 %v3431
        %v3453 = vpop.xlane.xlu0 %3452
        %3454 = vadd.xlane.f32.xlu0 %v3432
        %v3455 = vpop.xlane.xlu0 %3454
        %3456 = vadd.xlane.f32.xlu0 %v3433
        %v3457 = vpop.xlane.xlu0 %3456
        %3458 = vadd.xlane.f32.xlu0 %v3434
        %v3459 = vpop.xlane.xlu0 %3458
        %3460 = vadd.xlane.f32.xlu0 %v3435
        %v3461 = vpop.xlane.xlu0 %3460
        %3462 = vadd.xlane.f32.xlu0 %v3436
        %v3463 = vpop.xlane.xlu0 %3462
        %3464 = vadd.xlane.f32.xlu0 %v3437
        %v3465 = vpop.xlane.xlu0 %3464
        %3466 = vadd.xlane.f32.xlu0 %v3438
        %v3467 = vpop.xlane.xlu0 %3466
        %3468 = vadd.xlane.f32.xlu0 %v3439
        %v3469 = vpop.xlane.xlu0 %3468
        %3470 = vadd.xlane.f32.xlu0 %v3440
        %v3471 = vpop.xlane.xlu0 %3470
        %3472 = vadd.xlane.f32.xlu0 %v3441
        %v3473 = vpop.xlane.xlu0 %3472
        %v3474 = vmul.f32 %v3443, %v639
        %v3475 = vmul.f32 %v3445, %v639
        %v3476 = vmul.f32 %v3447, %v639
        %v3477 = vmul.f32 %v3449, %v639
        %v3478 = vmul.f32 %v3451, %v639
        %v3479 = vmul.f32 %v3453, %v639
        %v3480 = vmul.f32 %v3455, %v639
        %v3481 = vmul.f32 %v3457, %v639
        %v3482 = vmul.f32 %v3459, %v639
        %v3483 = vmul.f32 %v3461, %v639
        %v3484 = vmul.f32 %v3463, %v639
        %v3485 = vmul.f32 %v3465, %v639
        %v3486 = vmul.f32 %v3467, %v639
        %v3487 = vmul.f32 %v3469, %v639
        %v3488 = vmul.f32 %v3471, %v639
        %v3489 = vmul.f32 %v3473, %v639
        %v3490 = vadd.f32 %v3474, 1e-05
        %v3491 = vadd.f32 %v3475, 1e-05
        %v3492 = vadd.f32 %v3476, 1e-05
        %v3493 = vadd.f32 %v3477, 1e-05
        %v3494 = vadd.f32 %v3478, 1e-05
        %v3495 = vadd.f32 %v3479, 1e-05
        %v3496 = vadd.f32 %v3480, 1e-05
        %v3497 = vadd.f32 %v3481, 1e-05
        %v3498 = vadd.f32 %v3482, 1e-05
        %v3499 = vadd.f32 %v3483, 1e-05
        %v3500 = vadd.f32 %v3484, 1e-05
        %v3501 = vadd.f32 %v3485, 1e-05
        %v3502 = vadd.f32 %v3486, 1e-05
        %v3503 = vadd.f32 %v3487, 1e-05
        %v3504 = vadd.f32 %v3488, 1e-05
        %v3505 = vadd.f32 %v3489, 1e-05
        %v3506 = vrsqrt.pop %v3490
        %v3507 = vmul.f32 %v3506, %v3490
        %v3508 = vmul.f32 %v3507, %v3506
        %v3509 = vmul.f32 0.5, %v3508
        %v3510 = vsub.f32 1.5, %v3509
        %v3511 = vmul.f32 %v3506, %v3510
        %vm3512 = vweird.f32 %v3490
        %vm3513 = vweird.f32 %v3506
        %vm3514 = vmor %vm3512, %vm3513
        %v3515 = vsel %vm3514, %v3506, %v3511
        %v3516 = vrsqrt.pop %v3491
        %v3517 = vmul.f32 %v3516, %v3491
        %v3518 = vmul.f32 %v3517, %v3516
        %v3519 = vmul.f32 0.5, %v3518
        %v3520 = vsub.f32 1.5, %v3519
        %v3521 = vmul.f32 %v3516, %v3520
        %vm3522 = vweird.f32 %v3491
        %vm3523 = vweird.f32 %v3516
        %vm3524 = vmor %vm3522, %vm3523
        %v3525 = vsel %vm3524, %v3516, %v3521
        %v3526 = vrsqrt.pop %v3492
        %v3527 = vmul.f32 %v3526, %v3492
        %v3528 = vmul.f32 %v3527, %v3526
        %v3529 = vmul.f32 0.5, %v3528
        %v3530 = vsub.f32 1.5, %v3529
        %v3531 = vmul.f32 %v3526, %v3530
        %vm3532 = vweird.f32 %v3492
        %vm3533 = vweird.f32 %v3526
        %vm3534 = vmor %vm3532, %vm3533
        %v3535 = vsel %vm3534, %v3526, %v3531
        %v3536 = vrsqrt.pop %v3493
        %v3537 = vmul.f32 %v3536, %v3493
        %v3538 = vmul.f32 %v3537, %v3536
        %v3539 = vmul.f32 0.5, %v3538
        %v3540 = vsub.f32 1.5, %v3539
        %v3541 = vmul.f32 %v3536, %v3540
        %vm3542 = vweird.f32 %v3493
        %vm3543 = vweird.f32 %v3536
        %vm3544 = vmor %vm3542, %vm3543
        %v3545 = vsel %vm3544, %v3536, %v3541
        %v3546 = vrsqrt.pop %v3494
        %v3547 = vmul.f32 %v3546, %v3494
        %v3548 = vmul.f32 %v3547, %v3546
        %v3549 = vmul.f32 0.5, %v3548
        %v3550 = vsub.f32 1.5, %v3549
        %v3551 = vmul.f32 %v3546, %v3550
        %vm3552 = vweird.f32 %v3494
        %vm3553 = vweird.f32 %v3546
        %vm3554 = vmor %vm3552, %vm3553
        %v3555 = vsel %vm3554, %v3546, %v3551
        %v3556 = vrsqrt.pop %v3495
        %v3557 = vmul.f32 %v3556, %v3495
        %v3558 = vmul.f32 %v3557, %v3556
        %v3559 = vmul.f32 0.5, %v3558
        %v3560 = vsub.f32 1.5, %v3559
        %v3561 = vmul.f32 %v3556, %v3560
        %vm3562 = vweird.f32 %v3495
        %vm3563 = vweird.f32 %v3556
        %vm3564 = vmor %vm3562, %vm3563
        %v3565 = vsel %vm3564, %v3556, %v3561
        %v3566 = vrsqrt.pop %v3496
        %v3567 = vmul.f32 %v3566, %v3496
        %v3568 = vmul.f32 %v3567, %v3566
        %v3569 = vmul.f32 0.5, %v3568
        %v3570 = vsub.f32 1.5, %v3569
        %v3571 = vmul.f32 %v3566, %v3570
        %vm3572 = vweird.f32 %v3496
        %vm3573 = vweird.f32 %v3566
        %vm3574 = vmor %vm3572, %vm3573
        %v3575 = vsel %vm3574, %v3566, %v3571
        %v3576 = vrsqrt.pop %v3497
        %v3577 = vmul.f32 %v3576, %v3497
        %v3578 = vmul.f32 %v3577, %v3576
        %v3579 = vmul.f32 0.5, %v3578
        %v3580 = vsub.f32 1.5, %v3579
        %v3581 = vmul.f32 %v3576, %v3580
        %vm3582 = vweird.f32 %v3497
        %vm3583 = vweird.f32 %v3576
        %vm3584 = vmor %vm3582, %vm3583
        %v3585 = vsel %vm3584, %v3576, %v3581
        %v3586 = vrsqrt.pop %v3498
        %v3587 = vmul.f32 %v3586, %v3498
        %v3588 = vmul.f32 %v3587, %v3586
        %v3589 = vmul.f32 0.5, %v3588
        %v3590 = vsub.f32 1.5, %v3589
        %v3591 = vmul.f32 %v3586, %v3590
        %vm3592 = vweird.f32 %v3498
        %vm3593 = vweird.f32 %v3586
        %vm3594 = vmor %vm3592, %vm3593
        %v3595 = vsel %vm3594, %v3586, %v3591
        %v3596 = vrsqrt.pop %v3499
        %v3597 = vmul.f32 %v3596, %v3499
        %v3598 = vmul.f32 %v3597, %v3596
        %v3599 = vmul.f32 0.5, %v3598
        %v3600 = vsub.f32 1.5, %v3599
        %v3601 = vmul.f32 %v3596, %v3600
        %vm3602 = vweird.f32 %v3499
        %vm3603 = vweird.f32 %v3596
        %vm3604 = vmor %vm3602, %vm3603
        %v3605 = vsel %vm3604, %v3596, %v3601
        %v3606 = vrsqrt.pop %v3500
        %v3607 = vmul.f32 %v3606, %v3500
        %v3608 = vmul.f32 %v3607, %v3606
        %v3609 = vmul.f32 0.5, %v3608
        %v3610 = vsub.f32 1.5, %v3609
        %v3611 = vmul.f32 %v3606, %v3610
        %vm3612 = vweird.f32 %v3500
        %vm3613 = vweird.f32 %v3606
        %vm3614 = vmor %vm3612, %vm3613
        %v3615 = vsel %vm3614, %v3606, %v3611
        %v3616 = vrsqrt.pop %v3501
        %v3617 = vmul.f32 %v3616, %v3501
        %v3618 = vmul.f32 %v3617, %v3616
        %v3619 = vmul.f32 0.5, %v3618
        %v3620 = vsub.f32 1.5, %v3619
        %v3621 = vmul.f32 %v3616, %v3620
        %vm3622 = vweird.f32 %v3501
        %vm3623 = vweird.f32 %v3616
        %vm3624 = vmor %vm3622, %vm3623
        %v3625 = vsel %vm3624, %v3616, %v3621
        %v3626 = vrsqrt.pop %v3502
        %v3627 = vmul.f32 %v3626, %v3502
        %v3628 = vmul.f32 %v3627, %v3626
        %v3629 = vmul.f32 0.5, %v3628
        %v3630 = vsub.f32 1.5, %v3629
        %v3631 = vmul.f32 %v3626, %v3630
        %vm3632 = vweird.f32 %v3502
        %vm3633 = vweird.f32 %v3626
        %vm3634 = vmor %vm3632, %vm3633
        %v3635 = vsel %vm3634, %v3626, %v3631
        %v3636 = vrsqrt.pop %v3503
        %v3637 = vmul.f32 %v3636, %v3503
        %v3638 = vmul.f32 %v3637, %v3636
        %v3639 = vmul.f32 0.5, %v3638
        %v3640 = vsub.f32 1.5, %v3639
        %v3641 = vmul.f32 %v3636, %v3640
        %vm3642 = vweird.f32 %v3503
        %vm3643 = vweird.f32 %v3636
        %vm3644 = vmor %vm3642, %vm3643
        %v3645 = vsel %vm3644, %v3636, %v3641
        %v3646 = vrsqrt.pop %v3504
        %v3647 = vmul.f32 %v3646, %v3504
        %v3648 = vmul.f32 %v3647, %v3646
        %v3649 = vmul.f32 0.5, %v3648
        %v3650 = vsub.f32 1.5, %v3649
        %v3651 = vmul.f32 %v3646, %v3650
        %vm3652 = vweird.f32 %v3504
        %vm3653 = vweird.f32 %v3646
        %vm3654 = vmor %vm3652, %vm3653
        %v3655 = vsel %vm3654, %v3646, %v3651
        %v3656 = vrsqrt.pop %v3505
        %v3657 = vmul.f32 %v3656, %v3505
        %v3658 = vmul.f32 %v3657, %v3656
        %v3659 = vmul.f32 0.5, %v3658
        %v3660 = vsub.f32 1.5, %v3659
        %v3661 = vmul.f32 %v3656, %v3660
        %vm3662 = vweird.f32 %v3505
        %vm3663 = vweird.f32 %v3656
        %vm3664 = vmor %vm3662, %vm3663
        %v3665 = vsel %vm3664, %v3656, %v3661
        %v3666 = vmul.f32 %v3410, %v3515
        %v3667 = vmul.f32 %v3411, %v3525
        %v3668 = vmul.f32 %v3412, %v3535
        %v3669 = vmul.f32 %v3413, %v3545
        %v3670 = vmul.f32 %v3414, %v3555
        %v3671 = vmul.f32 %v3415, %v3565
        %v3672 = vmul.f32 %v3416, %v3575
        %v3673 = vmul.f32 %v3417, %v3585
        %v3674 = vmul.f32 %v3418, %v3595
        %v3675 = vmul.f32 %v3419, %v3605
        %v3676 = vmul.f32 %v3420, %v3615
        %v3677 = vmul.f32 %v3421, %v3625
        %v3678 = vmul.f32 %v3422, %v3635
        %v3679 = vmul.f32 %v3423, %v3645
        %v3680 = vmul.f32 %v3424, %v3655
        %v3681 = vmul.f32 %v3425, %v3665
        %v3682 = vperm.slane %v3360, 0
        %v3683 = vmul.f32 %v3666, %v3682
        %v3684 = vmul.f32 %v3667, %v3682
        %v3685 = vmul.f32 %v3668, %v3682
        %v3686 = vmul.f32 %v3669, %v3682
        %v3687 = vmul.f32 %v3670, %v3682
        %v3688 = vmul.f32 %v3671, %v3682
        %v3689 = vmul.f32 %v3672, %v3682
        %v3690 = vmul.f32 %v3673, %v3682
        %v3691 = vmul.f32 %v3674, %v3682
        %v3692 = vmul.f32 %v3675, %v3682
        %v3693 = vmul.f32 %v3676, %v3682
        %v3694 = vmul.f32 %v3677, %v3682
        %v3695 = vmul.f32 %v3678, %v3682
        %v3696 = vmul.f32 %v3679, %v3682
        %v3697 = vmul.f32 %v3680, %v3682
        %v3698 = vmul.f32 %v3681, %v3682
        %v3699 = vperm.slane %v3361, 0
        %v3700 = vadd.f32 %v3683, %v3699
        %v3701 = vadd.f32 %v3684, %v3699
        %v3702 = vadd.f32 %v3685, %v3699
        %v3703 = vadd.f32 %v3686, %v3699
        %v3704 = vadd.f32 %v3687, %v3699
        %v3705 = vadd.f32 %v3688, %v3699
        %v3706 = vadd.f32 %v3689, %v3699
        %v3707 = vadd.f32 %v3690, %v3699
        %v3708 = vadd.f32 %v3691, %v3699
        %v3709 = vadd.f32 %v3692, %v3699
        %v3710 = vadd.f32 %v3693, %v3699
        %v3711 = vadd.f32 %v3694, %v3699
        %v3712 = vadd.f32 %v3695, %v3699
        %v3713 = vadd.f32 %v3696, %v3699
        %v3714 = vadd.f32 %v3697, %v3699
        %v3715 = vadd.f32 %v3698, %v3699
        %v3716 = vmax.f32 %v3700, 0.0
        %v3717 = vmax.f32 %v3701, 0.0
        %v3718 = vmax.f32 %v3702, 0.0
        %v3719 = vmax.f32 %v3703, 0.0
        %v3720 = vmax.f32 %v3704, 0.0
        %v3721 = vmax.f32 %v3705, 0.0
        %v3722 = vmax.f32 %v3706, 0.0
        %v3723 = vmax.f32 %v3707, 0.0
        %v3724 = vmax.f32 %v3708, 0.0
        %v3725 = vmax.f32 %v3709, 0.0
        %v3726 = vmax.f32 %v3710, 0.0
        %v3727 = vmax.f32 %v3711, 0.0
        %v3728 = vmax.f32 %v3712, 0.0
        %v3729 = vmax.f32 %v3713, 0.0
        %v3730 = vmax.f32 %v3714, 0.0
        %v3731 = vmax.f32 %v3715, 0.0
        %v3732 = vpack.c.bf16 %v3717, %v3716
        %v3733 = vpack.c.bf16 %v3719, %v3718
        %v3734 = vpack.c.bf16 %v3721, %v3720
        %v3735 = vpack.c.bf16 %v3723, %v3722
        %v3736 = vpack.c.bf16 %v3725, %v3724
        %v3737 = vpack.c.bf16 %v3727, %v3726
        %v3738 = vpack.c.bf16 %v3729, %v3728
        %v3739 = vpack.c.bf16 %v3731, %v3730
        %s3740 = scalar_lea.vmem [#allocation15], 128
        %v3741 = vld [vmem:[%s3740] sm:$0xf]
        %v3742 = vld [vmem:[%s3740 + $0x4] sm:$0xf]
        %v3743 = vld [vmem:[%s3740 + $0x8] sm:$0xf]
        %v3744 = vld [vmem:[%s3740 + $0xc] sm:$0xf]
        %v3745 = vld [vmem:[%s3740 + $0x10] sm:$0xf]
        %v3746 = vld [vmem:[%s3740 + $0x14] sm:$0xf]
        %v3747 = vld [vmem:[%s3740 + $0x18] sm:$0xf]
        %v3748 = vld [vmem:[%s3740 + $0x1c] sm:$0xf]
        %v3749 = vld [vmem:[%s3740 + $0x20] sm:$0xf]
        %v3750 = vld [vmem:[%s3740 + $0x24] sm:$0xf]
        %v3751 = vld [vmem:[%s3740 + $0x28] sm:$0xf]
        %v3752 = vld [vmem:[%s3740 + $0x2c] sm:$0xf]
        %v3753 = vld [vmem:[%s3740 + $0x30] sm:$0xf]
        %v3754 = vld [vmem:[%s3740 + $0x34] sm:$0xf]
        %v3755 = vld [vmem:[%s3740 + $0x38] sm:$0xf]
        %v3756 = vld [vmem:[%s3740 + $0x3c] sm:$0xf]
        %v3757 = vld [vmem:[#allocation17 + $0x2] sm:$0x1]
        %v3758 = vperm.slane %v3757, 0
        %v3775 = vunpack.c.l.b16 %v3741
        %v3776 = vunpack.c.l.b16 %v3742
        %v3777 = vunpack.c.l.b16 %v3743
        %v3778 = vunpack.c.l.b16 %v3744
        %v3779 = vunpack.c.l.b16 %v3745
        %v3780 = vunpack.c.l.b16 %v3746
        %v3781 = vunpack.c.l.b16 %v3747
        %v3782 = vunpack.c.l.b16 %v3748
        %v3783 = vunpack.c.l.b16 %v3749
        %v3784 = vunpack.c.l.b16 %v3750
        %v3785 = vunpack.c.l.b16 %v3751
        %v3786 = vunpack.c.l.b16 %v3752
        %v3787 = vunpack.c.l.b16 %v3753
        %v3788 = vunpack.c.l.b16 %v3754
        %v3789 = vunpack.c.l.b16 %v3755
        %v3790 = vunpack.c.l.b16 %v3756
        %v3791 = vpack.c.b16 %v3776, %v3775
        %v3792 = vpack.c.b16 %v3778, %v3777
        %v3793 = vpack.c.b16 %v3780, %v3779
        %v3794 = vpack.c.b16 %v3782, %v3781
        %v3795 = vpack.c.b16 %v3784, %v3783
        %v3796 = vpack.c.b16 %v3786, %v3785
        %v3797 = vpack.c.b16 %v3788, %v3787
        %v3798 = vpack.c.b16 %v3790, %v3789
        %3807 = vmatpush.bf16.msra.mxu0 %v3798
        %3808 = vmatpush.bf16.msra.mxu0 %v3797
        %3809 = vmatpush.bf16.msra.mxu0 %v3796
        %3810 = vmatpush.bf16.msra.mxu0 %v3795
        %3811 = vmatpush.bf16.msra.mxu0 %v3794
        %3812 = vmatpush.bf16.msra.mxu0 %v3793
        %3813 = vmatpush.bf16.msra.mxu0 %v3792
        %3814 = vmatpush.bf16.msra.mxu0 %v3791
        %3815 = vmatmul.bf16.gmra.mxu0 %v3732
        %v3816 = vpop.f32.mrf.mxu0
        %v3817 = vadd.f32 %v3758, %v3816
        %v3818 = vpop.f32.mrf.mxu0
        %v3819 = vadd.f32 %v3758, %v3818
        %3820 = vmatmul.bf16.gmra.mxu0 %v3733
        %v3821 = vpop.f32.mrf.mxu0
        %v3822 = vadd.f32 %v3758, %v3821
        %v3823 = vpop.f32.mrf.mxu0
        %v3824 = vadd.f32 %v3758, %v3823
        %3825 = vmatmul.bf16.gmra.mxu0 %v3734
        %v3826 = vpop.f32.mrf.mxu0
        %v3827 = vadd.f32 %v3758, %v3826
        %v3828 = vpop.f32.mrf.mxu0
        %v3829 = vadd.f32 %v3758, %v3828
        %3830 = vmatmul.bf16.gmra.mxu0 %v3735
        %v3831 = vpop.f32.mrf.mxu0
        %v3832 = vadd.f32 %v3758, %v3831
        %v3833 = vpop.f32.mrf.mxu0
        %v3834 = vadd.f32 %v3758, %v3833
        %3835 = vmatmul.bf16.gmra.mxu0 %v3736
        %v3836 = vpop.f32.mrf.mxu0
        %v3837 = vadd.f32 %v3758, %v3836
        %v3838 = vpop.f32.mrf.mxu0
        %v3839 = vadd.f32 %v3758, %v3838
        %3840 = vmatmul.bf16.gmra.mxu0 %v3737
        %v3841 = vpop.f32.mrf.mxu0
        %v3842 = vadd.f32 %v3758, %v3841
        %v3843 = vpop.f32.mrf.mxu0
        %v3844 = vadd.f32 %v3758, %v3843
        %3845 = vmatmul.bf16.gmra.mxu0 %v3738
        %v3846 = vpop.f32.mrf.mxu0
        %v3847 = vadd.f32 %v3758, %v3846
        %v3848 = vpop.f32.mrf.mxu0
        %v3849 = vadd.f32 %v3758, %v3848
        %3850 = vmatmul.bf16.gmra.mxu0 %v3739
        %v3851 = vpop.f32.mrf.mxu0
        %v3852 = vadd.f32 %v3758, %v3851
        %v3853 = vpop.f32.mrf.mxu0
        %v3854 = vadd.f32 %v3758, %v3853
        %3855 = vdwg.mxu0
        %v3856 = vld [vmem:[%s7 + $0x3] sm:$0x1]
        %v3857 = vld [vmem:[#allocation14 + $0x3] sm:$0x1]
        %3858 = vadd.xlane.f32.xlu0 %v3817
        %v3859 = vpop.xlane.xlu0 %3858
        %3860 = vadd.xlane.f32.xlu0 %v3819
        %v3861 = vpop.xlane.xlu0 %3860
        %3862 = vadd.xlane.f32.xlu0 %v3822
        %v3863 = vpop.xlane.xlu0 %3862
        %3864 = vadd.xlane.f32.xlu0 %v3824
        %v3865 = vpop.xlane.xlu0 %3864
        %3866 = vadd.xlane.f32.xlu0 %v3827
        %v3867 = vpop.xlane.xlu0 %3866
        %3868 = vadd.xlane.f32.xlu0 %v3829
        %v3869 = vpop.xlane.xlu0 %3868
        %3870 = vadd.xlane.f32.xlu0 %v3832
        %v3871 = vpop.xlane.xlu0 %3870
        %3872 = vadd.xlane.f32.xlu0 %v3834
        %v3873 = vpop.xlane.xlu0 %3872
        %3874 = vadd.xlane.f32.xlu0 %v3837
        %v3875 = vpop.xlane.xlu0 %3874
        %3876 = vadd.xlane.f32.xlu0 %v3839
        %v3877 = vpop.xlane.xlu0 %3876
        %3878 = vadd.xlane.f32.xlu0 %v3842
        %v3879 = vpop.xlane.xlu0 %3878
        %3880 = vadd.xlane.f32.xlu0 %v3844
        %v3881 = vpop.xlane.xlu0 %3880
        %3882 = vadd.xlane.f32.xlu0 %v3847
        %v3883 = vpop.xlane.xlu0 %3882
        %3884 = vadd.xlane.f32.xlu0 %v3849
        %v3885 = vpop.xlane.xlu0 %3884
        %3886 = vadd.xlane.f32.xlu0 %v3852
        %v3887 = vpop.xlane.xlu0 %3886
        %3888 = vadd.xlane.f32.xlu0 %v3854
        %v3889 = vpop.xlane.xlu0 %3888
        %v3890 = vmul.f32 %v3859, %v639
        %v3891 = vmul.f32 %v3861, %v639
        %v3892 = vmul.f32 %v3863, %v639
        %v3893 = vmul.f32 %v3865, %v639
        %v3894 = vmul.f32 %v3867, %v639
        %v3895 = vmul.f32 %v3869, %v639
        %v3896 = vmul.f32 %v3871, %v639
        %v3897 = vmul.f32 %v3873, %v639
        %v3898 = vmul.f32 %v3875, %v639
        %v3899 = vmul.f32 %v3877, %v639
        %v3900 = vmul.f32 %v3879, %v639
        %v3901 = vmul.f32 %v3881, %v639
        %v3902 = vmul.f32 %v3883, %v639
        %v3903 = vmul.f32 %v3885, %v639
        %v3904 = vmul.f32 %v3887, %v639
        %v3905 = vmul.f32 %v3889, %v639
        %v3906 = vsub.f32 %v3817, %v3890
        %v3907 = vsub.f32 %v3819, %v3891
        %v3908 = vsub.f32 %v3822, %v3892
        %v3909 = vsub.f32 %v3824, %v3893
        %v3910 = vsub.f32 %v3827, %v3894
        %v3911 = vsub.f32 %v3829, %v3895
        %v3912 = vsub.f32 %v3832, %v3896
        %v3913 = vsub.f32 %v3834, %v3897
        %v3914 = vsub.f32 %v3837, %v3898
        %v3915 = vsub.f32 %v3839, %v3899
        %v3916 = vsub.f32 %v3842, %v3900
        %v3917 = vsub.f32 %v3844, %v3901
        %v3918 = vsub.f32 %v3847, %v3902
        %v3919 = vsub.f32 %v3849, %v3903
        %v3920 = vsub.f32 %v3852, %v3904
        %v3921 = vsub.f32 %v3854, %v3905
        %v3922 = vmul.f32 %v3906, %v3906
        %v3923 = vmul.f32 %v3907, %v3907
        %v3924 = vmul.f32 %v3908, %v3908
        %v3925 = vmul.f32 %v3909, %v3909
        %v3926 = vmul.f32 %v3910, %v3910
        %v3927 = vmul.f32 %v3911, %v3911
        %v3928 = vmul.f32 %v3912, %v3912
        %v3929 = vmul.f32 %v3913, %v3913
        %v3930 = vmul.f32 %v3914, %v3914
        %v3931 = vmul.f32 %v3915, %v3915
        %v3932 = vmul.f32 %v3916, %v3916
        %v3933 = vmul.f32 %v3917, %v3917
        %v3934 = vmul.f32 %v3918, %v3918
        %v3935 = vmul.f32 %v3919, %v3919
        %v3936 = vmul.f32 %v3920, %v3920
        %v3937 = vmul.f32 %v3921, %v3921
        %3938 = vadd.xlane.f32.xlu0 %v3922
        %v3939 = vpop.xlane.xlu0 %3938
        %3940 = vadd.xlane.f32.xlu0 %v3923
        %v3941 = vpop.xlane.xlu0 %3940
        %3942 = vadd.xlane.f32.xlu0 %v3924
        %v3943 = vpop.xlane.xlu0 %3942
        %3944 = vadd.xlane.f32.xlu0 %v3925
        %v3945 = vpop.xlane.xlu0 %3944
        %3946 = vadd.xlane.f32.xlu0 %v3926
        %v3947 = vpop.xlane.xlu0 %3946
        %3948 = vadd.xlane.f32.xlu0 %v3927
        %v3949 = vpop.xlane.xlu0 %3948
        %3950 = vadd.xlane.f32.xlu0 %v3928
        %v3951 = vpop.xlane.xlu0 %3950
        %3952 = vadd.xlane.f32.xlu0 %v3929
        %v3953 = vpop.xlane.xlu0 %3952
        %3954 = vadd.xlane.f32.xlu0 %v3930
        %v3955 = vpop.xlane.xlu0 %3954
        %3956 = vadd.xlane.f32.xlu0 %v3931
        %v3957 = vpop.xlane.xlu0 %3956
        %3958 = vadd.xlane.f32.xlu0 %v3932
        %v3959 = vpop.xlane.xlu0 %3958
        %3960 = vadd.xlane.f32.xlu0 %v3933
        %v3961 = vpop.xlane.xlu0 %3960
        %3962 = vadd.xlane.f32.xlu0 %v3934
        %v3963 = vpop.xlane.xlu0 %3962
        %3964 = vadd.xlane.f32.xlu0 %v3935
        %v3965 = vpop.xlane.xlu0 %3964
        %3966 = vadd.xlane.f32.xlu0 %v3936
        %v3967 = vpop.xlane.xlu0 %3966
        %3968 = vadd.xlane.f32.xlu0 %v3937
        %v3969 = vpop.xlane.xlu0 %3968
        %v3970 = vmul.f32 %v3939, %v639
        %v3971 = vmul.f32 %v3941, %v639
        %v3972 = vmul.f32 %v3943, %v639
        %v3973 = vmul.f32 %v3945, %v639
        %v3974 = vmul.f32 %v3947, %v639
        %v3975 = vmul.f32 %v3949, %v639
        %v3976 = vmul.f32 %v3951, %v639
        %v3977 = vmul.f32 %v3953, %v639
        %v3978 = vmul.f32 %v3955, %v639
        %v3979 = vmul.f32 %v3957, %v639
        %v3980 = vmul.f32 %v3959, %v639
        %v3981 = vmul.f32 %v3961, %v639
        %v3982 = vmul.f32 %v3963, %v639
        %v3983 = vmul.f32 %v3965, %v639
        %v3984 = vmul.f32 %v3967, %v639
        %v3985 = vmul.f32 %v3969, %v639
        %v3986 = vadd.f32 %v3970, 1e-05
        %v3987 = vadd.f32 %v3971, 1e-05
        %v3988 = vadd.f32 %v3972, 1e-05
        %v3989 = vadd.f32 %v3973, 1e-05
        %v3990 = vadd.f32 %v3974, 1e-05
        %v3991 = vadd.f32 %v3975, 1e-05
        %v3992 = vadd.f32 %v3976, 1e-05
        %v3993 = vadd.f32 %v3977, 1e-05
        %v3994 = vadd.f32 %v3978, 1e-05
        %v3995 = vadd.f32 %v3979, 1e-05
        %v3996 = vadd.f32 %v3980, 1e-05
        %v3997 = vadd.f32 %v3981, 1e-05
        %v3998 = vadd.f32 %v3982, 1e-05
        %v3999 = vadd.f32 %v3983, 1e-05
        %v4000 = vadd.f32 %v3984, 1e-05
        %v4001 = vadd.f32 %v3985, 1e-05
        %v4002 = vrsqrt.pop %v3986
        %v4003 = vmul.f32 %v4002, %v3986
        %v4004 = vmul.f32 %v4003, %v4002
        %v4005 = vmul.f32 0.5, %v4004
        %v4006 = vsub.f32 1.5, %v4005
        %v4007 = vmul.f32 %v4002, %v4006
        %vm4008 = vweird.f32 %v3986
        %vm4009 = vweird.f32 %v4002
        %vm4010 = vmor %vm4008, %vm4009
        %v4011 = vsel %vm4010, %v4002, %v4007
        %v4012 = vrsqrt.pop %v3987
        %v4013 = vmul.f32 %v4012, %v3987
        %v4014 = vmul.f32 %v4013, %v4012
        %v4015 = vmul.f32 0.5, %v4014
        %v4016 = vsub.f32 1.5, %v4015
        %v4017 = vmul.f32 %v4012, %v4016
        %vm4018 = vweird.f32 %v3987
        %vm4019 = vweird.f32 %v4012
        %vm4020 = vmor %vm4018, %vm4019
        %v4021 = vsel %vm4020, %v4012, %v4017
        %v4022 = vrsqrt.pop %v3988
        %v4023 = vmul.f32 %v4022, %v3988
        %v4024 = vmul.f32 %v4023, %v4022
        %v4025 = vmul.f32 0.5, %v4024
        %v4026 = vsub.f32 1.5, %v4025
        %v4027 = vmul.f32 %v4022, %v4026
        %vm4028 = vweird.f32 %v3988
        %vm4029 = vweird.f32 %v4022
        %vm4030 = vmor %vm4028, %vm4029
        %v4031 = vsel %vm4030, %v4022, %v4027
        %v4032 = vrsqrt.pop %v3989
        %v4033 = vmul.f32 %v4032, %v3989
        %v4034 = vmul.f32 %v4033, %v4032
        %v4035 = vmul.f32 0.5, %v4034
        %v4036 = vsub.f32 1.5, %v4035
        %v4037 = vmul.f32 %v4032, %v4036
        %vm4038 = vweird.f32 %v3989
        %vm4039 = vweird.f32 %v4032
        %vm4040 = vmor %vm4038, %vm4039
        %v4041 = vsel %vm4040, %v4032, %v4037
        %v4042 = vrsqrt.pop %v3990
        %v4043 = vmul.f32 %v4042, %v3990
        %v4044 = vmul.f32 %v4043, %v4042
        %v4045 = vmul.f32 0.5, %v4044
        %v4046 = vsub.f32 1.5, %v4045
        %v4047 = vmul.f32 %v4042, %v4046
        %vm4048 = vweird.f32 %v3990
        %vm4049 = vweird.f32 %v4042
        %vm4050 = vmor %vm4048, %vm4049
        %v4051 = vsel %vm4050, %v4042, %v4047
        %v4052 = vrsqrt.pop %v3991
        %v4053 = vmul.f32 %v4052, %v3991
        %v4054 = vmul.f32 %v4053, %v4052
        %v4055 = vmul.f32 0.5, %v4054
        %v4056 = vsub.f32 1.5, %v4055
        %v4057 = vmul.f32 %v4052, %v4056
        %vm4058 = vweird.f32 %v3991
        %vm4059 = vweird.f32 %v4052
        %vm4060 = vmor %vm4058, %vm4059
        %v4061 = vsel %vm4060, %v4052, %v4057
        %v4062 = vrsqrt.pop %v3992
        %v4063 = vmul.f32 %v4062, %v3992
        %v4064 = vmul.f32 %v4063, %v4062
        %v4065 = vmul.f32 0.5, %v4064
        %v4066 = vsub.f32 1.5, %v4065
        %v4067 = vmul.f32 %v4062, %v4066
        %vm4068 = vweird.f32 %v3992
        %vm4069 = vweird.f32 %v4062
        %vm4070 = vmor %vm4068, %vm4069
        %v4071 = vsel %vm4070, %v4062, %v4067
        %v4072 = vrsqrt.pop %v3993
        %v4073 = vmul.f32 %v4072, %v3993
        %v4074 = vmul.f32 %v4073, %v4072
        %v4075 = vmul.f32 0.5, %v4074
        %v4076 = vsub.f32 1.5, %v4075
        %v4077 = vmul.f32 %v4072, %v4076
        %vm4078 = vweird.f32 %v3993
        %vm4079 = vweird.f32 %v4072
        %vm4080 = vmor %vm4078, %vm4079
        %v4081 = vsel %vm4080, %v4072, %v4077
        %v4082 = vrsqrt.pop %v3994
        %v4083 = vmul.f32 %v4082, %v3994
        %v4084 = vmul.f32 %v4083, %v4082
        %v4085 = vmul.f32 0.5, %v4084
        %v4086 = vsub.f32 1.5, %v4085
        %v4087 = vmul.f32 %v4082, %v4086
        %vm4088 = vweird.f32 %v3994
        %vm4089 = vweird.f32 %v4082
        %vm4090 = vmor %vm4088, %vm4089
        %v4091 = vsel %vm4090, %v4082, %v4087
        %v4092 = vrsqrt.pop %v3995
        %v4093 = vmul.f32 %v4092, %v3995
        %v4094 = vmul.f32 %v4093, %v4092
        %v4095 = vmul.f32 0.5, %v4094
        %v4096 = vsub.f32 1.5, %v4095
        %v4097 = vmul.f32 %v4092, %v4096
        %vm4098 = vweird.f32 %v3995
        %vm4099 = vweird.f32 %v4092
        %vm4100 = vmor %vm4098, %vm4099
        %v4101 = vsel %vm4100, %v4092, %v4097
        %v4102 = vrsqrt.pop %v3996
        %v4103 = vmul.f32 %v4102, %v3996
        %v4104 = vmul.f32 %v4103, %v4102
        %v4105 = vmul.f32 0.5, %v4104
        %v4106 = vsub.f32 1.5, %v4105
        %v4107 = vmul.f32 %v4102, %v4106
        %vm4108 = vweird.f32 %v3996
        %vm4109 = vweird.f32 %v4102
        %vm4110 = vmor %vm4108, %vm4109
        %v4111 = vsel %vm4110, %v4102, %v4107
        %v4112 = vrsqrt.pop %v3997
        %v4113 = vmul.f32 %v4112, %v3997
        %v4114 = vmul.f32 %v4113, %v4112
        %v4115 = vmul.f32 0.5, %v4114
        %v4116 = vsub.f32 1.5, %v4115
        %v4117 = vmul.f32 %v4112, %v4116
        %vm4118 = vweird.f32 %v3997
        %vm4119 = vweird.f32 %v4112
        %vm4120 = vmor %vm4118, %vm4119
        %v4121 = vsel %vm4120, %v4112, %v4117
        %v4122 = vrsqrt.pop %v3998
        %v4123 = vmul.f32 %v4122, %v3998
        %v4124 = vmul.f32 %v4123, %v4122
        %v4125 = vmul.f32 0.5, %v4124
        %v4126 = vsub.f32 1.5, %v4125
        %v4127 = vmul.f32 %v4122, %v4126
        %vm4128 = vweird.f32 %v3998
        %vm4129 = vweird.f32 %v4122
        %vm4130 = vmor %vm4128, %vm4129
        %v4131 = vsel %vm4130, %v4122, %v4127
        %v4132 = vrsqrt.pop %v3999
        %v4133 = vmul.f32 %v4132, %v3999
        %v4134 = vmul.f32 %v4133, %v4132
        %v4135 = vmul.f32 0.5, %v4134
        %v4136 = vsub.f32 1.5, %v4135
        %v4137 = vmul.f32 %v4132, %v4136
        %vm4138 = vweird.f32 %v3999
        %vm4139 = vweird.f32 %v4132
        %vm4140 = vmor %vm4138, %vm4139
        %v4141 = vsel %vm4140, %v4132, %v4137
        %v4142 = vrsqrt.pop %v4000
        %v4143 = vmul.f32 %v4142, %v4000
        %v4144 = vmul.f32 %v4143, %v4142
        %v4145 = vmul.f32 0.5, %v4144
        %v4146 = vsub.f32 1.5, %v4145
        %v4147 = vmul.f32 %v4142, %v4146
        %vm4148 = vweird.f32 %v4000
        %vm4149 = vweird.f32 %v4142
        %vm4150 = vmor %vm4148, %vm4149
        %v4151 = vsel %vm4150, %v4142, %v4147
        %v4152 = vrsqrt.pop %v4001
        %v4153 = vmul.f32 %v4152, %v4001
        %v4154 = vmul.f32 %v4153, %v4152
        %v4155 = vmul.f32 0.5, %v4154
        %v4156 = vsub.f32 1.5, %v4155
        %v4157 = vmul.f32 %v4152, %v4156
        %vm4158 = vweird.f32 %v4001
        %vm4159 = vweird.f32 %v4152
        %vm4160 = vmor %vm4158, %vm4159
        %v4161 = vsel %vm4160, %v4152, %v4157
        %v4162 = vmul.f32 %v3906, %v4011
        %v4163 = vmul.f32 %v3907, %v4021
        %v4164 = vmul.f32 %v3908, %v4031
        %v4165 = vmul.f32 %v3909, %v4041
        %v4166 = vmul.f32 %v3910, %v4051
        %v4167 = vmul.f32 %v3911, %v4061
        %v4168 = vmul.f32 %v3912, %v4071
        %v4169 = vmul.f32 %v3913, %v4081
        %v4170 = vmul.f32 %v3914, %v4091
        %v4171 = vmul.f32 %v3915, %v4101
        %v4172 = vmul.f32 %v3916, %v4111
        %v4173 = vmul.f32 %v3917, %v4121
        %v4174 = vmul.f32 %v3918, %v4131
        %v4175 = vmul.f32 %v3919, %v4141
        %v4176 = vmul.f32 %v3920, %v4151
        %v4177 = vmul.f32 %v3921, %v4161
        %v4178 = vperm.slane %v3856, 0
        %v4179 = vmul.f32 %v4162, %v4178
        %v4180 = vmul.f32 %v4163, %v4178
        %v4181 = vmul.f32 %v4164, %v4178
        %v4182 = vmul.f32 %v4165, %v4178
        %v4183 = vmul.f32 %v4166, %v4178
        %v4184 = vmul.f32 %v4167, %v4178
        %v4185 = vmul.f32 %v4168, %v4178
        %v4186 = vmul.f32 %v4169, %v4178
        %v4187 = vmul.f32 %v4170, %v4178
        %v4188 = vmul.f32 %v4171, %v4178
        %v4189 = vmul.f32 %v4172, %v4178
        %v4190 = vmul.f32 %v4173, %v4178
        %v4191 = vmul.f32 %v4174, %v4178
        %v4192 = vmul.f32 %v4175, %v4178
        %v4193 = vmul.f32 %v4176, %v4178
        %v4194 = vmul.f32 %v4177, %v4178
        %v4195 = vperm.slane %v3857, 0
        %v4196 = vadd.f32 %v4179, %v4195
        %v4197 = vadd.f32 %v4180, %v4195
        %v4198 = vadd.f32 %v4181, %v4195
        %v4199 = vadd.f32 %v4182, %v4195
        %v4200 = vadd.f32 %v4183, %v4195
        %v4201 = vadd.f32 %v4184, %v4195
        %v4202 = vadd.f32 %v4185, %v4195
        %v4203 = vadd.f32 %v4186, %v4195
        %v4204 = vadd.f32 %v4187, %v4195
        %v4205 = vadd.f32 %v4188, %v4195
        %v4206 = vadd.f32 %v4189, %v4195
        %v4207 = vadd.f32 %v4190, %v4195
        %v4208 = vadd.f32 %v4191, %v4195
        %v4209 = vadd.f32 %v4192, %v4195
        %v4210 = vadd.f32 %v4193, %v4195
        %v4211 = vadd.f32 %v4194, %v4195
        %v4212 = vmax.f32 %v4196, 0.0
        %v4213 = vmax.f32 %v4197, 0.0
        %v4214 = vmax.f32 %v4198, 0.0
        %v4215 = vmax.f32 %v4199, 0.0
        %v4216 = vmax.f32 %v4200, 0.0
        %v4217 = vmax.f32 %v4201, 0.0
        %v4218 = vmax.f32 %v4202, 0.0
        %v4219 = vmax.f32 %v4203, 0.0
        %v4220 = vmax.f32 %v4204, 0.0
        %v4221 = vmax.f32 %v4205, 0.0
        %v4222 = vmax.f32 %v4206, 0.0
        %v4223 = vmax.f32 %v4207, 0.0
        %v4224 = vmax.f32 %v4208, 0.0
        %v4225 = vmax.f32 %v4209, 0.0
        %v4226 = vmax.f32 %v4210, 0.0
        %v4227 = vmax.f32 %v4211, 0.0
        %v4228 = vpack.c.bf16 %v4213, %v4212
        %v4229 = vpack.c.bf16 %v4215, %v4214
        %v4230 = vpack.c.bf16 %v4217, %v4216
        %v4231 = vpack.c.bf16 %v4219, %v4218
        %v4232 = vpack.c.bf16 %v4221, %v4220
        %v4233 = vpack.c.bf16 %v4223, %v4222
        %v4234 = vpack.c.bf16 %v4225, %v4224
        %v4235 = vpack.c.bf16 %v4227, %v4226
        %s4236 = scalar_lea.vmem [#allocation15], 192
        %v4237 = vld [vmem:[%s4236] sm:$0xf]
        %v4238 = vld [vmem:[%s4236 + $0x4] sm:$0xf]
        %v4239 = vld [vmem:[%s4236 + $0x8] sm:$0xf]
        %v4240 = vld [vmem:[%s4236 + $0xc] sm:$0xf]
        %v4241 = vld [vmem:[%s4236 + $0x10] sm:$0xf]
        %v4242 = vld [vmem:[%s4236 + $0x14] sm:$0xf]
        %v4243 = vld [vmem:[%s4236 + $0x18] sm:$0xf]
        %v4244 = vld [vmem:[%s4236 + $0x1c] sm:$0xf]
        %v4245 = vld [vmem:[%s4236 + $0x20] sm:$0xf]
        %v4246 = vld [vmem:[%s4236 + $0x24] sm:$0xf]
        %v4247 = vld [vmem:[%s4236 + $0x28] sm:$0xf]
        %v4248 = vld [vmem:[%s4236 + $0x2c] sm:$0xf]
        %v4249 = vld [vmem:[%s4236 + $0x30] sm:$0xf]
        %v4250 = vld [vmem:[%s4236 + $0x34] sm:$0xf]
        %v4251 = vld [vmem:[%s4236 + $0x38] sm:$0xf]
        %v4252 = vld [vmem:[%s4236 + $0x3c] sm:$0xf]
        %v4253 = vld [vmem:[#allocation17 + $0x3] sm:$0x1]
        %v4254 = vperm.slane %v4253, 0
        %v4271 = vunpack.c.l.b16 %v4237
        %v4272 = vunpack.c.l.b16 %v4238
        %v4273 = vunpack.c.l.b16 %v4239
        %v4274 = vunpack.c.l.b16 %v4240
        %v4275 = vunpack.c.l.b16 %v4241
        %v4276 = vunpack.c.l.b16 %v4242
        %v4277 = vunpack.c.l.b16 %v4243
        %v4278 = vunpack.c.l.b16 %v4244
        %v4279 = vunpack.c.l.b16 %v4245
        %v4280 = vunpack.c.l.b16 %v4246
        %v4281 = vunpack.c.l.b16 %v4247
        %v4282 = vunpack.c.l.b16 %v4248
        %v4283 = vunpack.c.l.b16 %v4249
        %v4284 = vunpack.c.l.b16 %v4250
        %v4285 = vunpack.c.l.b16 %v4251
        %v4286 = vunpack.c.l.b16 %v4252
        %v4287 = vpack.c.b16 %v4272, %v4271
        %v4288 = vpack.c.b16 %v4274, %v4273
        %v4289 = vpack.c.b16 %v4276, %v4275
        %v4290 = vpack.c.b16 %v4278, %v4277
        %v4291 = vpack.c.b16 %v4280, %v4279
        %v4292 = vpack.c.b16 %v4282, %v4281
        %v4293 = vpack.c.b16 %v4284, %v4283
        %v4294 = vpack.c.b16 %v4286, %v4285
        %4303 = vmatpush.bf16.msra.mxu0 %v4294
        %4304 = vmatpush.bf16.msra.mxu0 %v4293
        %4305 = vmatpush.bf16.msra.mxu0 %v4292
        %4306 = vmatpush.bf16.msra.mxu0 %v4291
        %4307 = vmatpush.bf16.msra.mxu0 %v4290
        %4308 = vmatpush.bf16.msra.mxu0 %v4289
        %4309 = vmatpush.bf16.msra.mxu0 %v4288
        %4310 = vmatpush.bf16.msra.mxu0 %v4287
        %4311 = vmatmul.bf16.gmra.mxu0 %v4228
        %v4312 = vpop.f32.mrf.mxu0
        %v4313 = vadd.f32 %v4254, %v4312
        %v4314 = vpop.f32.mrf.mxu0
        %v4315 = vadd.f32 %v4254, %v4314
        %4316 = vmatmul.bf16.gmra.mxu0 %v4229
        %v4317 = vpop.f32.mrf.mxu0
        %v4318 = vadd.f32 %v4254, %v4317
        %v4319 = vpop.f32.mrf.mxu0
        %v4320 = vadd.f32 %v4254, %v4319
        %4321 = vmatmul.bf16.gmra.mxu0 %v4230
        %v4322 = vpop.f32.mrf.mxu0
        %v4323 = vadd.f32 %v4254, %v4322
        %v4324 = vpop.f32.mrf.mxu0
        %v4325 = vadd.f32 %v4254, %v4324
        %4326 = vmatmul.bf16.gmra.mxu0 %v4231
        %v4327 = vpop.f32.mrf.mxu0
        %v4328 = vadd.f32 %v4254, %v4327
        %v4329 = vpop.f32.mrf.mxu0
        %v4330 = vadd.f32 %v4254, %v4329
        %4331 = vmatmul.bf16.gmra.mxu0 %v4232
        %v4332 = vpop.f32.mrf.mxu0
        %v4333 = vadd.f32 %v4254, %v4332
        %v4334 = vpop.f32.mrf.mxu0
        %v4335 = vadd.f32 %v4254, %v4334
        %4336 = vmatmul.bf16.gmra.mxu0 %v4233
        %v4337 = vpop.f32.mrf.mxu0
        %v4338 = vadd.f32 %v4254, %v4337
        %v4339 = vpop.f32.mrf.mxu0
        %v4340 = vadd.f32 %v4254, %v4339
        %4341 = vmatmul.bf16.gmra.mxu0 %v4234
        %v4342 = vpop.f32.mrf.mxu0
        %v4343 = vadd.f32 %v4254, %v4342
        %v4344 = vpop.f32.mrf.mxu0
        %v4345 = vadd.f32 %v4254, %v4344
        %4346 = vmatmul.bf16.gmra.mxu0 %v4235
        %v4347 = vpop.f32.mrf.mxu0
        %v4348 = vadd.f32 %v4254, %v4347
        %v4349 = vpop.f32.mrf.mxu0
        %v4350 = vadd.f32 %v4254, %v4349
        %4351 = vdwg.mxu0
        %v4352 = vadd.f32 %v3344, %v4313
        %v4353 = vadd.f32 %v3345, %v4315
        %v4354 = vadd.f32 %v3346, %v4318
        %v4355 = vadd.f32 %v3347, %v4320
        %v4356 = vadd.f32 %v3348, %v4323
        %v4357 = vadd.f32 %v3349, %v4325
        %v4358 = vadd.f32 %v3350, %v4328
        %v4359 = vadd.f32 %v3351, %v4330
        %v4360 = vadd.f32 %v3352, %v4333
        %v4361 = vadd.f32 %v3353, %v4335
        %v4362 = vadd.f32 %v3354, %v4338
        %v4363 = vadd.f32 %v3355, %v4340
        %v4364 = vadd.f32 %v3356, %v4343
        %v4365 = vadd.f32 %v3357, %v4345
        %v4366 = vadd.f32 %v3358, %v4348
        %v4367 = vadd.f32 %v3359, %v4350
        %4368 = vst [vmem:[#allocation2] sm:$0xff] %v4352
        %4369 = vst [vmem:[#allocation2 + $0x8] sm:$0xff] %v4353
        %4370 = vst [vmem:[#allocation2 + $0x10] sm:$0xff] %v4354
        %4371 = vst [vmem:[#allocation2 + $0x18] sm:$0xff] %v4355
        %4372 = vst [vmem:[#allocation2 + $0x20] sm:$0xff] %v4356
        %4373 = vst [vmem:[#allocation2 + $0x28] sm:$0xff] %v4357
        %4374 = vst [vmem:[#allocation2 + $0x30] sm:$0xff] %v4358
        %4375 = vst [vmem:[#allocation2 + $0x38] sm:$0xff] %v4359
        %4376 = vst [vmem:[#allocation2 + $0x40] sm:$0xff] %v4360
        %4377 = vst [vmem:[#allocation2 + $0x48] sm:$0xff] %v4361
        %4378 = vst [vmem:[#allocation2 + $0x50] sm:$0xff] %v4362
        %4379 = vst [vmem:[#allocation2 + $0x58] sm:$0xff] %v4363
        %4380 = vst [vmem:[#allocation2 + $0x60] sm:$0xff] %v4364
        %4381 = vst [vmem:[#allocation2 + $0x68] sm:$0xff] %v4365
        %4382 = vst [vmem:[#allocation2 + $0x70] sm:$0xff] %v4366
        %4383 = vst [vmem:[#allocation2 + $0x78] sm:$0xff] %v4367
        %v4384 = vld [vmem:[#allocation2] sm:$0xff]
        %v4385 = vld [vmem:[#allocation2 + $0x8] sm:$0xff]
        %v4386 = vld [vmem:[#allocation2 + $0x10] sm:$0xff]
        %v4387 = vld [vmem:[#allocation2 + $0x18] sm:$0xff]
        %v4388 = vld [vmem:[#allocation2 + $0x20] sm:$0xff]
        %v4389 = vld [vmem:[#allocation2 + $0x28] sm:$0xff]
        %v4390 = vld [vmem:[#allocation2 + $0x30] sm:$0xff]
        %v4391 = vld [vmem:[#allocation2 + $0x38] sm:$0xff]
        %v4392 = vld [vmem:[#allocation2 + $0x40] sm:$0xff]
        %v4393 = vld [vmem:[#allocation2 + $0x48] sm:$0xff]
        %v4394 = vld [vmem:[#allocation2 + $0x50] sm:$0xff]
        %v4395 = vld [vmem:[#allocation2 + $0x58] sm:$0xff]
        %v4396 = vld [vmem:[#allocation2 + $0x60] sm:$0xff]
        %v4397 = vld [vmem:[#allocation2 + $0x68] sm:$0xff]
        %v4398 = vld [vmem:[#allocation2 + $0x70] sm:$0xff]
        %v4399 = vld [vmem:[#allocation2 + $0x78] sm:$0xff]
        %4400 = vst [vmem:[%s578] sm:$0xff] %v4384
        %4401 = vst [vmem:[%s578 + $0x8] sm:$0xff] %v4385
        %4402 = vst [vmem:[%s578 + $0x10] sm:$0xff] %v4386
        %4403 = vst [vmem:[%s578 + $0x18] sm:$0xff] %v4387
        %4404 = vst [vmem:[%s578 + $0x20] sm:$0xff] %v4388
        %4405 = vst [vmem:[%s578 + $0x28] sm:$0xff] %v4389
        %4406 = vst [vmem:[%s578 + $0x30] sm:$0xff] %v4390
        %4407 = vst [vmem:[%s578 + $0x38] sm:$0xff] %v4391
        %4408 = vst [vmem:[%s578 + $0x40] sm:$0xff] %v4392
        %4409 = vst [vmem:[%s578 + $0x48] sm:$0xff] %v4393
        %4410 = vst [vmem:[%s578 + $0x50] sm:$0xff] %v4394
        %4411 = vst [vmem:[%s578 + $0x58] sm:$0xff] %v4395
        %4412 = vst [vmem:[%s578 + $0x60] sm:$0xff] %v4396
        %4413 = vst [vmem:[%s578 + $0x68] sm:$0xff] %v4397
        %4414 = vst [vmem:[%s578 + $0x70] sm:$0xff] %v4398
        %4415 = vst [vmem:[%s578 + $0x78] sm:$0xff] %v4399
        %s4416 = sand.u32 %s288, 1
        %s4417 = scalar_lea.sflag [#allocation5], %s4416
        %s4418 = sand.u32 %s288, 1
        %s4419 = smul.addr %s4418, 128
        %s4420 = scalar_lea.vmem [#allocation18], %s4419
        // Predicated region
        $region101: #{core_forward.1} parent=63 // pred_check
          %p4421 = pneg %p298
        $region102: #{core_forward.1} parent=63 // pred_check_branch
          %4423 = sbr.rel (%p4421) target = $region104
        $region103: #{core_forward.1} parent=63 // pred_region
          %s4424 = smul.u32 16, %s34
          %4426 = vsyncadd %s4417, 0
          %s4427 = smul.addr %s4424, 8
          %s4428 = scalar_lea.hbm %s11, %s4427
          %s4429 = sshll.u32 %s4420, 4
          %s4430 = int_to_ptr.vmem [resolvable:$true] %s4429
          %s4431 = sshll.u32 %s4428, 4
          %s4432 = int_to_ptr.hbm [resolvable:$true] %s4431
          %4437 = dma.vmem_to_hbm [thread:$0]  %s4430, 2048, %s4432, %s4417, 128, 128, 8
        $region104: #{core_forward.1} parent=63 // pred_fallthru
          _
      $region64: #{core_forward.1} parent=5 // pred_fallthru
        _
      %p4438 = scmp.le.s32.totalorder 2, %s29
      // Predicated region
      $region105: #{core_forward.1} parent=5 // pred_check
        %p4439 = pneg %p4438
      $region106: #{core_forward.1} parent=5 // pred_check_branch
        %4441 = sbr.rel (%p4439) target = $region108
      $region107: #{core_forward.1} parent=5 // pred_region
        %s4442 = ssub.s32 %s29, 2
        // Predicated region
        $region109: #{core_forward.1} parent=107 // pred_check
          %p4443 = pneg %p304
        $region110: #{core_forward.1} parent=107 // pred_check_branch
          %4445 = sbr.rel (%p4443) target = $region112
        $region111: #{core_forward.1} parent=107 // pred_region
          %s4446 = sand.u32 %s289, 1
          %s4447 = scalar_lea.sflag [#allocation5], %s4446
          %s4448 = sand.u32 %s289, 1
          %s4449 = smul.addr %s4448, 128
          %s4450 = scalar_lea.vmem [#allocation18], %s4449
          %4452 = dma.done %s4447, 2048
        $region112: #{core_forward.1} parent=107 // pred_fallthru
          _
      $region108: #{core_forward.1} parent=5 // pred_fallthru
        _
    $region6: #{core_forward.1} parent=1 // loop_footer
      %s33 = sadd.s32 1, %s29
    $region7: #{core_forward.1} parent=1 // loop_footer_branch
      %28 = sbr.rel target = $region3
    $region8: #{core_forward.1} parent=1 // loop_exit
      _
    %4453 = vsyncpa [#allocation4], 1
    %s4454 = scalar_lea.sflag [#allocation4], 1
    %4455 = vsyncpa %s4454, 1
    %4456 = vsyncpa [#allocation7], 1
    %s4457 = scalar_lea.sflag [#allocation7], 1
    %4458 = vsyncpa %s4457, 1
    %4459 = vsyncpa [#allocation10], 1
    %4460 = vsyncpa [#allocation13], 1
    %4461 = vsyncpa [#allocation16], 1
    %4462 = vsyncpa [#allocation5], 1
    %s4463 = scalar_lea.sflag [#allocation5], 1
    %4464 = vsyncpa %s4463, 1

</llo_original>
